<compile_context>
chip_gen: v6e
topology: v6e:2x2x1
jax: 0.10.0
libtpu: 0.0.40
codegen_flags: <defaults>
</compile_context>

<pallas_src>
import jax
import jax.numpy as jnp
import numpy as np
from jax.experimental import pallas as pl
from jax.experimental.pallas import tpu as pltpu

EPS = 1e-5


def preact_bottleneck_kernel(x_ref, g1_ref, b1_ref, w1_ref, g2_ref, b2_ref,
                             w2_ref, g3_ref, b3_ref, w3_ref, o_ref,
                             pad_ref, col_ref):
    N, H, W, Cin = x_ref.shape
    planes = w1_ref.shape[1]
    Cout = w3_ref.shape[1]
    R = N * H * W
    inv_r = 1.0 / R

    def bn_relu(v, g_ref, b_ref):
        # Training-mode BatchNorm2d, single pass: sum & sum-of-squares together,
        # biased variance via E[x^2] - mu^2 (f32 throughout), clamped at 0.
        s = jnp.sum(v, axis=0, keepdims=True)
        ss = jnp.sum(v * v, axis=0, keepdims=True)
        mu = s * inv_r
        var = jnp.maximum(ss * inv_r - mu * mu, 0.0)
        scale = g_ref[...] * jax.lax.rsqrt(var + EPS)
        shift = b_ref[...] - mu * scale
        return jnp.maximum(v * scale + shift, 0.0)

    # ---- bn1 + relu + 1x1 conv1 (single MXU matmul, bf16 operands, f32 acc) ----
    y = bn_relu(x_ref[...].astype(jnp.float32).reshape(R, Cin), g1_ref, b1_ref)
    y = jnp.dot(y.astype(jnp.bfloat16), w1_ref[...],
                preferred_element_type=jnp.float32)                    # (R, planes) f32

    # ---- bn2 + relu ----
    y = bn_relu(y, g2_ref, b2_ref)

    # ---- 3x3 conv, stride 1, pad 1:
    #   bf16 padded scratch (single contiguous memset, single f32->bf16 cast of y),
    #   im2col taps stored directly at their 128-lane offsets in a bf16 col
    #   scratch, then ONE matmul with K = 9*planes.
    pad_ref[...] = jnp.zeros(pad_ref.shape, pad_ref.dtype)
    pad_ref[:, 1:H + 1, 1:W + 1, :] = (
        y.astype(jnp.bfloat16).reshape(N, H, W, planes))
    for t, (dy, dx) in enumerate([(dy, dx) for dy in range(3) for dx in range(3)]):
        col_ref[:, t * planes:(t + 1) * planes] = (
            pad_ref[:, dy:dy + H, dx:dx + W, :].reshape(R, planes))
    y = jnp.dot(col_ref[...], w2_ref[...],
                preferred_element_type=jnp.float32)                    # (R, planes) f32

    # ---- bn3 + relu + 1x1 conv3 + identity shortcut (Cin == Cout) ----
    y = bn_relu(y, g3_ref, b3_ref)
    out = jnp.dot(y.astype(jnp.bfloat16), w3_ref[...],
                  preferred_element_type=jnp.float32)
    # Re-read the residual from VMEM here instead of keeping it live across the
    # 3x3-conv section (shrinks vreg/VMEM live ranges); upcast to f32 for the add.
    out = out + x_ref[...].astype(jnp.float32).reshape(R, Cout)
    o_ref[...] = out.reshape(N, H, W, Cout).astype(o_ref.dtype)


def preact_bottleneck(x_nchw, params):
    """x_nchw: (N, Cin, H, W) float32, PyTorch layout. Returns NCHW float32 output."""
    (w1, w2, w3, g1, b1, g2, b2, g3, b3) = params
    planes = w1.shape[0]
    Cout = 4 * planes
    assert x_nchw.shape[1] == Cout, "identity shortcut requires in_planes == 4*planes"

    # bf16 activations at the kernel boundary (HBM-bound op); f32 math inside.
    x = jnp.transpose(x_nchw, (0, 2, 3, 1)).astype(jnp.bfloat16)         # NHWC bf16
    N, H, W, Cin = x.shape
    R = N * H * W

    # Weights reformatted for in-kernel matmuls; bf16 MXU operands.
    w1j = jnp.transpose(w1[:, :, 0, 0], (1, 0)).astype(jnp.bfloat16)     # (Cin, planes)
    w2j = (jnp.transpose(w2, (2, 3, 1, 0))                               # (kh, kw, in, out)
           .reshape(9 * planes, planes).astype(jnp.bfloat16))            # (9*planes, planes)
    w3j = jnp.transpose(w3[:, :, 0, 0], (1, 0)).astype(jnp.bfloat16)     # (planes, Cout)
    g1j = g1.reshape(1, Cin).astype(jnp.float32)
    b1j = b1.reshape(1, Cin).astype(jnp.float32)
    g2j = g2.reshape(1, planes).astype(jnp.float32)
    b2j = b2.reshape(1, planes).astype(jnp.float32)
    g3j = g3.reshape(1, planes).astype(jnp.float32)
    b3j = b3.reshape(1, planes).astype(jnp.float32)

    out_nhwc = pl.pallas_call(
        preact_bottleneck_kernel,
        out_shape=jax.ShapeDtypeStruct((N, H, W, Cout), jnp.float32),
        in_specs=[pl.BlockSpec(memory_space=pltpu.MemorySpace.VMEM)] * 10,
        out_specs=pl.BlockSpec(memory_space=pltpu.MemorySpace.VMEM),
        scratch_shapes=[
            pltpu.VMEM((N, H + 2, W + 2, planes), jnp.bfloat16),   # padded act (bf16)
            pltpu.VMEM((R, 9 * planes), jnp.bfloat16),             # im2col buffer (bf16)
        ],
        compiler_params=pltpu.CompilerParams(vmem_limit_bytes=32 * 1024 * 1024),
    )(x, g1j, b1j, w1j, g2j, b2j, w2j, g3j, b3j, w3j)

    return jnp.transpose(out_nhwc, (0, 3, 1, 2))                         # back to NCHW


def reference_preact_bottleneck(x, params):
    """Plain-JAX f32 reference in NCHW, matching PyTorch training-mode BN semantics."""
    (w1, w2, w3, g1, b1, g2, b2, g3, b3) = params

    def bn_relu(v, g, b):
        mu = jnp.mean(v, axis=(0, 2, 3), keepdims=True)
        var = jnp.mean((v - mu) ** 2, axis=(0, 2, 3), keepdims=True)
        vhat = (v - mu) / jnp.sqrt(var + EPS)
        return jax.nn.relu(vhat * g.reshape(1, -1, 1, 1) + b.reshape(1, -1, 1, 1))

    def conv(v, w, pad):
        return jax.lax.conv_general_dilated(
            v, w, window_strides=(1, 1), padding=[(pad, pad), (pad, pad)],
            dimension_numbers=('NCHW', 'OIHW', 'NCHW'),
            precision=jax.lax.Precision.HIGHEST)

    out = bn_relu(x, g1, b1)
    shortcut = x
    out = conv(out, w1, 0)
    out = conv(bn_relu(out, g2, b2), w2, 1)
    out = conv(bn_relu(out, g3, b3), w3, 0)
    return out + shortcut


if __name__ == "__main__":
    # Residual-compatible configuration (identity shortcut): in_planes = 4*planes.
    # planes=128 makes every channel dimension a multiple of 128 -> fully lane-dense.
    N, planes, H, W = 2, 128, 8, 8
    expansion = 4
    in_planes = expansion * planes

    key = jax.random.PRNGKey(0)
    ks = jax.random.split(key, 10)
    w1 = 0.1 * jax.random.normal(ks[0], (planes, in_planes, 1, 1), jnp.float32)
    w2 = 0.1 * jax.random.normal(ks[1], (planes, planes, 3, 3), jnp.float32)
    w3 = 0.1 * jax.random.normal(ks[2], (expansion * planes, planes, 1, 1), jnp.float32)
    g1 = 1.0 + 0.1 * jax.random.normal(ks[3], (in_planes,), jnp.float32)
    b1 = 0.1 * jax.random.normal(ks[4], (in_planes,), jnp.float32)
    g2 = 1.0 + 0.1 * jax.random.normal(ks[5], (planes,), jnp.float32)
    b2 = 0.1 * jax.random.normal(ks[6], (planes,), jnp.float32)
    g3 = 1.0 + 0.1 * jax.random.normal(ks[7], (planes,), jnp.float32)
    b3 = 0.1 * jax.random.normal(ks[8], (planes,), jnp.float32)
    params = (w1, w2, w3, g1, b1, g2, b2, g3, b3)

    x = jax.random.normal(ks[9], (N, in_planes, H, W), jnp.float32)

    out = jax.block_until_ready(preact_bottleneck(x, params))
    ref = jax.block_until_ready(reference_preact_bottleneck(x, params))

    assert out.shape == (N, expansion * planes, H, W), out.shape
    # Tolerance reflects bf16 activations / MXU operands (f32 accumulation,
    # f32 BN statistics, f32 residual add).
    np.testing.assert_allclose(np.asarray(out), np.asarray(ref), rtol=5e-2, atol=5e-2)
    print("KERNEL_OK")
</pallas_src>

<mosaic_0001>
module attributes {stable_mosaic.version = 11 : i64} {
  func.func @preact_bottleneck_kernel(%arg0: memref<2x8x8x512xbf16, #tpu.memory_space<vmem>>, %arg1: memref<1x512xf32, #tpu.memory_space<vmem>>, %arg2: memref<1x512xf32, #tpu.memory_space<vmem>>, %arg3: memref<512x128xbf16, #tpu.memory_space<vmem>>, %arg4: memref<1x128xf32, #tpu.memory_space<vmem>>, %arg5: memref<1x128xf32, #tpu.memory_space<vmem>>, %arg6: memref<1152x128xbf16, #tpu.memory_space<vmem>>, %arg7: memref<1x128xf32, #tpu.memory_space<vmem>>, %arg8: memref<1x128xf32, #tpu.memory_space<vmem>>, %arg9: memref<128x512xbf16, #tpu.memory_space<vmem>>, %arg10: memref<2x8x8x512xf32, #tpu.memory_space<vmem>>, %arg11: memref<2x10x10x128xbf16, #tpu.memory_space<vmem>>, %arg12: memref<128x1152xbf16, #tpu.memory_space<vmem>>) attributes {dimension_semantics = [], scalar_prefetch = 0 : i64, scratch_operands = 2 : i64, tpu.core_type = #tpu.core_type<tc>} {
    %c0 = arith.constant 0 : index
    %c0_0 = arith.constant 0 : index
    %c0_1 = arith.constant 0 : index
    %c0_2 = arith.constant 0 : index
    %0 = vector.load %arg0[%c0, %c0_0, %c0_1, %c0_2] : memref<2x8x8x512xbf16, #tpu.memory_space<vmem>>, vector<2x8x8x512xbf16>
    %1 = arith.extf %0 : vector<2x8x8x512xbf16> to vector<2x8x8x512xf32>
    %2 = vector.shape_cast %1 : vector<2x8x8x512xf32> to vector<128x512xf32>
    %cst = arith.constant dense<0.000000e+00> : vector<512xf32>
    %3 = vector.multi_reduction <add>, %2, %cst [0] : vector<128x512xf32> to vector<512xf32>
    %4 = vector.shape_cast %3 : vector<512xf32> to vector<1x512xf32>
    %5 = arith.mulf %2, %2 : vector<128x512xf32>
    %cst_3 = arith.constant dense<0.000000e+00> : vector<512xf32>
    %6 = vector.multi_reduction <add>, %5, %cst_3 [0] : vector<128x512xf32> to vector<512xf32>
    %7 = vector.shape_cast %6 : vector<512xf32> to vector<1x512xf32>
    %cst_4 = arith.constant 7.812500e-03 : f32
    %8 = vector.broadcast %cst_4 : f32 to vector<1x512xf32>
    %9 = arith.mulf %4, %8 : vector<1x512xf32>
    %cst_5 = arith.constant 7.812500e-03 : f32
    %10 = vector.broadcast %cst_5 : f32 to vector<1x512xf32>
    %11 = arith.mulf %7, %10 : vector<1x512xf32>
    %12 = arith.mulf %9, %9 : vector<1x512xf32>
    %13 = arith.subf %11, %12 : vector<1x512xf32>
    %cst_6 = arith.constant 0.000000e+00 : f32
    %14 = vector.broadcast %cst_6 : f32 to vector<1x512xf32>
    %15 = arith.maximumf %13, %14 : vector<1x512xf32>
    %c0_7 = arith.constant 0 : index
    %c0_8 = arith.constant 0 : index
    %16 = vector.load %arg1[%c0_7, %c0_8] : memref<1x512xf32, #tpu.memory_space<vmem>>, vector<1x512xf32>
    %cst_9 = arith.constant 9.99999974E-6 : f32
    %17 = vector.broadcast %cst_9 : f32 to vector<1x512xf32>
    %18 = arith.addf %15, %17 : vector<1x512xf32>
    %19 = math.rsqrt %18 : vector<1x512xf32>
    %20 = arith.mulf %16, %19 : vector<1x512xf32>
    %c0_10 = arith.constant 0 : index
    %c0_11 = arith.constant 0 : index
    %21 = vector.load %arg2[%c0_10, %c0_11] : memref<1x512xf32, #tpu.memory_space<vmem>>, vector<1x512xf32>
    %22 = arith.mulf %9, %20 : vector<1x512xf32>
    %23 = arith.subf %21, %22 : vector<1x512xf32>
    %24 = vector.broadcast %20 : vector<1x512xf32> to vector<128x512xf32>
    %25 = arith.mulf %2, %24 : vector<128x512xf32>
    %26 = vector.broadcast %23 : vector<1x512xf32> to vector<128x512xf32>
    %27 = arith.addf %25, %26 : vector<128x512xf32>
    %cst_12 = arith.constant 0.000000e+00 : f32
    %28 = vector.broadcast %cst_12 : f32 to vector<128x512xf32>
    %29 = arith.maximumf %27, %28 : vector<128x512xf32>
    %30 = arith.truncf %29 : vector<128x512xf32> to vector<128x512xbf16>
    %c0_13 = arith.constant 0 : index
    %c0_14 = arith.constant 0 : index
    %31 = vector.load %arg3[%c0_13, %c0_14] : memref<512x128xbf16, #tpu.memory_space<vmem>>, vector<512x128xbf16>
    %cst_15 = arith.constant dense<0.000000e+00> : vector<128x128xf32>
    %32 = tpu.matmul %30, %31, %cst_15 {dimension_numbers = #tpu.dot_dimension_numbers<[1], [0], [0], [1], [0, 0, 1, 1], [], []>} : vector<128x512xbf16>, vector<512x128xbf16>, vector<128x128xf32> -> vector<128x128xf32>
    %cst_16 = arith.constant dense<0.000000e+00> : vector<128xf32>
    %33 = vector.multi_reduction <add>, %32, %cst_16 [0] : vector<128x128xf32> to vector<128xf32>
    %34 = vector.shape_cast %33 : vector<128xf32> to vector<1x128xf32>
    %35 = arith.mulf %32, %32 : vector<128x128xf32>
    %cst_17 = arith.constant dense<0.000000e+00> : vector<128xf32>
    %36 = vector.multi_reduction <add>, %35, %cst_17 [0] : vector<128x128xf32> to vector<128xf32>
    %37 = vector.shape_cast %36 : vector<128xf32> to vector<1x128xf32>
    %cst_18 = arith.constant 7.812500e-03 : f32
    %38 = vector.broadcast %cst_18 : f32 to vector<1x128xf32>
    %39 = arith.mulf %34, %38 : vector<1x128xf32>
    %cst_19 = arith.constant 7.812500e-03 : f32
    %40 = vector.broadcast %cst_19 : f32 to vector<1x128xf32>
    %41 = arith.mulf %37, %40 : vector<1x128xf32>
    %42 = arith.mulf %39, %39 : vector<1x128xf32>
    %43 = arith.subf %41, %42 : vector<1x128xf32>
    %cst_20 = arith.constant 0.000000e+00 : f32
    %44 = vector.broadcast %cst_20 : f32 to vector<1x128xf32>
    %45 = arith.maximumf %43, %44 : vector<1x128xf32>
    %c0_21 = arith.constant 0 : index
    %c0_22 = arith.constant 0 : index
    %46 = vector.load %arg4[%c0_21, %c0_22] : memref<1x128xf32, #tpu.memory_space<vmem>>, vector<1x128xf32>
    %cst_23 = arith.constant 9.99999974E-6 : f32
    %47 = vector.broadcast %cst_23 : f32 to vector<1x128xf32>
    %48 = arith.addf %45, %47 : vector<1x128xf32>
    %49 = math.rsqrt %48 : vector<1x128xf32>
    %50 = arith.mulf %46, %49 : vector<1x128xf32>
    %c0_24 = arith.constant 0 : index
    %c0_25 = arith.constant 0 : index
    %51 = vector.load %arg5[%c0_24, %c0_25] : memref<1x128xf32, #tpu.memory_space<vmem>>, vector<1x128xf32>
    %52 = arith.mulf %39, %50 : vector<1x128xf32>
    %53 = arith.subf %51, %52 : vector<1x128xf32>
    %54 = vector.broadcast %50 : vector<1x128xf32> to vector<128x128xf32>
    %55 = arith.mulf %32, %54 : vector<128x128xf32>
    %56 = vector.broadcast %53 : vector<1x128xf32> to vector<128x128xf32>
    %57 = arith.addf %55, %56 : vector<128x128xf32>
    %cst_26 = arith.constant 0.000000e+00 : f32
    %58 = vector.broadcast %cst_26 : f32 to vector<128x128xf32>
    %59 = arith.maximumf %57, %58 : vector<128x128xf32>
    %cst_27 = arith.constant 0.000000e+00 : bf16
    %60 = vector.broadcast %cst_27 : bf16 to vector<2x10x10x128xbf16>
    %c0_28 = arith.constant 0 : index
    %c0_29 = arith.constant 0 : index
    %c0_30 = arith.constant 0 : index
    %c0_31 = arith.constant 0 : index
    %61 = vector.load %arg11[%c0_28, %c0_29, %c0_30, %c0_31] : memref<2x10x10x128xbf16, #tpu.memory_space<vmem>>, vector<2x10x10x128xbf16>
    tpu.vector_store %arg11[%c0_28, %c0_29, %c0_30, %c0_31], %60 {strides = array<i32>} : memref<2x10x10x128xbf16, #tpu.memory_space<vmem>>, vector<2x10x10x128xbf16>,
    %62 = arith.truncf %59 : vector<128x128xf32> to vector<128x128xbf16>
    %63 = vector.shape_cast %62 : vector<128x128xbf16> to vector<2x8x8x128xbf16>
    %c0_32 = arith.constant 0 : index
    %c1 = arith.constant 1 : index
    %c1_33 = arith.constant 1 : index
    %c0_34 = arith.constant 0 : index
    %64 = vector.load %arg11[%c0_32, %c1, %c1_33, %c0_34] : memref<2x10x10x128xbf16, #tpu.memory_space<vmem>>, vector<2x8x8x128xbf16>
    tpu.vector_store %arg11[%c0_32, %c1, %c1_33, %c0_34], %63 {strides = array<i32>} : memref<2x10x10x128xbf16, #tpu.memory_space<vmem>>, vector<2x8x8x128xbf16>,
    %c0_35 = arith.constant 0 : index
    %c0_36 = arith.constant 0 : index
    %c0_37 = arith.constant 0 : index
    %c0_38 = arith.constant 0 : index
    %65 = vector.load %arg11[%c0_35, %c0_36, %c0_37, %c0_38] : memref<2x10x10x128xbf16, #tpu.memory_space<vmem>>, vector<2x8x8x128xbf16>
    %66 = vector.shape_cast %65 : vector<2x8x8x128xbf16> to vector<128x128xbf16>
    %c0_39 = arith.constant 0 : index
    %c0_40 = arith.constant 0 : index
    %67 = vector.load %arg12[%c0_39, %c0_40] : memref<128x1152xbf16, #tpu.memory_space<vmem>>, vector<128x128xbf16>
    tpu.vector_store %arg12[%c0_39, %c0_40], %66 {strides = array<i32>} : memref<128x1152xbf16, #tpu.memory_space<vmem>>, vector<128x128xbf16>,
    %c0_41 = arith.constant 0 : index
    %c0_42 = arith.constant 0 : index
    %c1_43 = arith.constant 1 : index
    %c0_44 = arith.constant 0 : index
    %68 = vector.load %arg11[%c0_41, %c0_42, %c1_43, %c0_44] : memref<2x10x10x128xbf16, #tpu.memory_space<vmem>>, vector<2x8x8x128xbf16>
    %69 = vector.shape_cast %68 : vector<2x8x8x128xbf16> to vector<128x128xbf16>
    %c0_45 = arith.constant 0 : index
    %c128 = arith.constant 128 : index
    %70 = vector.load %arg12[%c0_45, %c128] : memref<128x1152xbf16, #tpu.memory_space<vmem>>, vector<128x128xbf16>
    tpu.vector_store %arg12[%c0_45, %c128], %69 {strides = array<i32>} : memref<128x1152xbf16, #tpu.memory_space<vmem>>, vector<128x128xbf16>,
    %c0_46 = arith.constant 0 : index
    %c0_47 = arith.constant 0 : index
    %c2 = arith.constant 2 : index
    %c0_48 = arith.constant 0 : index
    %71 = vector.load %arg11[%c0_46, %c0_47, %c2, %c0_48] : memref<2x10x10x128xbf16, #tpu.memory_space<vmem>>, vector<2x8x8x128xbf16>
    %72 = vector.shape_cast %71 : vector<2x8x8x128xbf16> to vector<128x128xbf16>
    %c0_49 = arith.constant 0 : index
    %c256 = arith.constant 256 : index
    %73 = vector.load %arg12[%c0_49, %c256] : memref<128x1152xbf16, #tpu.memory_space<vmem>>, vector<128x128xbf16>
    tpu.vector_store %arg12[%c0_49, %c256], %72 {strides = array<i32>} : memref<128x1152xbf16, #tpu.memory_space<vmem>>, vector<128x128xbf16>,
    %c0_50 = arith.constant 0 : index
    %c1_51 = arith.constant 1 : index
    %c0_52 = arith.constant 0 : index
    %c0_53 = arith.constant 0 : index
    %74 = vector.load %arg11[%c0_50, %c1_51, %c0_52, %c0_53] : memref<2x10x10x128xbf16, #tpu.memory_space<vmem>>, vector<2x8x8x128xbf16>
    %75 = vector.shape_cast %74 : vector<2x8x8x128xbf16> to vector<128x128xbf16>
    %c0_54 = arith.constant 0 : index
    %c384 = arith.constant 384 : index
    %76 = vector.load %arg12[%c0_54, %c384] : memref<128x1152xbf16, #tpu.memory_space<vmem>>, vector<128x128xbf16>
    tpu.vector_store %arg12[%c0_54, %c384], %75 {strides = array<i32>} : memref<128x1152xbf16, #tpu.memory_space<vmem>>, vector<128x128xbf16>,
    %c0_55 = arith.constant 0 : index
    %c1_56 = arith.constant 1 : index
    %c1_57 = arith.constant 1 : index
    %c0_58 = arith.constant 0 : index
    %77 = vector.load %arg11[%c0_55, %c1_56, %c1_57, %c0_58] : memref<2x10x10x128xbf16, #tpu.memory_space<vmem>>, vector<2x8x8x128xbf16>
    %78 = vector.shape_cast %77 : vector<2x8x8x128xbf16> to vector<128x128xbf16>
    %c0_59 = arith.constant 0 : index
    %c512 = arith.constant 512 : index
    %79 = vector.load %arg12[%c0_59, %c512] : memref<128x1152xbf16, #tpu.memory_space<vmem>>, vector<128x128xbf16>
    tpu.vector_store %arg12[%c0_59, %c512], %78 {strides = array<i32>} : memref<128x1152xbf16, #tpu.memory_space<vmem>>, vector<128x128xbf16>,
    %c0_60 = arith.constant 0 : index
    %c1_61 = arith.constant 1 : index
    %c2_62 = arith.constant 2 : index
    %c0_63 = arith.constant 0 : index
    %80 = vector.load %arg11[%c0_60, %c1_61, %c2_62, %c0_63] : memref<2x10x10x128xbf16, #tpu.memory_space<vmem>>, vector<2x8x8x128xbf16>
    %81 = vector.shape_cast %80 : vector<2x8x8x128xbf16> to vector<128x128xbf16>
    %c0_64 = arith.constant 0 : index
    %c640 = arith.constant 640 : index
    %82 = vector.load %arg12[%c0_64, %c640] : memref<128x1152xbf16, #tpu.memory_space<vmem>>, vector<128x128xbf16>
    tpu.vector_store %arg12[%c0_64, %c640], %81 {strides = array<i32>} : memref<128x1152xbf16, #tpu.memory_space<vmem>>, vector<128x128xbf16>,
    %c0_65 = arith.constant 0 : index
    %c2_66 = arith.constant 2 : index
    %c0_67 = arith.constant 0 : index
    %c0_68 = arith.constant 0 : index
    %83 = vector.load %arg11[%c0_65, %c2_66, %c0_67, %c0_68] : memref<2x10x10x128xbf16, #tpu.memory_space<vmem>>, vector<2x8x8x128xbf16>
    %84 = vector.shape_cast %83 : vector<2x8x8x128xbf16> to vector<128x128xbf16>
    %c0_69 = arith.constant 0 : index
    %c768 = arith.constant 768 : index
    %85 = vector.load %arg12[%c0_69, %c768] : memref<128x1152xbf16, #tpu.memory_space<vmem>>, vector<128x128xbf16>
    tpu.vector_store %arg12[%c0_69, %c768], %84 {strides = array<i32>} : memref<128x1152xbf16, #tpu.memory_space<vmem>>, vector<128x128xbf16>,
    %c0_70 = arith.constant 0 : index
    %c2_71 = arith.constant 2 : index
    %c1_72 = arith.constant 1 : index
    %c0_73 = arith.constant 0 : index
    %86 = vector.load %arg11[%c0_70, %c2_71, %c1_72, %c0_73] : memref<2x10x10x128xbf16, #tpu.memory_space<vmem>>, vector<2x8x8x128xbf16>
    %87 = vector.shape_cast %86 : vector<2x8x8x128xbf16> to vector<128x128xbf16>
    %c0_74 = arith.constant 0 : index
    %c896 = arith.constant 896 : index
    %88 = vector.load %arg12[%c0_74, %c896] : memref<128x1152xbf16, #tpu.memory_space<vmem>>, vector<128x128xbf16>
    tpu.vector_store %arg12[%c0_74, %c896], %87 {strides = array<i32>} : memref<128x1152xbf16, #tpu.memory_space<vmem>>, vector<128x128xbf16>,
    %c0_75 = arith.constant 0 : index
    %c2_76 = arith.constant 2 : index
    %c2_77 = arith.constant 2 : index
    %c0_78 = arith.constant 0 : index
    %89 = vector.load %arg11[%c0_75, %c2_76, %c2_77, %c0_78] : memref<2x10x10x128xbf16, #tpu.memory_space<vmem>>, vector<2x8x8x128xbf16>
    %90 = vector.shape_cast %89 : vector<2x8x8x128xbf16> to vector<128x128xbf16>
    %c0_79 = arith.constant 0 : index
    %c1024 = arith.constant 1024 : index
    %91 = vector.load %arg12[%c0_79, %c1024] : memref<128x1152xbf16, #tpu.memory_space<vmem>>, vector<128x128xbf16>
    tpu.vector_store %arg12[%c0_79, %c1024], %90 {strides = array<i32>} : memref<128x1152xbf16, #tpu.memory_space<vmem>>, vector<128x128xbf16>,
    %c0_80 = arith.constant 0 : index
    %c0_81 = arith.constant 0 : index
    %92 = vector.load %arg12[%c0_80, %c0_81] : memref<128x1152xbf16, #tpu.memory_space<vmem>>, vector<128x1152xbf16>
    %c0_82 = arith.constant 0 : index
    %c0_83 = arith.constant 0 : index
    %93 = vector.load %arg6[%c0_82, %c0_83] : memref<1152x128xbf16, #tpu.memory_space<vmem>>, vector<1152x128xbf16>
    %cst_84 = arith.constant dense<0.000000e+00> : vector<128x128xf32>
    %94 = tpu.matmul %92, %93, %cst_84 {dimension_numbers = #tpu.dot_dimension_numbers<[1], [0], [0], [1], [0, 0, 1, 1], [], []>} : vector<128x1152xbf16>, vector<1152x128xbf16>, vector<128x128xf32> -> vector<128x128xf32>
    %cst_85 = arith.constant dense<0.000000e+00> : vector<128xf32>
    %95 = vector.multi_reduction <add>, %94, %cst_85 [0] : vector<128x128xf32> to vector<128xf32>
    %96 = vector.shape_cast %95 : vector<128xf32> to vector<1x128xf32>
    %97 = arith.mulf %94, %94 : vector<128x128xf32>
    %cst_86 = arith.constant dense<0.000000e+00> : vector<128xf32>
    %98 = vector.multi_reduction <add>, %97, %cst_86 [0] : vector<128x128xf32> to vector<128xf32>
    %99 = vector.shape_cast %98 : vector<128xf32> to vector<1x128xf32>
    %cst_87 = arith.constant 7.812500e-03 : f32
    %100 = vector.broadcast %cst_87 : f32 to vector<1x128xf32>
    %101 = arith.mulf %96, %100 : vector<1x128xf32>
    %cst_88 = arith.constant 7.812500e-03 : f32
    %102 = vector.broadcast %cst_88 : f32 to vector<1x128xf32>
    %103 = arith.mulf %99, %102 : vector<1x128xf32>
    %104 = arith.mulf %101, %101 : vector<1x128xf32>
    %105 = arith.subf %103, %104 : vector<1x128xf32>
    %cst_89 = arith.constant 0.000000e+00 : f32
    %106 = vector.broadcast %cst_89 : f32 to vector<1x128xf32>
    %107 = arith.maximumf %105, %106 : vector<1x128xf32>
    %c0_90 = arith.constant 0 : index
    %c0_91 = arith.constant 0 : index
    %108 = vector.load %arg7[%c0_90, %c0_91] : memref<1x128xf32, #tpu.memory_space<vmem>>, vector<1x128xf32>
    %cst_92 = arith.constant 9.99999974E-6 : f32
    %109 = vector.broadcast %cst_92 : f32 to vector<1x128xf32>
    %110 = arith.addf %107, %109 : vector<1x128xf32>
    %111 = math.rsqrt %110 : vector<1x128xf32>
    %112 = arith.mulf %108, %111 : vector<1x128xf32>
    %c0_93 = arith.constant 0 : index
    %c0_94 = arith.constant 0 : index
    %113 = vector.load %arg8[%c0_93, %c0_94] : memref<1x128xf32, #tpu.memory_space<vmem>>, vector<1x128xf32>
    %114 = arith.mulf %101, %112 : vector<1x128xf32>
    %115 = arith.subf %113, %114 : vector<1x128xf32>
    %116 = vector.broadcast %112 : vector<1x128xf32> to vector<128x128xf32>
    %117 = arith.mulf %94, %116 : vector<128x128xf32>
    %118 = vector.broadcast %115 : vector<1x128xf32> to vector<128x128xf32>
    %119 = arith.addf %117, %118 : vector<128x128xf32>
    %cst_95 = arith.constant 0.000000e+00 : f32
    %120 = vector.broadcast %cst_95 : f32 to vector<128x128xf32>
    %121 = arith.maximumf %119, %120 : vector<128x128xf32>
    %122 = arith.truncf %121 : vector<128x128xf32> to vector<128x128xbf16>
    %c0_96 = arith.constant 0 : index
    %c0_97 = arith.constant 0 : index
    %123 = vector.load %arg9[%c0_96, %c0_97] : memref<128x512xbf16, #tpu.memory_space<vmem>>, vector<128x512xbf16>
    %cst_98 = arith.constant dense<0.000000e+00> : vector<128x512xf32>
    %124 = tpu.matmul %122, %123, %cst_98 {dimension_numbers = #tpu.dot_dimension_numbers<[1], [0], [0], [1], [0, 0, 1, 1], [], []>} : vector<128x128xbf16>, vector<128x512xbf16>, vector<128x512xf32> -> vector<128x512xf32>
    %c0_99 = arith.constant 0 : index
    %c0_100 = arith.constant 0 : index
    %c0_101 = arith.constant 0 : index
    %c0_102 = arith.constant 0 : index
    %125 = vector.load %arg0[%c0_99, %c0_100, %c0_101, %c0_102] : memref<2x8x8x512xbf16, #tpu.memory_space<vmem>>, vector<2x8x8x512xbf16>
    %126 = arith.extf %125 : vector<2x8x8x512xbf16> to vector<2x8x8x512xf32>
    %127 = vector.shape_cast %126 : vector<2x8x8x512xf32> to vector<128x512xf32>
    %128 = arith.addf %124, %127 : vector<128x512xf32>
    %129 = vector.shape_cast %128 : vector<128x512xf32> to vector<2x8x8x512xf32>
    %c0_103 = arith.constant 0 : index
    %c0_104 = arith.constant 0 : index
    %c0_105 = arith.constant 0 : index
    %c0_106 = arith.constant 0 : index
    %130 = vector.load %arg10[%c0_103, %c0_104, %c0_105, %c0_106] : memref<2x8x8x512xf32, #tpu.memory_space<vmem>>, vector<2x8x8x512xf32>
    tpu.vector_store %arg10[%c0_103, %c0_104, %c0_105, %c0_106], %129 {strides = array<i32>} : memref<2x8x8x512xf32, #tpu.memory_space<vmem>>, vector<2x8x8x512xf32>,
    return
  }
}

</mosaic_0001>

<llo_original>
// kernel: tpu_custom_call.1
$region0: #{tpu_custom_call.1}
  #allocation0 [shape = 'u32[]', space=smem, size = 0x4, offset = 0x4, fixed_abs, tag = 'smem constant byte address 0x4 - core index']
  #allocation1 [shape = 'u32[144,128]{1,0:T(1,128)}', space=vmem, size = 0x12000, scoped, tag = 'internal scratch']
  #allocation2 [shape = 'bf16[2,10,10,128]{3,2,1,0:T(8,128)(2,1)}', space=vmem, size = 0x14000, scoped, tag = 'scratch operand']
  #allocation3 [shape = 'bf16[128,1152]{1,0:T(8,128)(2,1)}', space=vmem, size = 0x48000, scoped, tag = 'scratch operand']
  %s0 = inlined_call_operand.hbm [shape: bf16[2,8,8,512], index: 0, kind: input, shape index: {}]
  %s1 = inlined_call_operand.hbm [shape: f32[1,512], index: 1, kind: input, shape index: {}]
  %s2 = inlined_call_operand.hbm [shape: f32[1,512], index: 2, kind: input, shape index: {}]
  %s3 = inlined_call_operand.hbm [shape: bf16[512,128], index: 3, kind: input, shape index: {}]
  %s4 = inlined_call_operand.vmem [shape: f32[1,128], index: 4, kind: input, shape index: {}]
  %s5 = inlined_call_operand.vmem [shape: f32[1,128], index: 5, kind: input, shape index: {}]
  %s6 = inlined_call_operand.hbm [shape: bf16[1152,128], index: 6, kind: input, shape index: {}]
  %s7 = inlined_call_operand.vmem [shape: f32[1,128], index: 7, kind: input, shape index: {}]
  %s8 = inlined_call_operand.vmem [shape: f32[1,128], index: 8, kind: input, shape index: {}]
  %s9 = inlined_call_operand.hbm [shape: bf16[128,512], index: 9, kind: input, shape index: {}]
  %s10 = inlined_call_operand.hbm [shape: f32[2,8,8,512], index: 10, kind: output, shape index: {}]
  %s11 = sld [smem:[#allocation0]]
  $region74: #{tpu_custom_call.1} parent=0
    _
  %s13 = ssub.s32 1, %s11
  %s14 = scalar_select 0, %s13, %s11
  $region1: #{tpu_custom_call.1} parent=0
    #allocation4 [shape = 'u8[131072]{0}', space=vmem, size = 0x20000, scoped, tag = 'input window, operand 0, single buffered']
    #allocation5 [shape = 's32[1]{0}', space=sflag, size = 0x4, scoped, tag = 'scoped memory for tpu_custom_call.1']
    #allocation6 [shape = 's32[1]{0}', space=sflag, size = 0x4, scoped, tag = 'scoped memory for tpu_custom_call.1']
    #allocation7 [shape = 'u8[2048]{0}', space=vmem, size = 0x800, scoped, tag = 'input window, operand 1, single buffered']
    #allocation8 [shape = 's32[1]{0}', space=sflag, size = 0x4, scoped, tag = 'scoped memory for tpu_custom_call.1']
    #allocation9 [shape = 'u8[2048]{0}', space=vmem, size = 0x800, scoped, tag = 'input window, operand 2, single buffered']
    #allocation10 [shape = 'u8[131072]{0}', space=vmem, size = 0x20000, scoped, tag = 'input window, operand 3, single buffered']
    #allocation11 [shape = 's32[1]{0}', space=sflag, size = 0x4, scoped, tag = 'scoped memory for tpu_custom_call.1']
    #allocation12 [shape = 'u8[294912]{0}', space=vmem, size = 0x48000, scoped, tag = 'input window, operand 6, single buffered']
    #allocation13 [shape = 'u8[131072]{0}', space=vmem, size = 0x20000, scoped, tag = 'input window, operand 9, single buffered']
    #allocation14 [shape = 's32[1]{0}', space=sflag, size = 0x4, scoped, tag = 'scoped memory for tpu_custom_call.1']
    #allocation15 [shape = 'u8[262144]{0}', space=vmem, size = 0x40000, scoped, tag = 'output window, operand 0, single buffered']
    %15 = vsyncpa [#allocation5], 0
    %16 = vsyncpa [#allocation8], 0
    %17 = vsyncpa [#allocation11], 0
    %18 = vsyncpa [#allocation14], 0
    %19 = vsyncpa [#allocation6], 0
    // Predicated region
    $region2: #{tpu_custom_call.1} parent=1 // pred_check
      _
    $region3: #{tpu_custom_call.1} parent=1 // pred_check_branch
      %21 = sbr.rel (0) target = $region5
    $region4: #{tpu_custom_call.1} parent=1 // pred_region
      %s23 = ssub.s32 4096, 4096
      %24 = vsyncadd [#allocation5], %s23
      %s25 = sshll.u32 [#allocation4], 4
      %s26 = int_to_ptr.vmem [resolvable:$true] %s25
      %31 = dma.hbm_to_vmem [thread:$0]  %s0, 4096, %s26, [#allocation5], 256, 256, 16
    $region5: #{tpu_custom_call.1} parent=1 // pred_fallthru
      _
    // Predicated region
    $region6: #{tpu_custom_call.1} parent=1 // pred_check
      _
    $region7: #{tpu_custom_call.1} parent=1 // pred_check_branch
      %33 = sbr.rel (0) target = $region9
    $region8: #{tpu_custom_call.1} parent=1 // pred_region
      %s35 = ssub.s32 64, 64
      %36 = vsyncadd [#allocation8], %s35
      %s38 = sshll.u32 [#allocation7], 4
      %s39 = int_to_ptr.vmem [resolvable:$true] %s38
      %41 = dma.hbm_to_vmem [thread:$0]  %s1, 64, %s39, [#allocation8]
    $region9: #{tpu_custom_call.1} parent=1 // pred_fallthru
      _
    // Predicated region
    $region10: #{tpu_custom_call.1} parent=1 // pred_check
      _
    $region11: #{tpu_custom_call.1} parent=1 // pred_check_branch
      %43 = sbr.rel (0) target = $region13
    $region12: #{tpu_custom_call.1} parent=1 // pred_region
      %s45 = ssub.s32 64, 64
      %46 = vsyncadd [#allocation8], %s45
      %s48 = sshll.u32 [#allocation9], 4
      %s49 = int_to_ptr.vmem [resolvable:$true] %s48
      %51 = dma.hbm_to_vmem [thread:$0]  %s2, 64, %s49, [#allocation8]
    $region13: #{tpu_custom_call.1} parent=1 // pred_fallthru
      _
    // Predicated region
    $region14: #{tpu_custom_call.1} parent=1 // pred_check
      _
    $region15: #{tpu_custom_call.1} parent=1 // pred_check_branch
      %53 = sbr.rel (0) target = $region17
    $region16: #{tpu_custom_call.1} parent=1 // pred_region
      %s55 = ssub.s32 4096, 4096
      %56 = vsyncadd [#allocation11], %s55
      %s57 = sshll.u32 [#allocation10], 4
      %s58 = int_to_ptr.vmem [resolvable:$true] %s57
      %63 = dma.hbm_to_vmem [thread:$0]  %s3, 4096, %s58, [#allocation11], 64, 64, 4
    $region17: #{tpu_custom_call.1} parent=1 // pred_fallthru
      _
    // Predicated region
    $region18: #{tpu_custom_call.1} parent=1 // pred_check
      _
    $region19: #{tpu_custom_call.1} parent=1 // pred_check_branch
      %65 = sbr.rel (0) target = $region21
    $region20: #{tpu_custom_call.1} parent=1 // pred_region
      _
    $region21: #{tpu_custom_call.1} parent=1 // pred_fallthru
      _
    // Predicated region
    $region22: #{tpu_custom_call.1} parent=1 // pred_check
      _
    $region23: #{tpu_custom_call.1} parent=1 // pred_check_branch
      %67 = sbr.rel (0) target = $region25
    $region24: #{tpu_custom_call.1} parent=1 // pred_region
      _
    $region25: #{tpu_custom_call.1} parent=1 // pred_fallthru
      _
    // Predicated region
    $region26: #{tpu_custom_call.1} parent=1 // pred_check
      _
    $region27: #{tpu_custom_call.1} parent=1 // pred_check_branch
      %69 = sbr.rel (0) target = $region29
    $region28: #{tpu_custom_call.1} parent=1 // pred_region
      %s71 = ssub.s32 9216, 9216
      %72 = vsyncadd [#allocation11], %s71
      %s73 = sshll.u32 [#allocation12], 4
      %s74 = int_to_ptr.vmem [resolvable:$true] %s73
      %79 = dma.hbm_to_vmem [thread:$0]  %s6, 9216, %s74, [#allocation11], 64, 64, 4
    $region29: #{tpu_custom_call.1} parent=1 // pred_fallthru
      _
    // Predicated region
    $region30: #{tpu_custom_call.1} parent=1 // pred_check
      _
    $region31: #{tpu_custom_call.1} parent=1 // pred_check_branch
      %81 = sbr.rel (0) target = $region33
    $region32: #{tpu_custom_call.1} parent=1 // pred_region
      _
    $region33: #{tpu_custom_call.1} parent=1 // pred_fallthru
      _
    // Predicated region
    $region34: #{tpu_custom_call.1} parent=1 // pred_check
      _
    $region35: #{tpu_custom_call.1} parent=1 // pred_check_branch
      %83 = sbr.rel (0) target = $region37
    $region36: #{tpu_custom_call.1} parent=1 // pred_region
      _
    $region37: #{tpu_custom_call.1} parent=1 // pred_fallthru
      _
    // Predicated region
    $region38: #{tpu_custom_call.1} parent=1 // pred_check
      _
    $region39: #{tpu_custom_call.1} parent=1 // pred_check_branch
      %85 = sbr.rel (0) target = $region41
    $region40: #{tpu_custom_call.1} parent=1 // pred_region
      %s87 = ssub.s32 4096, 4096
      %88 = vsyncadd [#allocation14], %s87
      %s89 = sshll.u32 [#allocation13], 4
      %s90 = int_to_ptr.vmem [resolvable:$true] %s89
      %95 = dma.hbm_to_vmem [thread:$0]  %s9, 4096, %s90, [#allocation14], 256, 256, 16
    $region41: #{tpu_custom_call.1} parent=1 // pred_fallthru
      _
    // Predicated region
    $region42: #{tpu_custom_call.1} parent=1 // pred_check
      _
    $region43: #{tpu_custom_call.1} parent=1 // pred_check_branch
      %97 = sbr.rel (0) target = $region45
    $region44: #{tpu_custom_call.1} parent=1 // pred_region
      %98 = dma.done [#allocation5], 4096
    $region45: #{tpu_custom_call.1} parent=1 // pred_fallthru
      _
    // Predicated region
    $region46: #{tpu_custom_call.1} parent=1 // pred_check
      _
    $region47: #{tpu_custom_call.1} parent=1 // pred_check_branch
      %100 = sbr.rel (0) target = $region49
    $region48: #{tpu_custom_call.1} parent=1 // pred_region
      %101 = dma.done [#allocation8], 64
    $region49: #{tpu_custom_call.1} parent=1 // pred_fallthru
      _
    // Predicated region
    $region50: #{tpu_custom_call.1} parent=1 // pred_check
      _
    $region51: #{tpu_custom_call.1} parent=1 // pred_check_branch
      %103 = sbr.rel (0) target = $region53
    $region52: #{tpu_custom_call.1} parent=1 // pred_region
      %104 = dma.done [#allocation8], 64
    $region53: #{tpu_custom_call.1} parent=1 // pred_fallthru
      _
    // Predicated region
    $region54: #{tpu_custom_call.1} parent=1 // pred_check
      _
    $region55: #{tpu_custom_call.1} parent=1 // pred_check_branch
      %106 = sbr.rel (0) target = $region57
    $region56: #{tpu_custom_call.1} parent=1 // pred_region
      %107 = dma.done [#allocation11], 4096
    $region57: #{tpu_custom_call.1} parent=1 // pred_fallthru
      _
    // Predicated region
    $region58: #{tpu_custom_call.1} parent=1 // pred_check
      _
    $region59: #{tpu_custom_call.1} parent=1 // pred_check_branch
      %109 = sbr.rel (0) target = $region61
    $region60: #{tpu_custom_call.1} parent=1 // pred_region
      %110 = dma.done [#allocation11], 9216
    $region61: #{tpu_custom_call.1} parent=1 // pred_fallthru
      _
    // Predicated region
    $region62: #{tpu_custom_call.1} parent=1 // pred_check
      _
    $region63: #{tpu_custom_call.1} parent=1 // pred_check_branch
      %112 = sbr.rel (0) target = $region65
    $region64: #{tpu_custom_call.1} parent=1 // pred_region
      %113 = dma.done [#allocation14], 4096
    $region65: #{tpu_custom_call.1} parent=1 // pred_fallthru
      _
    %v115 = vld [vmem:[#allocation4] sm:$0xff]
    %v116 = vld [vmem:[#allocation4 + $0x8] sm:$0xff]
    %v117 = vld [vmem:[#allocation4 + $0x10] sm:$0xff]
    %v118 = vld [vmem:[#allocation4 + $0x18] sm:$0xff]
    %v119 = vld [vmem:[#allocation4 + $0x20] sm:$0xff]
    %v120 = vld [vmem:[#allocation4 + $0x28] sm:$0xff]
    %v121 = vld [vmem:[#allocation4 + $0x30] sm:$0xff]
    %v122 = vld [vmem:[#allocation4 + $0x38] sm:$0xff]
    %v123 = vld [vmem:[#allocation4 + $0x40] sm:$0xff]
    %v124 = vld [vmem:[#allocation4 + $0x48] sm:$0xff]
    %v125 = vld [vmem:[#allocation4 + $0x50] sm:$0xff]
    %v126 = vld [vmem:[#allocation4 + $0x58] sm:$0xff]
    %v127 = vld [vmem:[#allocation4 + $0x60] sm:$0xff]
    %v128 = vld [vmem:[#allocation4 + $0x68] sm:$0xff]
    %v129 = vld [vmem:[#allocation4 + $0x70] sm:$0xff]
    %v130 = vld [vmem:[#allocation4 + $0x78] sm:$0xff]
    %v131 = vld [vmem:[#allocation4 + $0x80] sm:$0xff]
    %v132 = vld [vmem:[#allocation4 + $0x88] sm:$0xff]
    %v133 = vld [vmem:[#allocation4 + $0x90] sm:$0xff]
    %v134 = vld [vmem:[#allocation4 + $0x98] sm:$0xff]
    %v135 = vld [vmem:[#allocation4 + $0xa0] sm:$0xff]
    %v136 = vld [vmem:[#allocation4 + $0xa8] sm:$0xff]
    %v137 = vld [vmem:[#allocation4 + $0xb0] sm:$0xff]
    %v138 = vld [vmem:[#allocation4 + $0xb8] sm:$0xff]
    %v139 = vld [vmem:[#allocation4 + $0xc0] sm:$0xff]
    %v140 = vld [vmem:[#allocation4 + $0xc8] sm:$0xff]
    %v141 = vld [vmem:[#allocation4 + $0xd0] sm:$0xff]
    %v142 = vld [vmem:[#allocation4 + $0xd8] sm:$0xff]
    %v143 = vld [vmem:[#allocation4 + $0xe0] sm:$0xff]
    %v144 = vld [vmem:[#allocation4 + $0xe8] sm:$0xff]
    %v145 = vld [vmem:[#allocation4 + $0xf0] sm:$0xff]
    %v146 = vld [vmem:[#allocation4 + $0xf8] sm:$0xff]
    %v147 = vunpack.c.l.bf16 %v115
    %v148 = vunpack.c.h.bf16 %v115
    %v149 = vunpack.c.l.bf16 %v116
    %v150 = vunpack.c.h.bf16 %v116
    %v151 = vunpack.c.l.bf16 %v117
    %v152 = vunpack.c.h.bf16 %v117
    %v153 = vunpack.c.l.bf16 %v118
    %v154 = vunpack.c.h.bf16 %v118
    %v155 = vunpack.c.l.bf16 %v119
    %v156 = vunpack.c.h.bf16 %v119
    %v157 = vunpack.c.l.bf16 %v120
    %v158 = vunpack.c.h.bf16 %v120
    %v159 = vunpack.c.l.bf16 %v121
    %v160 = vunpack.c.h.bf16 %v121
    %v161 = vunpack.c.l.bf16 %v122
    %v162 = vunpack.c.h.bf16 %v122
    %v163 = vunpack.c.l.bf16 %v123
    %v164 = vunpack.c.h.bf16 %v123
    %v165 = vunpack.c.l.bf16 %v124
    %v166 = vunpack.c.h.bf16 %v124
    %v167 = vunpack.c.l.bf16 %v125
    %v168 = vunpack.c.h.bf16 %v125
    %v169 = vunpack.c.l.bf16 %v126
    %v170 = vunpack.c.h.bf16 %v126
    %v171 = vunpack.c.l.bf16 %v127
    %v172 = vunpack.c.h.bf16 %v127
    %v173 = vunpack.c.l.bf16 %v128
    %v174 = vunpack.c.h.bf16 %v128
    %v175 = vunpack.c.l.bf16 %v129
    %v176 = vunpack.c.h.bf16 %v129
    %v177 = vunpack.c.l.bf16 %v130
    %v178 = vunpack.c.h.bf16 %v130
    %v179 = vunpack.c.l.bf16 %v131
    %v180 = vunpack.c.h.bf16 %v131
    %v181 = vunpack.c.l.bf16 %v132
    %v182 = vunpack.c.h.bf16 %v132
    %v183 = vunpack.c.l.bf16 %v133
    %v184 = vunpack.c.h.bf16 %v133
    %v185 = vunpack.c.l.bf16 %v134
    %v186 = vunpack.c.h.bf16 %v134
    %v187 = vunpack.c.l.bf16 %v135
    %v188 = vunpack.c.h.bf16 %v135
    %v189 = vunpack.c.l.bf16 %v136
    %v190 = vunpack.c.h.bf16 %v136
    %v191 = vunpack.c.l.bf16 %v137
    %v192 = vunpack.c.h.bf16 %v137
    %v193 = vunpack.c.l.bf16 %v138
    %v194 = vunpack.c.h.bf16 %v138
    %v195 = vunpack.c.l.bf16 %v139
    %v196 = vunpack.c.h.bf16 %v139
    %v197 = vunpack.c.l.bf16 %v140
    %v198 = vunpack.c.h.bf16 %v140
    %v199 = vunpack.c.l.bf16 %v141
    %v200 = vunpack.c.h.bf16 %v141
    %v201 = vunpack.c.l.bf16 %v142
    %v202 = vunpack.c.h.bf16 %v142
    %v203 = vunpack.c.l.bf16 %v143
    %v204 = vunpack.c.h.bf16 %v143
    %v205 = vunpack.c.l.bf16 %v144
    %v206 = vunpack.c.h.bf16 %v144
    %v207 = vunpack.c.l.bf16 %v145
    %v208 = vunpack.c.h.bf16 %v145
    %v209 = vunpack.c.l.bf16 %v146
    %v210 = vunpack.c.h.bf16 %v146
    %v211 = vadd.f32 %v147, %v151
    %v212 = vadd.f32 %v211, %v155
    %v213 = vadd.f32 %v212, %v159
    %v214 = vadd.f32 %v213, %v163
    %v215 = vadd.f32 %v214, %v167
    %v216 = vadd.f32 %v215, %v171
    %v217 = vadd.f32 %v216, %v175
    %v218 = vadd.f32 %v217, %v179
    %v219 = vadd.f32 %v218, %v183
    %v220 = vadd.f32 %v219, %v187
    %v221 = vadd.f32 %v220, %v191
    %v222 = vadd.f32 %v221, %v195
    %v223 = vadd.f32 %v222, %v199
    %v224 = vadd.f32 %v223, %v203
    %v225 = vadd.f32 %v224, %v207
    %v226 = vrot.slane %v225, 4
    %v227 = vadd.f32 %v225, %v226
    %v228 = vrot.slane %v227, 2
    %v229 = vadd.f32 %v227, %v228
    %v230 = vrot.slane %v229, 1
    %v231 = vadd.f32 %v229, %v230
    %v232 = vadd.f32 %v148, %v152
    %v233 = vadd.f32 %v232, %v156
    %v234 = vadd.f32 %v233, %v160
    %v235 = vadd.f32 %v234, %v164
    %v236 = vadd.f32 %v235, %v168
    %v237 = vadd.f32 %v236, %v172
    %v238 = vadd.f32 %v237, %v176
    %v239 = vadd.f32 %v238, %v180
    %v240 = vadd.f32 %v239, %v184
    %v241 = vadd.f32 %v240, %v188
    %v242 = vadd.f32 %v241, %v192
    %v243 = vadd.f32 %v242, %v196
    %v244 = vadd.f32 %v243, %v200
    %v245 = vadd.f32 %v244, %v204
    %v246 = vadd.f32 %v245, %v208
    %v247 = vrot.slane %v246, 4
    %v248 = vadd.f32 %v246, %v247
    %v249 = vrot.slane %v248, 2
    %v250 = vadd.f32 %v248, %v249
    %v251 = vrot.slane %v250, 1
    %v252 = vadd.f32 %v250, %v251
    %v253 = vadd.f32 %v149, %v153
    %v254 = vadd.f32 %v253, %v157
    %v255 = vadd.f32 %v254, %v161
    %v256 = vadd.f32 %v255, %v165
    %v257 = vadd.f32 %v256, %v169
    %v258 = vadd.f32 %v257, %v173
    %v259 = vadd.f32 %v258, %v177
    %v260 = vadd.f32 %v259, %v181
    %v261 = vadd.f32 %v260, %v185
    %v262 = vadd.f32 %v261, %v189
    %v263 = vadd.f32 %v262, %v193
    %v264 = vadd.f32 %v263, %v197
    %v265 = vadd.f32 %v264, %v201
    %v266 = vadd.f32 %v265, %v205
    %v267 = vadd.f32 %v266, %v209
    %v268 = vrot.slane %v267, 4
    %v269 = vadd.f32 %v267, %v268
    %v270 = vrot.slane %v269, 2
    %v271 = vadd.f32 %v269, %v270
    %v272 = vrot.slane %v271, 1
    %v273 = vadd.f32 %v271, %v272
    %v274 = vadd.f32 %v150, %v154
    %v275 = vadd.f32 %v274, %v158
    %v276 = vadd.f32 %v275, %v162
    %v277 = vadd.f32 %v276, %v166
    %v278 = vadd.f32 %v277, %v170
    %v279 = vadd.f32 %v278, %v174
    %v280 = vadd.f32 %v279, %v178
    %v281 = vadd.f32 %v280, %v182
    %v282 = vadd.f32 %v281, %v186
    %v283 = vadd.f32 %v282, %v190
    %v284 = vadd.f32 %v283, %v194
    %v285 = vadd.f32 %v284, %v198
    %v286 = vadd.f32 %v285, %v202
    %v287 = vadd.f32 %v286, %v206
    %v288 = vadd.f32 %v287, %v210
    %v289 = vrot.slane %v288, 4
    %v290 = vadd.f32 %v288, %v289
    %v291 = vrot.slane %v290, 2
    %v292 = vadd.f32 %v290, %v291
    %v293 = vrot.slane %v292, 1
    %v294 = vadd.f32 %v292, %v293
    %v295 = vmul.f32 %v147, %v147
    %v296 = vmul.f32 %v148, %v148
    %v297 = vmul.f32 %v149, %v149
    %v298 = vmul.f32 %v150, %v150
    %v299 = vmul.f32 %v151, %v151
    %v300 = vmul.f32 %v152, %v152
    %v301 = vmul.f32 %v153, %v153
    %v302 = vmul.f32 %v154, %v154
    %v303 = vmul.f32 %v155, %v155
    %v304 = vmul.f32 %v156, %v156
    %v305 = vmul.f32 %v157, %v157
    %v306 = vmul.f32 %v158, %v158
    %v307 = vmul.f32 %v159, %v159
    %v308 = vmul.f32 %v160, %v160
    %v309 = vmul.f32 %v161, %v161
    %v310 = vmul.f32 %v162, %v162
    %v311 = vmul.f32 %v163, %v163
    %v312 = vmul.f32 %v164, %v164
    %v313 = vmul.f32 %v165, %v165
    %v314 = vmul.f32 %v166, %v166
    %v315 = vmul.f32 %v167, %v167
    %v316 = vmul.f32 %v168, %v168
    %v317 = vmul.f32 %v169, %v169
    %v318 = vmul.f32 %v170, %v170
    %v319 = vmul.f32 %v171, %v171
    %v320 = vmul.f32 %v172, %v172
    %v321 = vmul.f32 %v173, %v173
    %v322 = vmul.f32 %v174, %v174
    %v323 = vmul.f32 %v175, %v175
    %v324 = vmul.f32 %v176, %v176
    %v325 = vmul.f32 %v177, %v177
    %v326 = vmul.f32 %v178, %v178
    %v327 = vmul.f32 %v179, %v179
    %v328 = vmul.f32 %v180, %v180
    %v329 = vmul.f32 %v181, %v181
    %v330 = vmul.f32 %v182, %v182
    %v331 = vmul.f32 %v183, %v183
    %v332 = vmul.f32 %v184, %v184
    %v333 = vmul.f32 %v185, %v185
    %v334 = vmul.f32 %v186, %v186
    %v335 = vmul.f32 %v187, %v187
    %v336 = vmul.f32 %v188, %v188
    %v337 = vmul.f32 %v189, %v189
    %v338 = vmul.f32 %v190, %v190
    %v339 = vmul.f32 %v191, %v191
    %v340 = vmul.f32 %v192, %v192
    %v341 = vmul.f32 %v193, %v193
    %v342 = vmul.f32 %v194, %v194
    %v343 = vmul.f32 %v195, %v195
    %v344 = vmul.f32 %v196, %v196
    %v345 = vmul.f32 %v197, %v197
    %v346 = vmul.f32 %v198, %v198
    %v347 = vmul.f32 %v199, %v199
    %v348 = vmul.f32 %v200, %v200
    %v349 = vmul.f32 %v201, %v201
    %v350 = vmul.f32 %v202, %v202
    %v351 = vmul.f32 %v203, %v203
    %v352 = vmul.f32 %v204, %v204
    %v353 = vmul.f32 %v205, %v205
    %v354 = vmul.f32 %v206, %v206
    %v355 = vmul.f32 %v207, %v207
    %v356 = vmul.f32 %v208, %v208
    %v357 = vmul.f32 %v209, %v209
    %v358 = vmul.f32 %v210, %v210
    %v359 = vadd.f32 %v295, %v299
    %v360 = vadd.f32 %v359, %v303
    %v361 = vadd.f32 %v360, %v307
    %v362 = vadd.f32 %v361, %v311
    %v363 = vadd.f32 %v362, %v315
    %v364 = vadd.f32 %v363, %v319
    %v365 = vadd.f32 %v364, %v323
    %v366 = vadd.f32 %v365, %v327
    %v367 = vadd.f32 %v366, %v331
    %v368 = vadd.f32 %v367, %v335
    %v369 = vadd.f32 %v368, %v339
    %v370 = vadd.f32 %v369, %v343
    %v371 = vadd.f32 %v370, %v347
    %v372 = vadd.f32 %v371, %v351
    %v373 = vadd.f32 %v372, %v355
    %v374 = vrot.slane %v373, 4
    %v375 = vadd.f32 %v373, %v374
    %v376 = vrot.slane %v375, 2
    %v377 = vadd.f32 %v375, %v376
    %v378 = vrot.slane %v377, 1
    %v379 = vadd.f32 %v377, %v378
    %v380 = vadd.f32 %v296, %v300
    %v381 = vadd.f32 %v380, %v304
    %v382 = vadd.f32 %v381, %v308
    %v383 = vadd.f32 %v382, %v312
    %v384 = vadd.f32 %v383, %v316
    %v385 = vadd.f32 %v384, %v320
    %v386 = vadd.f32 %v385, %v324
    %v387 = vadd.f32 %v386, %v328
    %v388 = vadd.f32 %v387, %v332
    %v389 = vadd.f32 %v388, %v336
    %v390 = vadd.f32 %v389, %v340
    %v391 = vadd.f32 %v390, %v344
    %v392 = vadd.f32 %v391, %v348
    %v393 = vadd.f32 %v392, %v352
    %v394 = vadd.f32 %v393, %v356
    %v395 = vrot.slane %v394, 4
    %v396 = vadd.f32 %v394, %v395
    %v397 = vrot.slane %v396, 2
    %v398 = vadd.f32 %v396, %v397
    %v399 = vrot.slane %v398, 1
    %v400 = vadd.f32 %v398, %v399
    %v401 = vadd.f32 %v297, %v301
    %v402 = vadd.f32 %v401, %v305
    %v403 = vadd.f32 %v402, %v309
    %v404 = vadd.f32 %v403, %v313
    %v405 = vadd.f32 %v404, %v317
    %v406 = vadd.f32 %v405, %v321
    %v407 = vadd.f32 %v406, %v325
    %v408 = vadd.f32 %v407, %v329
    %v409 = vadd.f32 %v408, %v333
    %v410 = vadd.f32 %v409, %v337
    %v411 = vadd.f32 %v410, %v341
    %v412 = vadd.f32 %v411, %v345
    %v413 = vadd.f32 %v412, %v349
    %v414 = vadd.f32 %v413, %v353
    %v415 = vadd.f32 %v414, %v357
    %v416 = vrot.slane %v415, 4
    %v417 = vadd.f32 %v415, %v416
    %v418 = vrot.slane %v417, 2
    %v419 = vadd.f32 %v417, %v418
    %v420 = vrot.slane %v419, 1
    %v421 = vadd.f32 %v419, %v420
    %v422 = vadd.f32 %v298, %v302
    %v423 = vadd.f32 %v422, %v306
    %v424 = vadd.f32 %v423, %v310
    %v425 = vadd.f32 %v424, %v314
    %v426 = vadd.f32 %v425, %v318
    %v427 = vadd.f32 %v426, %v322
    %v428 = vadd.f32 %v427, %v326
    %v429 = vadd.f32 %v428, %v330
    %v430 = vadd.f32 %v429, %v334
    %v431 = vadd.f32 %v430, %v338
    %v432 = vadd.f32 %v431, %v342
    %v433 = vadd.f32 %v432, %v346
    %v434 = vadd.f32 %v433, %v350
    %v435 = vadd.f32 %v434, %v354
    %v436 = vadd.f32 %v435, %v358
    %v437 = vrot.slane %v436, 4
    %v438 = vadd.f32 %v436, %v437
    %v439 = vrot.slane %v438, 2
    %v440 = vadd.f32 %v438, %v439
    %v441 = vrot.slane %v440, 1
    %v442 = vadd.f32 %v440, %v441
    %v443 = vmul.f32 %v231, 0.0078125
    %v444 = vmul.f32 %v252, 0.0078125
    %v445 = vmul.f32 %v273, 0.0078125
    %v446 = vmul.f32 %v294, 0.0078125
    %v447 = vmul.f32 %v379, 0.0078125
    %v448 = vmul.f32 %v400, 0.0078125
    %v449 = vmul.f32 %v421, 0.0078125
    %v450 = vmul.f32 %v442, 0.0078125
    %v451 = vmul.f32 %v443, %v443
    %v452 = vmul.f32 %v444, %v444
    %v453 = vmul.f32 %v445, %v445
    %v454 = vmul.f32 %v446, %v446
    %v455 = vsub.f32 %v447, %v451
    %v456 = vsub.f32 %v448, %v452
    %v457 = vsub.f32 %v449, %v453
    %v458 = vsub.f32 %v450, %v454
    %v459 = vmax.f32 %v455, 0.0
    %v460 = vmax.f32 %v456, 0.0
    %v461 = vmax.f32 %v457, 0.0
    %v462 = vmax.f32 %v458, 0.0
    %v463 = vld [vmem:[#allocation7] sm:$0xf]
    %v464 = vadd.f32 %v459, 1e-05
    %v465 = vadd.f32 %v460, 1e-05
    %v466 = vadd.f32 %v461, 1e-05
    %v467 = vadd.f32 %v462, 1e-05
    %v468 = vrsqrt.pop %v464
    %v469 = vrsqrt.pop %v465
    %v470 = vrsqrt.pop %v466
    %v471 = vrsqrt.pop %v467
    %v476 = vcombine.low %v468, %v469
    %v477 = vcombine.low %v470, %v471
    %v479 = vunpack.c.l.s4 1966171168
    %v480 = vunpack.c.0.s8 %v479
    %v481 = vlaneseq
    %v482 = vshrl.u32 %v481, 7
    %v483 = vsub.s32 %v480, %v482
    %v484 = vrot.slane %v476, %v483
    %v486 = vunpack.c.l.s4 1966171168
    %v487 = vunpack.c.0.s8 %v486
    %v488 = vlaneseq
    %v489 = vshrl.u32 %v488, 7
    %v490 = vsub.s32 %v487, %v489
    %v491 = vrot.slane %v477, %v490
    %v492 = vcombine.low %v484, %v491
    %v494 = vunpack.c.l.s4 1966171168
    %v495 = vunpack.c.0.s8 %v494
    %v496 = vlaneseq
    %v497 = vshrl.u32 %v496, 7
    %v498 = vsub.s32 %v495, %v497
    %v499 = vrot.slane %v492, %v498
    %v501 = vmul.f32 %v463, %v499
    %v502 = vld [vmem:[#allocation9] sm:$0xf]
    %v504 = vlaneseq
    %v505 = vshrl.u32 %v504, 7
    %v506 = vsub.s32 0, %v505
    %v507 = vrot.slane %v501, %v506
    %v508 = vlaneseq
    %v509 = vshrl.u32 %v508, 7
    %v510 = vsub.s32 1, %v509
    %v511 = vrot.slane %v501, %v510
    %v512 = vlaneseq
    %v513 = vshrl.u32 %v512, 7
    %v514 = vsub.s32 2, %v513
    %v515 = vrot.slane %v501, %v514
    %v516 = vlaneseq
    %v517 = vshrl.u32 %v516, 7
    %v518 = vsub.s32 3, %v517
    %v519 = vrot.slane %v501, %v518
    %v524 = vmul.f32 %v443, %v507
    %v525 = vmul.f32 %v444, %v511
    %v526 = vmul.f32 %v445, %v515
    %v527 = vmul.f32 %v446, %v519
    %v532 = vcombine.low %v524, %v525
    %v533 = vcombine.low %v526, %v527
    %v535 = vunpack.c.l.s4 1966171168
    %v536 = vunpack.c.0.s8 %v535
    %v537 = vlaneseq
    %v538 = vshrl.u32 %v537, 7
    %v539 = vsub.s32 %v536, %v538
    %v540 = vrot.slane %v532, %v539
    %v542 = vunpack.c.l.s4 1966171168
    %v543 = vunpack.c.0.s8 %v542
    %v544 = vlaneseq
    %v545 = vshrl.u32 %v544, 7
    %v546 = vsub.s32 %v543, %v545
    %v547 = vrot.slane %v533, %v546
    %v548 = vcombine.low %v540, %v547
    %v550 = vunpack.c.l.s4 1966171168
    %v551 = vunpack.c.0.s8 %v550
    %v552 = vlaneseq
    %v553 = vshrl.u32 %v552, 7
    %v554 = vsub.s32 %v551, %v553
    %v555 = vrot.slane %v548, %v554
    %v557 = vsub.f32 %v502, %v555
    %v558 = vmul.f32 %v147, %v507
    %v559 = vmul.f32 %v148, %v511
    %v560 = vmul.f32 %v149, %v515
    %v561 = vmul.f32 %v150, %v519
    %v562 = vmul.f32 %v151, %v507
    %v563 = vmul.f32 %v152, %v511
    %v564 = vmul.f32 %v153, %v515
    %v565 = vmul.f32 %v154, %v519
    %v566 = vmul.f32 %v155, %v507
    %v567 = vmul.f32 %v156, %v511
    %v568 = vmul.f32 %v157, %v515
    %v569 = vmul.f32 %v158, %v519
    %v570 = vmul.f32 %v159, %v507
    %v571 = vmul.f32 %v160, %v511
    %v572 = vmul.f32 %v161, %v515
    %v573 = vmul.f32 %v162, %v519
    %v574 = vmul.f32 %v163, %v507
    %v575 = vmul.f32 %v164, %v511
    %v576 = vmul.f32 %v165, %v515
    %v577 = vmul.f32 %v166, %v519
    %v578 = vmul.f32 %v167, %v507
    %v579 = vmul.f32 %v168, %v511
    %v580 = vmul.f32 %v169, %v515
    %v581 = vmul.f32 %v170, %v519
    %v582 = vmul.f32 %v171, %v507
    %v583 = vmul.f32 %v172, %v511
    %v584 = vmul.f32 %v173, %v515
    %v585 = vmul.f32 %v174, %v519
    %v586 = vmul.f32 %v175, %v507
    %v587 = vmul.f32 %v176, %v511
    %v588 = vmul.f32 %v177, %v515
    %v589 = vmul.f32 %v178, %v519
    %v590 = vmul.f32 %v179, %v507
    %v591 = vmul.f32 %v180, %v511
    %v592 = vmul.f32 %v181, %v515
    %v593 = vmul.f32 %v182, %v519
    %v594 = vmul.f32 %v183, %v507
    %v595 = vmul.f32 %v184, %v511
    %v596 = vmul.f32 %v185, %v515
    %v597 = vmul.f32 %v186, %v519
    %v598 = vmul.f32 %v187, %v507
    %v599 = vmul.f32 %v188, %v511
    %v600 = vmul.f32 %v189, %v515
    %v601 = vmul.f32 %v190, %v519
    %v602 = vmul.f32 %v191, %v507
    %v603 = vmul.f32 %v192, %v511
    %v604 = vmul.f32 %v193, %v515
    %v605 = vmul.f32 %v194, %v519
    %v606 = vmul.f32 %v195, %v507
    %v607 = vmul.f32 %v196, %v511
    %v608 = vmul.f32 %v197, %v515
    %v609 = vmul.f32 %v198, %v519
    %v610 = vmul.f32 %v199, %v507
    %v611 = vmul.f32 %v200, %v511
    %v612 = vmul.f32 %v201, %v515
    %v613 = vmul.f32 %v202, %v519
    %v614 = vmul.f32 %v203, %v507
    %v615 = vmul.f32 %v204, %v511
    %v616 = vmul.f32 %v205, %v515
    %v617 = vmul.f32 %v206, %v519
    %v618 = vmul.f32 %v207, %v507
    %v619 = vmul.f32 %v208, %v511
    %v620 = vmul.f32 %v209, %v515
    %v621 = vmul.f32 %v210, %v519
    %v623 = vlaneseq
    %v624 = vshrl.u32 %v623, 7
    %v625 = vsub.s32 0, %v624
    %v626 = vrot.slane %v557, %v625
    %v627 = vlaneseq
    %v628 = vshrl.u32 %v627, 7
    %v629 = vsub.s32 1, %v628
    %v630 = vrot.slane %v557, %v629
    %v631 = vlaneseq
    %v632 = vshrl.u32 %v631, 7
    %v633 = vsub.s32 2, %v632
    %v634 = vrot.slane %v557, %v633
    %v635 = vlaneseq
    %v636 = vshrl.u32 %v635, 7
    %v637 = vsub.s32 3, %v636
    %v638 = vrot.slane %v557, %v637
    %v643 = vadd.f32 %v558, %v626
    %v644 = vadd.f32 %v559, %v630
    %v645 = vadd.f32 %v560, %v634
    %v646 = vadd.f32 %v561, %v638
    %v647 = vadd.f32 %v562, %v626
    %v648 = vadd.f32 %v563, %v630
    %v649 = vadd.f32 %v564, %v634
    %v650 = vadd.f32 %v565, %v638
    %v651 = vadd.f32 %v566, %v626
    %v652 = vadd.f32 %v567, %v630
    %v653 = vadd.f32 %v568, %v634
    %v654 = vadd.f32 %v569, %v638
    %v655 = vadd.f32 %v570, %v626
    %v656 = vadd.f32 %v571, %v630
    %v657 = vadd.f32 %v572, %v634
    %v658 = vadd.f32 %v573, %v638
    %v659 = vadd.f32 %v574, %v626
    %v660 = vadd.f32 %v575, %v630
    %v661 = vadd.f32 %v576, %v634
    %v662 = vadd.f32 %v577, %v638
    %v663 = vadd.f32 %v578, %v626
    %v664 = vadd.f32 %v579, %v630
    %v665 = vadd.f32 %v580, %v634
    %v666 = vadd.f32 %v581, %v638
    %v667 = vadd.f32 %v582, %v626
    %v668 = vadd.f32 %v583, %v630
    %v669 = vadd.f32 %v584, %v634
    %v670 = vadd.f32 %v585, %v638
    %v671 = vadd.f32 %v586, %v626
    %v672 = vadd.f32 %v587, %v630
    %v673 = vadd.f32 %v588, %v634
    %v674 = vadd.f32 %v589, %v638
    %v675 = vadd.f32 %v590, %v626
    %v676 = vadd.f32 %v591, %v630
    %v677 = vadd.f32 %v592, %v634
    %v678 = vadd.f32 %v593, %v638
    %v679 = vadd.f32 %v594, %v626
    %v680 = vadd.f32 %v595, %v630
    %v681 = vadd.f32 %v596, %v634
    %v682 = vadd.f32 %v597, %v638
    %v683 = vadd.f32 %v598, %v626
    %v684 = vadd.f32 %v599, %v630
    %v685 = vadd.f32 %v600, %v634
    %v686 = vadd.f32 %v601, %v638
    %v687 = vadd.f32 %v602, %v626
    %v688 = vadd.f32 %v603, %v630
    %v689 = vadd.f32 %v604, %v634
    %v690 = vadd.f32 %v605, %v638
    %v691 = vadd.f32 %v606, %v626
    %v692 = vadd.f32 %v607, %v630
    %v693 = vadd.f32 %v608, %v634
    %v694 = vadd.f32 %v609, %v638
    %v695 = vadd.f32 %v610, %v626
    %v696 = vadd.f32 %v611, %v630
    %v697 = vadd.f32 %v612, %v634
    %v698 = vadd.f32 %v613, %v638
    %v699 = vadd.f32 %v614, %v626
    %v700 = vadd.f32 %v615, %v630
    %v701 = vadd.f32 %v616, %v634
    %v702 = vadd.f32 %v617, %v638
    %v703 = vadd.f32 %v618, %v626
    %v704 = vadd.f32 %v619, %v630
    %v705 = vadd.f32 %v620, %v634
    %v706 = vadd.f32 %v621, %v638
    %v707 = vmax.f32 %v643, 0.0
    %v708 = vmax.f32 %v644, 0.0
    %v709 = vmax.f32 %v645, 0.0
    %v710 = vmax.f32 %v646, 0.0
    %v711 = vmax.f32 %v647, 0.0
    %v712 = vmax.f32 %v648, 0.0
    %v713 = vmax.f32 %v649, 0.0
    %v714 = vmax.f32 %v650, 0.0
    %v715 = vmax.f32 %v651, 0.0
    %v716 = vmax.f32 %v652, 0.0
    %v717 = vmax.f32 %v653, 0.0
    %v718 = vmax.f32 %v654, 0.0
    %v719 = vmax.f32 %v655, 0.0
    %v720 = vmax.f32 %v656, 0.0
    %v721 = vmax.f32 %v657, 0.0
    %v722 = vmax.f32 %v658, 0.0
    %v723 = vmax.f32 %v659, 0.0
    %v724 = vmax.f32 %v660, 0.0
    %v725 = vmax.f32 %v661, 0.0
    %v726 = vmax.f32 %v662, 0.0
    %v727 = vmax.f32 %v663, 0.0
    %v728 = vmax.f32 %v664, 0.0
    %v729 = vmax.f32 %v665, 0.0
    %v730 = vmax.f32 %v666, 0.0
    %v731 = vmax.f32 %v667, 0.0
    %v732 = vmax.f32 %v668, 0.0
    %v733 = vmax.f32 %v669, 0.0
    %v734 = vmax.f32 %v670, 0.0
    %v735 = vmax.f32 %v671, 0.0
    %v736 = vmax.f32 %v672, 0.0
    %v737 = vmax.f32 %v673, 0.0
    %v738 = vmax.f32 %v674, 0.0
    %v739 = vmax.f32 %v675, 0.0
    %v740 = vmax.f32 %v676, 0.0
    %v741 = vmax.f32 %v677, 0.0
    %v742 = vmax.f32 %v678, 0.0
    %v743 = vmax.f32 %v679, 0.0
    %v744 = vmax.f32 %v680, 0.0
    %v745 = vmax.f32 %v681, 0.0
    %v746 = vmax.f32 %v682, 0.0
    %v747 = vmax.f32 %v683, 0.0
    %v748 = vmax.f32 %v684, 0.0
    %v749 = vmax.f32 %v685, 0.0
    %v750 = vmax.f32 %v686, 0.0
    %v751 = vmax.f32 %v687, 0.0
    %v752 = vmax.f32 %v688, 0.0
    %v753 = vmax.f32 %v689, 0.0
    %v754 = vmax.f32 %v690, 0.0
    %v755 = vmax.f32 %v691, 0.0
    %v756 = vmax.f32 %v692, 0.0
    %v757 = vmax.f32 %v693, 0.0
    %v758 = vmax.f32 %v694, 0.0
    %v759 = vmax.f32 %v695, 0.0
    %v760 = vmax.f32 %v696, 0.0
    %v761 = vmax.f32 %v697, 0.0
    %v762 = vmax.f32 %v698, 0.0
    %v763 = vmax.f32 %v699, 0.0
    %v764 = vmax.f32 %v700, 0.0
    %v765 = vmax.f32 %v701, 0.0
    %v766 = vmax.f32 %v702, 0.0
    %v767 = vmax.f32 %v703, 0.0
    %v768 = vmax.f32 %v704, 0.0
    %v769 = vmax.f32 %v705, 0.0
    %v770 = vmax.f32 %v706, 0.0
    %v771 = vpack.c.bf16 %v711, %v707
    %v772 = vpack.c.bf16 %v712, %v708
    %v773 = vpack.c.bf16 %v713, %v709
    %v774 = vpack.c.bf16 %v714, %v710
    %v775 = vpack.c.bf16 %v719, %v715
    %v776 = vpack.c.bf16 %v720, %v716
    %v777 = vpack.c.bf16 %v721, %v717
    %v778 = vpack.c.bf16 %v722, %v718
    %v779 = vpack.c.bf16 %v727, %v723
    %v780 = vpack.c.bf16 %v728, %v724
    %v781 = vpack.c.bf16 %v729, %v725
    %v782 = vpack.c.bf16 %v730, %v726
    %v783 = vpack.c.bf16 %v735, %v731
    %v784 = vpack.c.bf16 %v736, %v732
    %v785 = vpack.c.bf16 %v737, %v733
    %v786 = vpack.c.bf16 %v738, %v734
    %v787 = vpack.c.bf16 %v743, %v739
    %v788 = vpack.c.bf16 %v744, %v740
    %v789 = vpack.c.bf16 %v745, %v741
    %v790 = vpack.c.bf16 %v746, %v742
    %v791 = vpack.c.bf16 %v751, %v747
    %v792 = vpack.c.bf16 %v752, %v748
    %v793 = vpack.c.bf16 %v753, %v749
    %v794 = vpack.c.bf16 %v754, %v750
    %v795 = vpack.c.bf16 %v759, %v755
    %v796 = vpack.c.bf16 %v760, %v756
    %v797 = vpack.c.bf16 %v761, %v757
    %v798 = vpack.c.bf16 %v762, %v758
    %v799 = vpack.c.bf16 %v767, %v763
    %v800 = vpack.c.bf16 %v768, %v764
    %v801 = vpack.c.bf16 %v769, %v765
    %v802 = vpack.c.bf16 %v770, %v766
    %v803 = vld [vmem:[#allocation10] sm:$0xf]
    %v804 = vld [vmem:[#allocation10 + $0x4] sm:$0xf]
    %v805 = vld [vmem:[#allocation10 + $0x8] sm:$0xf]
    %v806 = vld [vmem:[#allocation10 + $0xc] sm:$0xf]
    %v807 = vld [vmem:[#allocation10 + $0x10] sm:$0xf]
    %v808 = vld [vmem:[#allocation10 + $0x14] sm:$0xf]
    %v809 = vld [vmem:[#allocation10 + $0x18] sm:$0xf]
    %v810 = vld [vmem:[#allocation10 + $0x1c] sm:$0xf]
    %v811 = vld [vmem:[#allocation10 + $0x20] sm:$0xf]
    %v812 = vld [vmem:[#allocation10 + $0x24] sm:$0xf]
    %v813 = vld [vmem:[#allocation10 + $0x28] sm:$0xf]
    %v814 = vld [vmem:[#allocation10 + $0x2c] sm:$0xf]
    %v815 = vld [vmem:[#allocation10 + $0x30] sm:$0xf]
    %v816 = vld [vmem:[#allocation10 + $0x34] sm:$0xf]
    %v817 = vld [vmem:[#allocation10 + $0x38] sm:$0xf]
    %v818 = vld [vmem:[#allocation10 + $0x3c] sm:$0xf]
    %v819 = vld [vmem:[#allocation10 + $0x40] sm:$0xf]
    %v820 = vld [vmem:[#allocation10 + $0x44] sm:$0xf]
    %v821 = vld [vmem:[#allocation10 + $0x48] sm:$0xf]
    %v822 = vld [vmem:[#allocation10 + $0x4c] sm:$0xf]
    %v823 = vld [vmem:[#allocation10 + $0x50] sm:$0xf]
    %v824 = vld [vmem:[#allocation10 + $0x54] sm:$0xf]
    %v825 = vld [vmem:[#allocation10 + $0x58] sm:$0xf]
    %v826 = vld [vmem:[#allocation10 + $0x5c] sm:$0xf]
    %v827 = vld [vmem:[#allocation10 + $0x60] sm:$0xf]
    %v828 = vld [vmem:[#allocation10 + $0x64] sm:$0xf]
    %v829 = vld [vmem:[#allocation10 + $0x68] sm:$0xf]
    %v830 = vld [vmem:[#allocation10 + $0x6c] sm:$0xf]
    %v831 = vld [vmem:[#allocation10 + $0x70] sm:$0xf]
    %v832 = vld [vmem:[#allocation10 + $0x74] sm:$0xf]
    %v833 = vld [vmem:[#allocation10 + $0x78] sm:$0xf]
    %v834 = vld [vmem:[#allocation10 + $0x7c] sm:$0xf]
    %v835 = vld [vmem:[#allocation10 + $0x80] sm:$0xf]
    %v836 = vld [vmem:[#allocation10 + $0x84] sm:$0xf]
    %v837 = vld [vmem:[#allocation10 + $0x88] sm:$0xf]
    %v838 = vld [vmem:[#allocation10 + $0x8c] sm:$0xf]
    %v839 = vld [vmem:[#allocation10 + $0x90] sm:$0xf]
    %v840 = vld [vmem:[#allocation10 + $0x94] sm:$0xf]
    %v841 = vld [vmem:[#allocation10 + $0x98] sm:$0xf]
    %v842 = vld [vmem:[#allocation10 + $0x9c] sm:$0xf]
    %v843 = vld [vmem:[#allocation10 + $0xa0] sm:$0xf]
    %v844 = vld [vmem:[#allocation10 + $0xa4] sm:$0xf]
    %v845 = vld [vmem:[#allocation10 + $0xa8] sm:$0xf]
    %v846 = vld [vmem:[#allocation10 + $0xac] sm:$0xf]
    %v847 = vld [vmem:[#allocation10 + $0xb0] sm:$0xf]
    %v848 = vld [vmem:[#allocation10 + $0xb4] sm:$0xf]
    %v849 = vld [vmem:[#allocation10 + $0xb8] sm:$0xf]
    %v850 = vld [vmem:[#allocation10 + $0xbc] sm:$0xf]
    %v851 = vld [vmem:[#allocation10 + $0xc0] sm:$0xf]
    %v852 = vld [vmem:[#allocation10 + $0xc4] sm:$0xf]
    %v853 = vld [vmem:[#allocation10 + $0xc8] sm:$0xf]
    %v854 = vld [vmem:[#allocation10 + $0xcc] sm:$0xf]
    %v855 = vld [vmem:[#allocation10 + $0xd0] sm:$0xf]
    %v856 = vld [vmem:[#allocation10 + $0xd4] sm:$0xf]
    %v857 = vld [vmem:[#allocation10 + $0xd8] sm:$0xf]
    %v858 = vld [vmem:[#allocation10 + $0xdc] sm:$0xf]
    %v859 = vld [vmem:[#allocation10 + $0xe0] sm:$0xf]
    %v860 = vld [vmem:[#allocation10 + $0xe4] sm:$0xf]
    %v861 = vld [vmem:[#allocation10 + $0xe8] sm:$0xf]
    %v862 = vld [vmem:[#allocation10 + $0xec] sm:$0xf]
    %v863 = vld [vmem:[#allocation10 + $0xf0] sm:$0xf]
    %v864 = vld [vmem:[#allocation10 + $0xf4] sm:$0xf]
    %v865 = vld [vmem:[#allocation10 + $0xf8] sm:$0xf]
    %v866 = vld [vmem:[#allocation10 + $0xfc] sm:$0xf]
    %v931 = vunpack.c.l.b16 %v803
    %v932 = vunpack.c.l.b16 %v804
    %v933 = vunpack.c.l.b16 %v805
    %v934 = vunpack.c.l.b16 %v806
    %v935 = vunpack.c.l.b16 %v807
    %v936 = vunpack.c.l.b16 %v808
    %v937 = vunpack.c.l.b16 %v809
    %v938 = vunpack.c.l.b16 %v810
    %v939 = vunpack.c.l.b16 %v811
    %v940 = vunpack.c.l.b16 %v812
    %v941 = vunpack.c.l.b16 %v813
    %v942 = vunpack.c.l.b16 %v814
    %v943 = vunpack.c.l.b16 %v815
    %v944 = vunpack.c.l.b16 %v816
    %v945 = vunpack.c.l.b16 %v817
    %v946 = vunpack.c.l.b16 %v818
    %v947 = vunpack.c.l.b16 %v819
    %v948 = vunpack.c.l.b16 %v820
    %v949 = vunpack.c.l.b16 %v821
    %v950 = vunpack.c.l.b16 %v822
    %v951 = vunpack.c.l.b16 %v823
    %v952 = vunpack.c.l.b16 %v824
    %v953 = vunpack.c.l.b16 %v825
    %v954 = vunpack.c.l.b16 %v826
    %v955 = vunpack.c.l.b16 %v827
    %v956 = vunpack.c.l.b16 %v828
    %v957 = vunpack.c.l.b16 %v829
    %v958 = vunpack.c.l.b16 %v830
    %v959 = vunpack.c.l.b16 %v831
    %v960 = vunpack.c.l.b16 %v832
    %v961 = vunpack.c.l.b16 %v833
    %v962 = vunpack.c.l.b16 %v834
    %v963 = vunpack.c.l.b16 %v835
    %v964 = vunpack.c.l.b16 %v836
    %v965 = vunpack.c.l.b16 %v837
    %v966 = vunpack.c.l.b16 %v838
    %v967 = vunpack.c.l.b16 %v839
    %v968 = vunpack.c.l.b16 %v840
    %v969 = vunpack.c.l.b16 %v841
    %v970 = vunpack.c.l.b16 %v842
    %v971 = vunpack.c.l.b16 %v843
    %v972 = vunpack.c.l.b16 %v844
    %v973 = vunpack.c.l.b16 %v845
    %v974 = vunpack.c.l.b16 %v846
    %v975 = vunpack.c.l.b16 %v847
    %v976 = vunpack.c.l.b16 %v848
    %v977 = vunpack.c.l.b16 %v849
    %v978 = vunpack.c.l.b16 %v850
    %v979 = vunpack.c.l.b16 %v851
    %v980 = vunpack.c.l.b16 %v852
    %v981 = vunpack.c.l.b16 %v853
    %v982 = vunpack.c.l.b16 %v854
    %v983 = vunpack.c.l.b16 %v855
    %v984 = vunpack.c.l.b16 %v856
    %v985 = vunpack.c.l.b16 %v857
    %v986 = vunpack.c.l.b16 %v858
    %v987 = vunpack.c.l.b16 %v859
    %v988 = vunpack.c.l.b16 %v860
    %v989 = vunpack.c.l.b16 %v861
    %v990 = vunpack.c.l.b16 %v862
    %v991 = vunpack.c.l.b16 %v863
    %v992 = vunpack.c.l.b16 %v864
    %v993 = vunpack.c.l.b16 %v865
    %v994 = vunpack.c.l.b16 %v866
    %v995 = vpack.c.b16 %v932, %v931
    %v996 = vpack.c.b16 %v934, %v933
    %v997 = vpack.c.b16 %v936, %v935
    %v998 = vpack.c.b16 %v938, %v937
    %v999 = vpack.c.b16 %v940, %v939
    %v1000 = vpack.c.b16 %v942, %v941
    %v1001 = vpack.c.b16 %v944, %v943
    %v1002 = vpack.c.b16 %v946, %v945
    %v1003 = vpack.c.b16 %v948, %v947
    %v1004 = vpack.c.b16 %v950, %v949
    %v1005 = vpack.c.b16 %v952, %v951
    %v1006 = vpack.c.b16 %v954, %v953
    %v1007 = vpack.c.b16 %v956, %v955
    %v1008 = vpack.c.b16 %v958, %v957
    %v1009 = vpack.c.b16 %v960, %v959
    %v1010 = vpack.c.b16 %v962, %v961
    %v1011 = vpack.c.b16 %v964, %v963
    %v1012 = vpack.c.b16 %v966, %v965
    %v1013 = vpack.c.b16 %v968, %v967
    %v1014 = vpack.c.b16 %v970, %v969
    %v1015 = vpack.c.b16 %v972, %v971
    %v1016 = vpack.c.b16 %v974, %v973
    %v1017 = vpack.c.b16 %v976, %v975
    %v1018 = vpack.c.b16 %v978, %v977
    %v1019 = vpack.c.b16 %v980, %v979
    %v1020 = vpack.c.b16 %v982, %v981
    %v1021 = vpack.c.b16 %v984, %v983
    %v1022 = vpack.c.b16 %v986, %v985
    %v1023 = vpack.c.b16 %v988, %v987
    %v1024 = vpack.c.b16 %v990, %v989
    %v1025 = vpack.c.b16 %v992, %v991
    %v1026 = vpack.c.b16 %v994, %v993
    %1059 = vmatprep.subr.bf16.mxu0 0
    %1060 = vmatpush1.bf16.msra.mxu0 %v1002
    %1061 = vmatprep.subr.bf16.mxu0 0
    %1062 = vmatpush1.bf16.msra.mxu0 %v1001
    %1063 = vmatprep.subr.bf16.mxu0 0
    %1064 = vmatpush1.bf16.msra.mxu0 %v1000
    %1065 = vmatprep.subr.bf16.mxu0 0
    %1066 = vmatpush1.bf16.msra.mxu0 %v999
    %1067 = vmatprep.subr.bf16.mxu0 0
    %1068 = vmatpush1.bf16.msra.mxu0 %v998
    %1069 = vmatprep.subr.bf16.mxu0 0
    %1070 = vmatpush1.bf16.msra.mxu0 %v997
    %1071 = vmatprep.subr.bf16.mxu0 0
    %1072 = vmatpush1.bf16.msra.mxu0 %v996
    %1073 = vmatprep.subr.bf16.mxu0 0
    %1074 = vmatpush1.bf16.msra.mxu0 %v995
    %1075 = vmatprep.subr.bf16.mxu0 0
    %1076 = vmatpush2.bf16.msra.mxu0 %v1010
    %1077 = vmatprep.subr.bf16.mxu0 0
    %1078 = vmatpush2.bf16.msra.mxu0 %v1009
    %1079 = vmatprep.subr.bf16.mxu0 0
    %1080 = vmatpush2.bf16.msra.mxu0 %v1008
    %1081 = vmatprep.subr.bf16.mxu0 0
    %1082 = vmatpush2.bf16.msra.mxu0 %v1007
    %1083 = vmatprep.subr.bf16.mxu0 0
    %1084 = vmatpush2.bf16.msra.mxu0 %v1006
    %1085 = vmatprep.subr.bf16.mxu0 0
    %1086 = vmatpush2.bf16.msra.mxu0 %v1005
    %1087 = vmatprep.subr.bf16.mxu0 0
    %1088 = vmatpush2.bf16.msra.mxu0 %v1004
    %1089 = vmatprep.subr.bf16.mxu0 0
    %1090 = vmatpush2.bf16.msra.mxu0 %v1003
    %1091 = vmatprep.mubr.bf16.mxu0 %v772
    %1092 = vmatmul.mubr.bf16.gmra.mxu0 %v771
    %v1093 = vpop.f32.mrf.mxu0
    %v1094 = vadd.f32 0.0, %v1093
    %v1095 = vpop.f32.mrf.mxu0
    %v1096 = vpop.f32.mrf.mxu0
    %v1097 = vadd.f32 0.0, %v1096
    %v1098 = vpop.f32.mrf.mxu0
    %1099 = vmatprep.mubr.bf16.mxu0 %v776
    %1100 = vmatmul.mubr.bf16.gmra.mxu0 %v775
    %v1101 = vpop.f32.mrf.mxu0
    %v1102 = vadd.f32 0.0, %v1101
    %v1103 = vpop.f32.mrf.mxu0
    %v1104 = vpop.f32.mrf.mxu0
    %v1105 = vadd.f32 0.0, %v1104
    %v1106 = vpop.f32.mrf.mxu0
    %1107 = vmatprep.mubr.bf16.mxu0 %v780
    %1108 = vmatmul.mubr.bf16.gmra.mxu0 %v779
    %v1109 = vpop.f32.mrf.mxu0
    %v1110 = vadd.f32 0.0, %v1109
    %v1111 = vpop.f32.mrf.mxu0
    %v1112 = vpop.f32.mrf.mxu0
    %v1113 = vadd.f32 0.0, %v1112
    %v1114 = vpop.f32.mrf.mxu0
    %1115 = vmatprep.mubr.bf16.mxu0 %v784
    %1116 = vmatmul.mubr.bf16.gmra.mxu0 %v783
    %v1117 = vpop.f32.mrf.mxu0
    %v1118 = vadd.f32 0.0, %v1117
    %v1119 = vpop.f32.mrf.mxu0
    %v1120 = vpop.f32.mrf.mxu0
    %v1121 = vadd.f32 0.0, %v1120
    %v1122 = vpop.f32.mrf.mxu0
    %1123 = vmatprep.mubr.bf16.mxu0 %v788
    %1124 = vmatmul.mubr.bf16.gmra.mxu0 %v787
    %v1125 = vpop.f32.mrf.mxu0
    %v1126 = vadd.f32 0.0, %v1125
    %v1127 = vpop.f32.mrf.mxu0
    %v1128 = vpop.f32.mrf.mxu0
    %v1129 = vadd.f32 0.0, %v1128
    %v1130 = vpop.f32.mrf.mxu0
    %1131 = vmatprep.mubr.bf16.mxu0 %v792
    %1132 = vmatmul.mubr.bf16.gmra.mxu0 %v791
    %v1133 = vpop.f32.mrf.mxu0
    %v1134 = vadd.f32 0.0, %v1133
    %v1135 = vpop.f32.mrf.mxu0
    %v1136 = vpop.f32.mrf.mxu0
    %v1137 = vadd.f32 0.0, %v1136
    %v1138 = vpop.f32.mrf.mxu0
    %1139 = vmatprep.mubr.bf16.mxu0 %v796
    %1140 = vmatmul.mubr.bf16.gmra.mxu0 %v795
    %v1141 = vpop.f32.mrf.mxu0
    %v1142 = vadd.f32 0.0, %v1141
    %v1143 = vpop.f32.mrf.mxu0
    %v1144 = vpop.f32.mrf.mxu0
    %v1145 = vadd.f32 0.0, %v1144
    %v1146 = vpop.f32.mrf.mxu0
    %1147 = vmatprep.mubr.bf16.mxu0 %v800
    %1148 = vmatmul.mubr.bf16.gmra.mxu0 %v799
    %v1149 = vpop.f32.mrf.mxu0
    %v1150 = vadd.f32 0.0, %v1149
    %v1151 = vpop.f32.mrf.mxu0
    %v1152 = vpop.f32.mrf.mxu0
    %v1153 = vadd.f32 0.0, %v1152
    %v1154 = vpop.f32.mrf.mxu0
    %1155 = vdwg.mxu0
    %1156 = vmatprep.subr.bf16.mxu0 0
    %1157 = vmatpush1.bf16.msra.mxu0 %v1018
    %1158 = vmatprep.subr.bf16.mxu0 0
    %1159 = vmatpush1.bf16.msra.mxu0 %v1017
    %1160 = vmatprep.subr.bf16.mxu0 0
    %1161 = vmatpush1.bf16.msra.mxu0 %v1016
    %1162 = vmatprep.subr.bf16.mxu0 0
    %1163 = vmatpush1.bf16.msra.mxu0 %v1015
    %1164 = vmatprep.subr.bf16.mxu0 0
    %1165 = vmatpush1.bf16.msra.mxu0 %v1014
    %1166 = vmatprep.subr.bf16.mxu0 0
    %1167 = vmatpush1.bf16.msra.mxu0 %v1013
    %1168 = vmatprep.subr.bf16.mxu0 0
    %1169 = vmatpush1.bf16.msra.mxu0 %v1012
    %1170 = vmatprep.subr.bf16.mxu0 0
    %1171 = vmatpush1.bf16.msra.mxu0 %v1011
    %1172 = vmatprep.subr.bf16.mxu0 0
    %1173 = vmatpush2.bf16.msra.mxu0 %v1026
    %1174 = vmatprep.subr.bf16.mxu0 0
    %1175 = vmatpush2.bf16.msra.mxu0 %v1025
    %1176 = vmatprep.subr.bf16.mxu0 0
    %1177 = vmatpush2.bf16.msra.mxu0 %v1024
    %1178 = vmatprep.subr.bf16.mxu0 0
    %1179 = vmatpush2.bf16.msra.mxu0 %v1023
    %1180 = vmatprep.subr.bf16.mxu0 0
    %1181 = vmatpush2.bf16.msra.mxu0 %v1022
    %1182 = vmatprep.subr.bf16.mxu0 0
    %1183 = vmatpush2.bf16.msra.mxu0 %v1021
    %1184 = vmatprep.subr.bf16.mxu0 0
    %1185 = vmatpush2.bf16.msra.mxu0 %v1020
    %1186 = vmatprep.subr.bf16.mxu0 0
    %1187 = vmatpush2.bf16.msra.mxu0 %v1019
    %1188 = vmatprep.mubr.bf16.mxu0 %v774
    %1189 = vmatmul.mubr.bf16.gmra.mxu0 %v773
    %v1190 = vpop.f32.mrf.mxu0
    %v1191 = vadd.f32 %v1094, %v1190
    %v1192 = vpop.f32.mrf.mxu0
    %v1193 = vpop.f32.mrf.mxu0
    %v1194 = vadd.f32 %v1097, %v1193
    %v1195 = vpop.f32.mrf.mxu0
    %1196 = vmatprep.mubr.bf16.mxu0 %v778
    %1197 = vmatmul.mubr.bf16.gmra.mxu0 %v777
    %v1198 = vpop.f32.mrf.mxu0
    %v1199 = vadd.f32 %v1102, %v1198
    %v1200 = vpop.f32.mrf.mxu0
    %v1201 = vpop.f32.mrf.mxu0
    %v1202 = vadd.f32 %v1105, %v1201
    %v1203 = vpop.f32.mrf.mxu0
    %1204 = vmatprep.mubr.bf16.mxu0 %v782
    %1205 = vmatmul.mubr.bf16.gmra.mxu0 %v781
    %v1206 = vpop.f32.mrf.mxu0
    %v1207 = vadd.f32 %v1110, %v1206
    %v1208 = vpop.f32.mrf.mxu0
    %v1209 = vpop.f32.mrf.mxu0
    %v1210 = vadd.f32 %v1113, %v1209
    %v1211 = vpop.f32.mrf.mxu0
    %1212 = vmatprep.mubr.bf16.mxu0 %v786
    %1213 = vmatmul.mubr.bf16.gmra.mxu0 %v785
    %v1214 = vpop.f32.mrf.mxu0
    %v1215 = vadd.f32 %v1118, %v1214
    %v1216 = vpop.f32.mrf.mxu0
    %v1217 = vpop.f32.mrf.mxu0
    %v1218 = vadd.f32 %v1121, %v1217
    %v1219 = vpop.f32.mrf.mxu0
    %1220 = vmatprep.mubr.bf16.mxu0 %v790
    %1221 = vmatmul.mubr.bf16.gmra.mxu0 %v789
    %v1222 = vpop.f32.mrf.mxu0
    %v1223 = vadd.f32 %v1126, %v1222
    %v1224 = vpop.f32.mrf.mxu0
    %v1225 = vpop.f32.mrf.mxu0
    %v1226 = vadd.f32 %v1129, %v1225
    %v1227 = vpop.f32.mrf.mxu0
    %1228 = vmatprep.mubr.bf16.mxu0 %v794
    %1229 = vmatmul.mubr.bf16.gmra.mxu0 %v793
    %v1230 = vpop.f32.mrf.mxu0
    %v1231 = vadd.f32 %v1134, %v1230
    %v1232 = vpop.f32.mrf.mxu0
    %v1233 = vpop.f32.mrf.mxu0
    %v1234 = vadd.f32 %v1137, %v1233
    %v1235 = vpop.f32.mrf.mxu0
    %1236 = vmatprep.mubr.bf16.mxu0 %v798
    %1237 = vmatmul.mubr.bf16.gmra.mxu0 %v797
    %v1238 = vpop.f32.mrf.mxu0
    %v1239 = vadd.f32 %v1142, %v1238
    %v1240 = vpop.f32.mrf.mxu0
    %v1241 = vpop.f32.mrf.mxu0
    %v1242 = vadd.f32 %v1145, %v1241
    %v1243 = vpop.f32.mrf.mxu0
    %1244 = vmatprep.mubr.bf16.mxu0 %v802
    %1245 = vmatmul.mubr.bf16.gmra.mxu0 %v801
    %v1246 = vpop.f32.mrf.mxu0
    %v1247 = vadd.f32 %v1150, %v1246
    %v1248 = vpop.f32.mrf.mxu0
    %v1249 = vpop.f32.mrf.mxu0
    %v1250 = vadd.f32 %v1153, %v1249
    %v1251 = vpop.f32.mrf.mxu0
    %1252 = vdwg.mxu0
    %v1253 = vadd.f32 %v1191, %v1194
    %v1254 = vadd.f32 %v1253, %v1199
    %v1255 = vadd.f32 %v1254, %v1202
    %v1256 = vadd.f32 %v1255, %v1207
    %v1257 = vadd.f32 %v1256, %v1210
    %v1258 = vadd.f32 %v1257, %v1215
    %v1259 = vadd.f32 %v1258, %v1218
    %v1260 = vadd.f32 %v1259, %v1223
    %v1261 = vadd.f32 %v1260, %v1226
    %v1262 = vadd.f32 %v1261, %v1231
    %v1263 = vadd.f32 %v1262, %v1234
    %v1264 = vadd.f32 %v1263, %v1239
    %v1265 = vadd.f32 %v1264, %v1242
    %v1266 = vadd.f32 %v1265, %v1247
    %v1267 = vadd.f32 %v1266, %v1250
    %v1268 = vrot.slane %v1267, 4
    %v1269 = vadd.f32 %v1267, %v1268
    %v1270 = vrot.slane %v1269, 2
    %v1271 = vadd.f32 %v1269, %v1270
    %v1272 = vrot.slane %v1271, 1
    %v1273 = vadd.f32 %v1271, %v1272
    %v1274 = vmul.f32 %v1191, %v1191
    %v1275 = vmul.f32 %v1194, %v1194
    %v1276 = vmul.f32 %v1199, %v1199
    %v1277 = vmul.f32 %v1202, %v1202
    %v1278 = vmul.f32 %v1207, %v1207
    %v1279 = vmul.f32 %v1210, %v1210
    %v1280 = vmul.f32 %v1215, %v1215
    %v1281 = vmul.f32 %v1218, %v1218
    %v1282 = vmul.f32 %v1223, %v1223
    %v1283 = vmul.f32 %v1226, %v1226
    %v1284 = vmul.f32 %v1231, %v1231
    %v1285 = vmul.f32 %v1234, %v1234
    %v1286 = vmul.f32 %v1239, %v1239
    %v1287 = vmul.f32 %v1242, %v1242
    %v1288 = vmul.f32 %v1247, %v1247
    %v1289 = vmul.f32 %v1250, %v1250
    %v1290 = vadd.f32 %v1274, %v1275
    %v1291 = vadd.f32 %v1290, %v1276
    %v1292 = vadd.f32 %v1291, %v1277
    %v1293 = vadd.f32 %v1292, %v1278
    %v1294 = vadd.f32 %v1293, %v1279
    %v1295 = vadd.f32 %v1294, %v1280
    %v1296 = vadd.f32 %v1295, %v1281
    %v1297 = vadd.f32 %v1296, %v1282
    %v1298 = vadd.f32 %v1297, %v1283
    %v1299 = vadd.f32 %v1298, %v1284
    %v1300 = vadd.f32 %v1299, %v1285
    %v1301 = vadd.f32 %v1300, %v1286
    %v1302 = vadd.f32 %v1301, %v1287
    %v1303 = vadd.f32 %v1302, %v1288
    %v1304 = vadd.f32 %v1303, %v1289
    %v1305 = vrot.slane %v1304, 4
    %v1306 = vadd.f32 %v1304, %v1305
    %v1307 = vrot.slane %v1306, 2
    %v1308 = vadd.f32 %v1306, %v1307
    %v1309 = vrot.slane %v1308, 1
    %v1310 = vadd.f32 %v1308, %v1309
    %v1311 = vmul.f32 %v1273, 0.0078125
    %v1312 = vmul.f32 %v1310, 0.0078125
    %v1313 = vmul.f32 %v1311, %v1311
    %v1314 = vsub.f32 %v1312, %v1313
    %v1315 = vmax.f32 %v1314, 0.0
    %v1316 = vld [vmem:[%s4] sm:$0x1]
    %v1317 = vadd.f32 %v1315, 1e-05
    %v1318 = vrsqrt.pop %v1317
    %v1319 = vmul.f32 %v1316, %v1318
    %v1320 = vld [vmem:[%s5] sm:$0x1]
    %v1321 = vmul.f32 %v1311, %v1319
    %v1322 = vsub.f32 %v1320, %v1321
    %v1324 = vlaneseq
    %v1325 = vshrl.u32 %v1324, 7
    %v1326 = vsub.s32 0, %v1325
    %v1327 = vrot.slane %v1319, %v1326
    %v1329 = vmul.f32 %v1191, %v1327
    %v1330 = vmul.f32 %v1194, %v1327
    %v1331 = vmul.f32 %v1199, %v1327
    %v1332 = vmul.f32 %v1202, %v1327
    %v1333 = vmul.f32 %v1207, %v1327
    %v1334 = vmul.f32 %v1210, %v1327
    %v1335 = vmul.f32 %v1215, %v1327
    %v1336 = vmul.f32 %v1218, %v1327
    %v1337 = vmul.f32 %v1223, %v1327
    %v1338 = vmul.f32 %v1226, %v1327
    %v1339 = vmul.f32 %v1231, %v1327
    %v1340 = vmul.f32 %v1234, %v1327
    %v1341 = vmul.f32 %v1239, %v1327
    %v1342 = vmul.f32 %v1242, %v1327
    %v1343 = vmul.f32 %v1247, %v1327
    %v1344 = vmul.f32 %v1250, %v1327
    %v1346 = vlaneseq
    %v1347 = vshrl.u32 %v1346, 7
    %v1348 = vsub.s32 0, %v1347
    %v1349 = vrot.slane %v1322, %v1348
    %v1351 = vadd.f32 %v1329, %v1349
    %v1352 = vadd.f32 %v1330, %v1349
    %v1353 = vadd.f32 %v1331, %v1349
    %v1354 = vadd.f32 %v1332, %v1349
    %v1355 = vadd.f32 %v1333, %v1349
    %v1356 = vadd.f32 %v1334, %v1349
    %v1357 = vadd.f32 %v1335, %v1349
    %v1358 = vadd.f32 %v1336, %v1349
    %v1359 = vadd.f32 %v1337, %v1349
    %v1360 = vadd.f32 %v1338, %v1349
    %v1361 = vadd.f32 %v1339, %v1349
    %v1362 = vadd.f32 %v1340, %v1349
    %v1363 = vadd.f32 %v1341, %v1349
    %v1364 = vadd.f32 %v1342, %v1349
    %v1365 = vadd.f32 %v1343, %v1349
    %v1366 = vadd.f32 %v1344, %v1349
    %v1367 = vmax.f32 %v1351, 0.0
    %v1368 = vmax.f32 %v1352, 0.0
    %v1369 = vmax.f32 %v1353, 0.0
    %v1370 = vmax.f32 %v1354, 0.0
    %v1371 = vmax.f32 %v1355, 0.0
    %v1372 = vmax.f32 %v1356, 0.0
    %v1373 = vmax.f32 %v1357, 0.0
    %v1374 = vmax.f32 %v1358, 0.0
    %v1375 = vmax.f32 %v1359, 0.0
    %v1376 = vmax.f32 %v1360, 0.0
    %v1377 = vmax.f32 %v1361, 0.0
    %v1378 = vmax.f32 %v1362, 0.0
    %v1379 = vmax.f32 %v1363, 0.0
    %v1380 = vmax.f32 %v1364, 0.0
    %v1381 = vmax.f32 %v1365, 0.0
    %v1382 = vmax.f32 %v1366, 0.0
    %1383 = vst [vmem:[#allocation2] sm:$0xf] 0
    %1384 = vst [vmem:[#allocation2 + $0x4] sm:$0x1] 0
    %1385 = vst [vmem:[#allocation2 + $0x8] sm:$0xf] 0
    %1386 = vst [vmem:[#allocation2 + $0xc] sm:$0x1] 0
    %1387 = vst [vmem:[#allocation2 + $0x10] sm:$0xf] 0
    %1388 = vst [vmem:[#allocation2 + $0x14] sm:$0x1] 0
    %1389 = vst [vmem:[#allocation2 + $0x18] sm:$0xf] 0
    %1390 = vst [vmem:[#allocation2 + $0x1c] sm:$0x1] 0
    %1391 = vst [vmem:[#allocation2 + $0x20] sm:$0xf] 0
    %1392 = vst [vmem:[#allocation2 + $0x24] sm:$0x1] 0
    %1393 = vst [vmem:[#allocation2 + $0x28] sm:$0xf] 0
    %1394 = vst [vmem:[#allocation2 + $0x2c] sm:$0x1] 0
    %1395 = vst [vmem:[#allocation2 + $0x30] sm:$0xf] 0
    %1396 = vst [vmem:[#allocation2 + $0x34] sm:$0x1] 0
    %1397 = vst [vmem:[#allocation2 + $0x38] sm:$0xf] 0
    %1398 = vst [vmem:[#allocation2 + $0x3c] sm:$0x1] 0
    %1399 = vst [vmem:[#allocation2 + $0x40] sm:$0xf] 0
    %1400 = vst [vmem:[#allocation2 + $0x44] sm:$0x1] 0
    %1401 = vst [vmem:[#allocation2 + $0x48] sm:$0xf] 0
    %1402 = vst [vmem:[#allocation2 + $0x4c] sm:$0x1] 0
    %1403 = vst [vmem:[#allocation2 + $0x50] sm:$0xf] 0
    %1404 = vst [vmem:[#allocation2 + $0x54] sm:$0x1] 0
    %1405 = vst [vmem:[#allocation2 + $0x58] sm:$0xf] 0
    %1406 = vst [vmem:[#allocation2 + $0x5c] sm:$0x1] 0
    %1407 = vst [vmem:[#allocation2 + $0x60] sm:$0xf] 0
    %1408 = vst [vmem:[#allocation2 + $0x64] sm:$0x1] 0
    %1409 = vst [vmem:[#allocation2 + $0x68] sm:$0xf] 0
    %1410 = vst [vmem:[#allocation2 + $0x6c] sm:$0x1] 0
    %1411 = vst [vmem:[#allocation2 + $0x70] sm:$0xf] 0
    %1412 = vst [vmem:[#allocation2 + $0x74] sm:$0x1] 0
    %1413 = vst [vmem:[#allocation2 + $0x78] sm:$0xf] 0
    %1414 = vst [vmem:[#allocation2 + $0x7c] sm:$0x1] 0
    %1415 = vst [vmem:[#allocation2 + $0x80] sm:$0xf] 0
    %1416 = vst [vmem:[#allocation2 + $0x84] sm:$0x1] 0
    %1417 = vst [vmem:[#allocation2 + $0x88] sm:$0xf] 0
    %1418 = vst [vmem:[#allocation2 + $0x8c] sm:$0x1] 0
    %1419 = vst [vmem:[#allocation2 + $0x90] sm:$0xf] 0
    %1420 = vst [vmem:[#allocation2 + $0x94] sm:$0x1] 0
    %1421 = vst [vmem:[#allocation2 + $0x98] sm:$0xf] 0
    %1422 = vst [vmem:[#allocation2 + $0x9c] sm:$0x1] 0
    %v1423 = vpack.c.bf16 %v1368, %v1367
    %v1424 = vpack.c.bf16 %v1370, %v1369
    %v1425 = vpack.c.bf16 %v1372, %v1371
    %v1426 = vpack.c.bf16 %v1374, %v1373
    %v1427 = vpack.c.bf16 %v1376, %v1375
    %v1428 = vpack.c.bf16 %v1378, %v1377
    %v1429 = vpack.c.bf16 %v1380, %v1379
    %v1430 = vpack.c.bf16 %v1382, %v1381
    %v1439 = vunpack.c.l.b16 %v1423
    %v1440 = vunpack.c.h.b16 %v1423
    %v1441 = vunpack.c.l.b16 %v1424
    %v1442 = vunpack.c.h.b16 %v1424
    %v1443 = vunpack.c.l.b16 %v1425
    %v1444 = vunpack.c.h.b16 %v1425
    %v1445 = vunpack.c.l.b16 %v1426
    %v1446 = vunpack.c.h.b16 %v1426
    %v1447 = vunpack.c.l.b16 %v1427
    %v1448 = vunpack.c.h.b16 %v1427
    %v1449 = vunpack.c.l.b16 %v1428
    %v1450 = vunpack.c.h.b16 %v1428
    %v1451 = vunpack.c.l.b16 %v1429
    %v1452 = vunpack.c.h.b16 %v1429
    %v1453 = vunpack.c.l.b16 %v1430
    %v1454 = vunpack.c.h.b16 %v1430
    %v1455 = vpack.c.b16 %v1439, %v1439
    %v1456 = vpack.c.b16 %v1440, %v1440
    %v1457 = vpack.c.b16 %v1441, %v1441
    %v1458 = vpack.c.b16 %v1442, %v1442
    %v1459 = vpack.c.b16 %v1443, %v1443
    %v1460 = vpack.c.b16 %v1444, %v1444
    %v1461 = vpack.c.b16 %v1445, %v1445
    %v1462 = vpack.c.b16 %v1446, %v1446
    %v1463 = vpack.c.b16 %v1447, %v1447
    %v1464 = vpack.c.b16 %v1448, %v1448
    %v1465 = vpack.c.b16 %v1449, %v1449
    %v1466 = vpack.c.b16 %v1450, %v1450
    %v1467 = vpack.c.b16 %v1451, %v1451
    %v1468 = vpack.c.b16 %v1452, %v1452
    %v1469 = vpack.c.b16 %v1453, %v1453
    %v1470 = vpack.c.b16 %v1454, %v1454
    %v1472 = vshrl.u32 %v1455, 16
    %v1474 = vrot.slane %v1472, 7
    %v1475 = vshll.u32 %v1455, 16
    %v1477 = vor.u32 %v1474, %v1475
    %v1478 = vrot.slane %v1474, 4
    %v1480 = vshrl.u32 %v1456, 16
    %v1482 = vrot.slane %v1480, 7
    %v1483 = vshll.u32 %v1456, 16
    %v1485 = vor.u32 %v1482, %v1483
    %v1486 = vrot.slane %v1482, 4
    %v1488 = vshrl.u32 %v1457, 16
    %v1490 = vrot.slane %v1488, 7
    %v1491 = vshll.u32 %v1457, 16
    %v1493 = vor.u32 %v1490, %v1491
    %v1494 = vrot.slane %v1490, 4
    %v1496 = vshrl.u32 %v1458, 16
    %v1498 = vrot.slane %v1496, 7
    %v1499 = vshll.u32 %v1458, 16
    %v1501 = vor.u32 %v1498, %v1499
    %v1502 = vrot.slane %v1498, 4
    %v1504 = vshrl.u32 %v1459, 16
    %v1506 = vrot.slane %v1504, 7
    %v1507 = vshll.u32 %v1459, 16
    %v1509 = vor.u32 %v1506, %v1507
    %v1510 = vrot.slane %v1506, 4
    %v1512 = vshrl.u32 %v1460, 16
    %v1514 = vrot.slane %v1512, 7
    %v1515 = vshll.u32 %v1460, 16
    %v1517 = vor.u32 %v1514, %v1515
    %v1518 = vrot.slane %v1514, 4
    %v1520 = vshrl.u32 %v1461, 16
    %v1522 = vrot.slane %v1520, 7
    %v1523 = vshll.u32 %v1461, 16
    %v1525 = vor.u32 %v1522, %v1523
    %v1526 = vrot.slane %v1522, 4
    %v1528 = vshrl.u32 %v1462, 16
    %v1530 = vrot.slane %v1528, 7
    %v1531 = vshll.u32 %v1462, 16
    %v1533 = vor.u32 %v1530, %v1531
    %v1534 = vrot.slane %v1530, 4
    %v1536 = vshrl.u32 %v1463, 16
    %v1538 = vrot.slane %v1536, 7
    %v1539 = vshll.u32 %v1463, 16
    %v1541 = vor.u32 %v1538, %v1539
    %v1542 = vrot.slane %v1538, 4
    %v1544 = vshrl.u32 %v1464, 16
    %v1546 = vrot.slane %v1544, 7
    %v1547 = vshll.u32 %v1464, 16
    %v1549 = vor.u32 %v1546, %v1547
    %v1550 = vrot.slane %v1546, 4
    %v1552 = vshrl.u32 %v1465, 16
    %v1554 = vrot.slane %v1552, 7
    %v1555 = vshll.u32 %v1465, 16
    %v1557 = vor.u32 %v1554, %v1555
    %v1558 = vrot.slane %v1554, 4
    %v1560 = vshrl.u32 %v1466, 16
    %v1562 = vrot.slane %v1560, 7
    %v1563 = vshll.u32 %v1466, 16
    %v1565 = vor.u32 %v1562, %v1563
    %v1566 = vrot.slane %v1562, 4
    %v1568 = vshrl.u32 %v1467, 16
    %v1570 = vrot.slane %v1568, 7
    %v1571 = vshll.u32 %v1467, 16
    %v1573 = vor.u32 %v1570, %v1571
    %v1574 = vrot.slane %v1570, 4
    %v1576 = vshrl.u32 %v1468, 16
    %v1578 = vrot.slane %v1576, 7
    %v1579 = vshll.u32 %v1468, 16
    %v1581 = vor.u32 %v1578, %v1579
    %v1582 = vrot.slane %v1578, 4
    %v1584 = vshrl.u32 %v1469, 16
    %v1586 = vrot.slane %v1584, 7
    %v1587 = vshll.u32 %v1469, 16
    %v1589 = vor.u32 %v1586, %v1587
    %v1590 = vrot.slane %v1586, 4
    %v1592 = vshrl.u32 %v1470, 16
    %v1594 = vrot.slane %v1592, 7
    %v1595 = vshll.u32 %v1470, 16
    %v1597 = vor.u32 %v1594, %v1595
    %v1598 = vrot.slane %v1594, 4
    %s1631 = scalar_lea.vmem [#allocation2], 8
    %vm1632 = vcmask 1043456
    %vm1633 = vsmask.f32 7938
    %vm1634 = vmand %vm1632, %vm1633
    %v1635 = vld [vmem:[%s1631] sm:$0xf]
    %v1636 = vsel %vm1634, %v1477, %v1635
    %1637 = vst [vmem:[%s1631] sm:$0xf] %v1636
    %vm1638 = vcmask 1040384
    %vm1639 = vsmask.f32 256
    %vm1640 = vmand %vm1638, %vm1639
    %v1641 = vld [vmem:[%s1631 + $0x4] sm:$0x1]
    %v1642 = vsel %vm1640, %v1478, %v1641
    %1643 = vst [vmem:[%s1631 + $0x4] sm:$0x1] %v1642
    %v1644 = vld [vmem:[%s1631 + $0x8] sm:$0xf]
    %v1645 = vsel %vm1634, %v1485, %v1644
    %1646 = vst [vmem:[%s1631 + $0x8] sm:$0xf] %v1645
    %v1647 = vld [vmem:[%s1631 + $0xc] sm:$0x1]
    %v1648 = vsel %vm1640, %v1486, %v1647
    %1649 = vst [vmem:[%s1631 + $0xc] sm:$0x1] %v1648
    %v1650 = vld [vmem:[%s1631 + $0x10] sm:$0xf]
    %v1651 = vsel %vm1634, %v1493, %v1650
    %1652 = vst [vmem:[%s1631 + $0x10] sm:$0xf] %v1651
    %v1653 = vld [vmem:[%s1631 + $0x14] sm:$0x1]
    %v1654 = vsel %vm1640, %v1494, %v1653
    %1655 = vst [vmem:[%s1631 + $0x14] sm:$0x1] %v1654
    %v1656 = vld [vmem:[%s1631 + $0x18] sm:$0xf]
    %v1657 = vsel %vm1634, %v1501, %v1656
    %1658 = vst [vmem:[%s1631 + $0x18] sm:$0xf] %v1657
    %v1659 = vld [vmem:[%s1631 + $0x1c] sm:$0x1]
    %v1660 = vsel %vm1640, %v1502, %v1659
    %1661 = vst [vmem:[%s1631 + $0x1c] sm:$0x1] %v1660
    %v1662 = vld [vmem:[%s1631 + $0x20] sm:$0xf]
    %v1663 = vsel %vm1634, %v1509, %v1662
    %1664 = vst [vmem:[%s1631 + $0x20] sm:$0xf] %v1663
    %v1665 = vld [vmem:[%s1631 + $0x24] sm:$0x1]
    %v1666 = vsel %vm1640, %v1510, %v1665
    %1667 = vst [vmem:[%s1631 + $0x24] sm:$0x1] %v1666
    %v1668 = vld [vmem:[%s1631 + $0x28] sm:$0xf]
    %v1669 = vsel %vm1634, %v1517, %v1668
    %1670 = vst [vmem:[%s1631 + $0x28] sm:$0xf] %v1669
    %v1671 = vld [vmem:[%s1631 + $0x2c] sm:$0x1]
    %v1672 = vsel %vm1640, %v1518, %v1671
    %1673 = vst [vmem:[%s1631 + $0x2c] sm:$0x1] %v1672
    %v1674 = vld [vmem:[%s1631 + $0x30] sm:$0xf]
    %v1675 = vsel %vm1634, %v1525, %v1674
    %1676 = vst [vmem:[%s1631 + $0x30] sm:$0xf] %v1675
    %v1677 = vld [vmem:[%s1631 + $0x34] sm:$0x1]
    %v1678 = vsel %vm1640, %v1526, %v1677
    %1679 = vst [vmem:[%s1631 + $0x34] sm:$0x1] %v1678
    %v1680 = vld [vmem:[%s1631 + $0x38] sm:$0xf]
    %v1681 = vsel %vm1634, %v1533, %v1680
    %1682 = vst [vmem:[%s1631 + $0x38] sm:$0xf] %v1681
    %v1683 = vld [vmem:[%s1631 + $0x3c] sm:$0x1]
    %v1684 = vsel %vm1640, %v1534, %v1683
    %1685 = vst [vmem:[%s1631 + $0x3c] sm:$0x1] %v1684
    %v1686 = vld [vmem:[%s1631 + $0x50] sm:$0xf]
    %v1687 = vsel %vm1634, %v1541, %v1686
    %1688 = vst [vmem:[%s1631 + $0x50] sm:$0xf] %v1687
    %v1689 = vld [vmem:[%s1631 + $0x54] sm:$0x1]
    %v1690 = vsel %vm1640, %v1542, %v1689
    %1691 = vst [vmem:[%s1631 + $0x54] sm:$0x1] %v1690
    %v1692 = vld [vmem:[%s1631 + $0x58] sm:$0xf]
    %v1693 = vsel %vm1634, %v1549, %v1692
    %1694 = vst [vmem:[%s1631 + $0x58] sm:$0xf] %v1693
    %v1695 = vld [vmem:[%s1631 + $0x5c] sm:$0x1]
    %v1696 = vsel %vm1640, %v1550, %v1695
    %1697 = vst [vmem:[%s1631 + $0x5c] sm:$0x1] %v1696
    %v1698 = vld [vmem:[%s1631 + $0x60] sm:$0xf]
    %v1699 = vsel %vm1634, %v1557, %v1698
    %1700 = vst [vmem:[%s1631 + $0x60] sm:$0xf] %v1699
    %v1701 = vld [vmem:[%s1631 + $0x64] sm:$0x1]
    %v1702 = vsel %vm1640, %v1558, %v1701
    %1703 = vst [vmem:[%s1631 + $0x64] sm:$0x1] %v1702
    %v1704 = vld [vmem:[%s1631 + $0x68] sm:$0xf]
    %v1705 = vsel %vm1634, %v1565, %v1704
    %1706 = vst [vmem:[%s1631 + $0x68] sm:$0xf] %v1705
    %v1707 = vld [vmem:[%s1631 + $0x6c] sm:$0x1]
    %v1708 = vsel %vm1640, %v1566, %v1707
    %1709 = vst [vmem:[%s1631 + $0x6c] sm:$0x1] %v1708
    %v1710 = vld [vmem:[%s1631 + $0x70] sm:$0xf]
    %v1711 = vsel %vm1634, %v1573, %v1710
    %1712 = vst [vmem:[%s1631 + $0x70] sm:$0xf] %v1711
    %v1713 = vld [vmem:[%s1631 + $0x74] sm:$0x1]
    %v1714 = vsel %vm1640, %v1574, %v1713
    %1715 = vst [vmem:[%s1631 + $0x74] sm:$0x1] %v1714
    %v1716 = vld [vmem:[%s1631 + $0x78] sm:$0xf]
    %v1717 = vsel %vm1634, %v1581, %v1716
    %1718 = vst [vmem:[%s1631 + $0x78] sm:$0xf] %v1717
    %v1719 = vld [vmem:[%s1631 + $0x7c] sm:$0x1]
    %v1720 = vsel %vm1640, %v1582, %v1719
    %1721 = vst [vmem:[%s1631 + $0x7c] sm:$0x1] %v1720
    %v1722 = vld [vmem:[%s1631 + $0x80] sm:$0xf]
    %v1723 = vsel %vm1634, %v1589, %v1722
    %1724 = vst [vmem:[%s1631 + $0x80] sm:$0xf] %v1723
    %v1725 = vld [vmem:[%s1631 + $0x84] sm:$0x1]
    %v1726 = vsel %vm1640, %v1590, %v1725
    %1727 = vst [vmem:[%s1631 + $0x84] sm:$0x1] %v1726
    %v1728 = vld [vmem:[%s1631 + $0x88] sm:$0xf]
    %v1729 = vsel %vm1634, %v1597, %v1728
    %1730 = vst [vmem:[%s1631 + $0x88] sm:$0xf] %v1729
    %v1731 = vld [vmem:[%s1631 + $0x8c] sm:$0x1]
    %v1732 = vsel %vm1640, %v1598, %v1731
    %1733 = vst [vmem:[%s1631 + $0x8c] sm:$0x1] %v1732
    %v1734 = vld [vmem:[#allocation2] sm:$0xf]
    %v1735 = vld [vmem:[#allocation2 + $0x8] sm:$0xf]
    %v1736 = vld [vmem:[#allocation2 + $0x10] sm:$0xf]
    %v1737 = vld [vmem:[#allocation2 + $0x18] sm:$0xf]
    %v1738 = vld [vmem:[#allocation2 + $0x20] sm:$0xf]
    %v1739 = vld [vmem:[#allocation2 + $0x28] sm:$0xf]
    %v1740 = vld [vmem:[#allocation2 + $0x30] sm:$0xf]
    %v1741 = vld [vmem:[#allocation2 + $0x38] sm:$0xf]
    %v1742 = vld [vmem:[#allocation2 + $0x50] sm:$0xf]
    %v1743 = vld [vmem:[#allocation2 + $0x58] sm:$0xf]
    %v1744 = vld [vmem:[#allocation2 + $0x60] sm:$0xf]
    %v1745 = vld [vmem:[#allocation2 + $0x68] sm:$0xf]
    %v1746 = vld [vmem:[#allocation2 + $0x70] sm:$0xf]
    %v1747 = vld [vmem:[#allocation2 + $0x78] sm:$0xf]
    %v1748 = vld [vmem:[#allocation2 + $0x80] sm:$0xf]
    %v1749 = vld [vmem:[#allocation2 + $0x88] sm:$0xf]
    %1750 = vst [vmem:[#allocation3] sm:$0xf] %v1734
    %1751 = vst [vmem:[#allocation3 + $0x24] sm:$0xf] %v1735
    %1752 = vst [vmem:[#allocation3 + $0x48] sm:$0xf] %v1736
    %1753 = vst [vmem:[#allocation3 + $0x6c] sm:$0xf] %v1737
    %1754 = vst [vmem:[#allocation3 + $0x90] sm:$0xf] %v1738
    %1755 = vst [vmem:[#allocation3 + $0xb4] sm:$0xf] %v1739
    %1756 = vst [vmem:[#allocation3 + $0xd8] sm:$0xf] %v1740
    %1757 = vst [vmem:[#allocation3 + $0xfc] sm:$0xf] %v1741
    %1758 = vst [vmem:[#allocation3 + $0x120] sm:$0xf] %v1742
    %1759 = vst [vmem:[#allocation3 + $0x144] sm:$0xf] %v1743
    %1760 = vst [vmem:[#allocation3 + $0x168] sm:$0xf] %v1744
    %1761 = vst [vmem:[#allocation3 + $0x18c] sm:$0xf] %v1745
    %1762 = vst [vmem:[#allocation3 + $0x1b0] sm:$0xf] %v1746
    %1763 = vst [vmem:[#allocation3 + $0x1d4] sm:$0xf] %v1747
    %1764 = vst [vmem:[#allocation3 + $0x1f8] sm:$0xf] %v1748
    %1765 = vst [vmem:[#allocation3 + $0x21c] sm:$0xf] %v1749
    %v1766 = vld [vmem:[#allocation2] sm:$0xf]
    %v1767 = vld [vmem:[#allocation2 + $0x4] sm:$0x1]
    %v1768 = vld [vmem:[#allocation2 + $0x8] sm:$0xf]
    %v1769 = vld [vmem:[#allocation2 + $0xc] sm:$0x1]
    %v1770 = vld [vmem:[#allocation2 + $0x10] sm:$0xf]
    %v1771 = vld [vmem:[#allocation2 + $0x14] sm:$0x1]
    %v1772 = vld [vmem:[#allocation2 + $0x18] sm:$0xf]
    %v1773 = vld [vmem:[#allocation2 + $0x1c] sm:$0x1]
    %v1774 = vld [vmem:[#allocation2 + $0x20] sm:$0xf]
    %v1775 = vld [vmem:[#allocation2 + $0x24] sm:$0x1]
    %v1776 = vld [vmem:[#allocation2 + $0x28] sm:$0xf]
    %v1777 = vld [vmem:[#allocation2 + $0x2c] sm:$0x1]
    %v1778 = vld [vmem:[#allocation2 + $0x30] sm:$0xf]
    %v1779 = vld [vmem:[#allocation2 + $0x34] sm:$0x1]
    %v1780 = vld [vmem:[#allocation2 + $0x38] sm:$0xf]
    %v1781 = vld [vmem:[#allocation2 + $0x3c] sm:$0x1]
    %v1782 = vld [vmem:[#allocation2 + $0x50] sm:$0xf]
    %v1783 = vld [vmem:[#allocation2 + $0x54] sm:$0x1]
    %v1784 = vld [vmem:[#allocation2 + $0x58] sm:$0xf]
    %v1785 = vld [vmem:[#allocation2 + $0x5c] sm:$0x1]
    %v1786 = vld [vmem:[#allocation2 + $0x60] sm:$0xf]
    %v1787 = vld [vmem:[#allocation2 + $0x64] sm:$0x1]
    %v1788 = vld [vmem:[#allocation2 + $0x68] sm:$0xf]
    %v1789 = vld [vmem:[#allocation2 + $0x6c] sm:$0x1]
    %v1790 = vld [vmem:[#allocation2 + $0x70] sm:$0xf]
    %v1791 = vld [vmem:[#allocation2 + $0x74] sm:$0x1]
    %v1792 = vld [vmem:[#allocation2 + $0x78] sm:$0xf]
    %v1793 = vld [vmem:[#allocation2 + $0x7c] sm:$0x1]
    %v1794 = vld [vmem:[#allocation2 + $0x80] sm:$0xf]
    %v1795 = vld [vmem:[#allocation2 + $0x84] sm:$0x1]
    %v1796 = vld [vmem:[#allocation2 + $0x88] sm:$0xf]
    %v1797 = vld [vmem:[#allocation2 + $0x8c] sm:$0x1]
    %vm1798 = vsmask.f32 3328
    %vm1799 = vsmask.f32 7440
    %vm1800 = vmor %vm1798, %vm1799
    %v1802 = vshrl.u32 %v1766, 16
    %v1804 = vrot.slane %v1802, 4
    %v1805 = vshll.u32 %v1766, 16
    %v1807 = vrot.slane %v1805, 5
    %v1808 = vor.u32 %v1804, %v1807
    %v1809 = vrot.slane %v1808, 4
    %v1811 = vshll.u32 %v1767, 16
    %v1813 = vrot.slane %v1811, 5
    %v1814 = vsel %vm1800, %v1809, %v1813
    %v1816 = vshrl.u32 %v1768, 16
    %v1818 = vrot.slane %v1816, 4
    %v1819 = vshll.u32 %v1768, 16
    %v1821 = vrot.slane %v1819, 5
    %v1822 = vor.u32 %v1818, %v1821
    %v1823 = vrot.slane %v1822, 4
    %v1825 = vshll.u32 %v1769, 16
    %v1827 = vrot.slane %v1825, 5
    %v1828 = vsel %vm1800, %v1823, %v1827
    %v1830 = vshrl.u32 %v1770, 16
    %v1832 = vrot.slane %v1830, 4
    %v1833 = vshll.u32 %v1770, 16
    %v1835 = vrot.slane %v1833, 5
    %v1836 = vor.u32 %v1832, %v1835
    %v1837 = vrot.slane %v1836, 4
    %v1839 = vshll.u32 %v1771, 16
    %v1841 = vrot.slane %v1839, 5
    %v1842 = vsel %vm1800, %v1837, %v1841
    %v1844 = vshrl.u32 %v1772, 16
    %v1846 = vrot.slane %v1844, 4
    %v1847 = vshll.u32 %v1772, 16
    %v1849 = vrot.slane %v1847, 5
    %v1850 = vor.u32 %v1846, %v1849
    %v1851 = vrot.slane %v1850, 4
    %v1853 = vshll.u32 %v1773, 16
    %v1855 = vrot.slane %v1853, 5
    %v1856 = vsel %vm1800, %v1851, %v1855
    %v1858 = vshrl.u32 %v1774, 16
    %v1860 = vrot.slane %v1858, 4
    %v1861 = vshll.u32 %v1774, 16
    %v1863 = vrot.slane %v1861, 5
    %v1864 = vor.u32 %v1860, %v1863
    %v1865 = vrot.slane %v1864, 4
    %v1867 = vshll.u32 %v1775, 16
    %v1869 = vrot.slane %v1867, 5
    %v1870 = vsel %vm1800, %v1865, %v1869
    %v1872 = vshrl.u32 %v1776, 16
    %v1874 = vrot.slane %v1872, 4
    %v1875 = vshll.u32 %v1776, 16
    %v1877 = vrot.slane %v1875, 5
    %v1878 = vor.u32 %v1874, %v1877
    %v1879 = vrot.slane %v1878, 4
    %v1881 = vshll.u32 %v1777, 16
    %v1883 = vrot.slane %v1881, 5
    %v1884 = vsel %vm1800, %v1879, %v1883
    %v1886 = vshrl.u32 %v1778, 16
    %v1888 = vrot.slane %v1886, 4
    %v1889 = vshll.u32 %v1778, 16
    %v1891 = vrot.slane %v1889, 5
    %v1892 = vor.u32 %v1888, %v1891
    %v1893 = vrot.slane %v1892, 4
    %v1895 = vshll.u32 %v1779, 16
    %v1897 = vrot.slane %v1895, 5
    %v1898 = vsel %vm1800, %v1893, %v1897
    %v1900 = vshrl.u32 %v1780, 16
    %v1902 = vrot.slane %v1900, 4
    %v1903 = vshll.u32 %v1780, 16
    %v1905 = vrot.slane %v1903, 5
    %v1906 = vor.u32 %v1902, %v1905
    %v1907 = vrot.slane %v1906, 4
    %v1909 = vshll.u32 %v1781, 16
    %v1911 = vrot.slane %v1909, 5
    %v1912 = vsel %vm1800, %v1907, %v1911
    %v1914 = vshrl.u32 %v1782, 16
    %v1916 = vrot.slane %v1914, 4
    %v1917 = vshll.u32 %v1782, 16
    %v1919 = vrot.slane %v1917, 5
    %v1920 = vor.u32 %v1916, %v1919
    %v1921 = vrot.slane %v1920, 4
    %v1923 = vshll.u32 %v1783, 16
    %v1925 = vrot.slane %v1923, 5
    %v1926 = vsel %vm1800, %v1921, %v1925
    %v1928 = vshrl.u32 %v1784, 16
    %v1930 = vrot.slane %v1928, 4
    %v1931 = vshll.u32 %v1784, 16
    %v1933 = vrot.slane %v1931, 5
    %v1934 = vor.u32 %v1930, %v1933
    %v1935 = vrot.slane %v1934, 4
    %v1937 = vshll.u32 %v1785, 16
    %v1939 = vrot.slane %v1937, 5
    %v1940 = vsel %vm1800, %v1935, %v1939
    %v1942 = vshrl.u32 %v1786, 16
    %v1944 = vrot.slane %v1942, 4
    %v1945 = vshll.u32 %v1786, 16
    %v1947 = vrot.slane %v1945, 5
    %v1948 = vor.u32 %v1944, %v1947
    %v1949 = vrot.slane %v1948, 4
    %v1951 = vshll.u32 %v1787, 16
    %v1953 = vrot.slane %v1951, 5
    %v1954 = vsel %vm1800, %v1949, %v1953
    %v1956 = vshrl.u32 %v1788, 16
    %v1958 = vrot.slane %v1956, 4
    %v1959 = vshll.u32 %v1788, 16
    %v1961 = vrot.slane %v1959, 5
    %v1962 = vor.u32 %v1958, %v1961
    %v1963 = vrot.slane %v1962, 4
    %v1965 = vshll.u32 %v1789, 16
    %v1967 = vrot.slane %v1965, 5
    %v1968 = vsel %vm1800, %v1963, %v1967
    %v1970 = vshrl.u32 %v1790, 16
    %v1972 = vrot.slane %v1970, 4
    %v1973 = vshll.u32 %v1790, 16
    %v1975 = vrot.slane %v1973, 5
    %v1976 = vor.u32 %v1972, %v1975
    %v1977 = vrot.slane %v1976, 4
    %v1979 = vshll.u32 %v1791, 16
    %v1981 = vrot.slane %v1979, 5
    %v1982 = vsel %vm1800, %v1977, %v1981
    %v1984 = vshrl.u32 %v1792, 16
    %v1986 = vrot.slane %v1984, 4
    %v1987 = vshll.u32 %v1792, 16
    %v1989 = vrot.slane %v1987, 5
    %v1990 = vor.u32 %v1986, %v1989
    %v1991 = vrot.slane %v1990, 4
    %v1993 = vshll.u32 %v1793, 16
    %v1995 = vrot.slane %v1993, 5
    %v1996 = vsel %vm1800, %v1991, %v1995
    %v1998 = vshrl.u32 %v1794, 16
    %v2000 = vrot.slane %v1998, 4
    %v2001 = vshll.u32 %v1794, 16
    %v2003 = vrot.slane %v2001, 5
    %v2004 = vor.u32 %v2000, %v2003
    %v2005 = vrot.slane %v2004, 4
    %v2007 = vshll.u32 %v1795, 16
    %v2009 = vrot.slane %v2007, 5
    %v2010 = vsel %vm1800, %v2005, %v2009
    %v2012 = vshrl.u32 %v1796, 16
    %v2014 = vrot.slane %v2012, 4
    %v2015 = vshll.u32 %v1796, 16
    %v2017 = vrot.slane %v2015, 5
    %v2018 = vor.u32 %v2014, %v2017
    %v2019 = vrot.slane %v2018, 4
    %v2021 = vshll.u32 %v1797, 16
    %v2023 = vrot.slane %v2021, 5
    %v2024 = vsel %vm1800, %v2019, %v2023
    %2041 = vst [vmem:[#allocation3 + $0x4] sm:$0xf] %v1814
    %2042 = vst [vmem:[#allocation3 + $0x28] sm:$0xf] %v1828
    %2043 = vst [vmem:[#allocation3 + $0x4c] sm:$0xf] %v1842
    %2044 = vst [vmem:[#allocation3 + $0x70] sm:$0xf] %v1856
    %2045 = vst [vmem:[#allocation3 + $0x94] sm:$0xf] %v1870
    %2046 = vst [vmem:[#allocation3 + $0xb8] sm:$0xf] %v1884
    %2047 = vst [vmem:[#allocation3 + $0xdc] sm:$0xf] %v1898
    %2048 = vst [vmem:[#allocation3 + $0x100] sm:$0xf] %v1912
    %2049 = vst [vmem:[#allocation3 + $0x124] sm:$0xf] %v1926
    %2050 = vst [vmem:[#allocation3 + $0x148] sm:$0xf] %v1940
    %2051 = vst [vmem:[#allocation3 + $0x16c] sm:$0xf] %v1954
    %2052 = vst [vmem:[#allocation3 + $0x190] sm:$0xf] %v1968
    %2053 = vst [vmem:[#allocation3 + $0x1b4] sm:$0xf] %v1982
    %2054 = vst [vmem:[#allocation3 + $0x1d8] sm:$0xf] %v1996
    %2055 = vst [vmem:[#allocation3 + $0x1fc] sm:$0xf] %v2010
    %2056 = vst [vmem:[#allocation3 + $0x220] sm:$0xf] %v2024
    %v2057 = vld [vmem:[#allocation2] sm:$0xe]
    %v2058 = vld [vmem:[#allocation2 + $0x4] sm:$0x1]
    %v2059 = vld [vmem:[#allocation2 + $0x8] sm:$0xe]
    %v2060 = vld [vmem:[#allocation2 + $0xc] sm:$0x1]
    %v2061 = vld [vmem:[#allocation2 + $0x10] sm:$0xe]
    %v2062 = vld [vmem:[#allocation2 + $0x14] sm:$0x1]
    %v2063 = vld [vmem:[#allocation2 + $0x18] sm:$0xe]
    %v2064 = vld [vmem:[#allocation2 + $0x1c] sm:$0x1]
    %v2065 = vld [vmem:[#allocation2 + $0x20] sm:$0xe]
    %v2066 = vld [vmem:[#allocation2 + $0x24] sm:$0x1]
    %v2067 = vld [vmem:[#allocation2 + $0x28] sm:$0xe]
    %v2068 = vld [vmem:[#allocation2 + $0x2c] sm:$0x1]
    %v2069 = vld [vmem:[#allocation2 + $0x30] sm:$0xe]
    %v2070 = vld [vmem:[#allocation2 + $0x34] sm:$0x1]
    %v2071 = vld [vmem:[#allocation2 + $0x38] sm:$0xe]
    %v2072 = vld [vmem:[#allocation2 + $0x3c] sm:$0x1]
    %v2073 = vld [vmem:[#allocation2 + $0x50] sm:$0xe]
    %v2074 = vld [vmem:[#allocation2 + $0x54] sm:$0x1]
    %v2075 = vld [vmem:[#allocation2 + $0x58] sm:$0xe]
    %v2076 = vld [vmem:[#allocation2 + $0x5c] sm:$0x1]
    %v2077 = vld [vmem:[#allocation2 + $0x60] sm:$0xe]
    %v2078 = vld [vmem:[#allocation2 + $0x64] sm:$0x1]
    %v2079 = vld [vmem:[#allocation2 + $0x68] sm:$0xe]
    %v2080 = vld [vmem:[#allocation2 + $0x6c] sm:$0x1]
    %v2081 = vld [vmem:[#allocation2 + $0x70] sm:$0xe]
    %v2082 = vld [vmem:[#allocation2 + $0x74] sm:$0x1]
    %v2083 = vld [vmem:[#allocation2 + $0x78] sm:$0xe]
    %v2084 = vld [vmem:[#allocation2 + $0x7c] sm:$0x1]
    %v2085 = vld [vmem:[#allocation2 + $0x80] sm:$0xe]
    %v2086 = vld [vmem:[#allocation2 + $0x84] sm:$0x1]
    %v2087 = vld [vmem:[#allocation2 + $0x88] sm:$0xe]
    %v2088 = vld [vmem:[#allocation2 + $0x8c] sm:$0x1]
    %vm2121 = vcmask 1042432
    %vm2122 = vcmask 1046532
    %vm2123 = vmor %vm2121, %vm2122
    %v2124 = vrot.slane %v2057, 5
    %v2125 = vrot.slane %v2124, 4
    %v2126 = vrot.slane %v2058, 5
    %v2127 = vsel %vm2123, %v2125, %v2126
    %v2128 = vrot.slane %v2059, 5
    %v2129 = vrot.slane %v2128, 4
    %v2130 = vrot.slane %v2060, 5
    %v2131 = vsel %vm2123, %v2129, %v2130
    %v2132 = vrot.slane %v2061, 5
    %v2133 = vrot.slane %v2132, 4
    %v2134 = vrot.slane %v2062, 5
    %v2135 = vsel %vm2123, %v2133, %v2134
    %v2136 = vrot.slane %v2063, 5
    %v2137 = vrot.slane %v2136, 4
    %v2138 = vrot.slane %v2064, 5
    %v2139 = vsel %vm2123, %v2137, %v2138
    %v2140 = vrot.slane %v2065, 5
    %v2141 = vrot.slane %v2140, 4
    %v2142 = vrot.slane %v2066, 5
    %v2143 = vsel %vm2123, %v2141, %v2142
    %v2144 = vrot.slane %v2067, 5
    %v2145 = vrot.slane %v2144, 4
    %v2146 = vrot.slane %v2068, 5
    %v2147 = vsel %vm2123, %v2145, %v2146
    %v2148 = vrot.slane %v2069, 5
    %v2149 = vrot.slane %v2148, 4
    %v2150 = vrot.slane %v2070, 5
    %v2151 = vsel %vm2123, %v2149, %v2150
    %v2152 = vrot.slane %v2071, 5
    %v2153 = vrot.slane %v2152, 4
    %v2154 = vrot.slane %v2072, 5
    %v2155 = vsel %vm2123, %v2153, %v2154
    %v2156 = vrot.slane %v2073, 5
    %v2157 = vrot.slane %v2156, 4
    %v2158 = vrot.slane %v2074, 5
    %v2159 = vsel %vm2123, %v2157, %v2158
    %v2160 = vrot.slane %v2075, 5
    %v2161 = vrot.slane %v2160, 4
    %v2162 = vrot.slane %v2076, 5
    %v2163 = vsel %vm2123, %v2161, %v2162
    %v2164 = vrot.slane %v2077, 5
    %v2165 = vrot.slane %v2164, 4
    %v2166 = vrot.slane %v2078, 5
    %v2167 = vsel %vm2123, %v2165, %v2166
    %v2168 = vrot.slane %v2079, 5
    %v2169 = vrot.slane %v2168, 4
    %v2170 = vrot.slane %v2080, 5
    %v2171 = vsel %vm2123, %v2169, %v2170
    %v2172 = vrot.slane %v2081, 5
    %v2173 = vrot.slane %v2172, 4
    %v2174 = vrot.slane %v2082, 5
    %v2175 = vsel %vm2123, %v2173, %v2174
    %v2176 = vrot.slane %v2083, 5
    %v2177 = vrot.slane %v2176, 4
    %v2178 = vrot.slane %v2084, 5
    %v2179 = vsel %vm2123, %v2177, %v2178
    %v2180 = vrot.slane %v2085, 5
    %v2181 = vrot.slane %v2180, 4
    %v2182 = vrot.slane %v2086, 5
    %v2183 = vsel %vm2123, %v2181, %v2182
    %v2184 = vrot.slane %v2087, 5
    %v2185 = vrot.slane %v2184, 4
    %v2186 = vrot.slane %v2088, 5
    %v2187 = vsel %vm2123, %v2185, %v2186
    %2204 = vst [vmem:[#allocation3 + $0x8] sm:$0xf] %v2127
    %2205 = vst [vmem:[#allocation3 + $0x2c] sm:$0xf] %v2131
    %2206 = vst [vmem:[#allocation3 + $0x50] sm:$0xf] %v2135
    %2207 = vst [vmem:[#allocation3 + $0x74] sm:$0xf] %v2139
    %2208 = vst [vmem:[#allocation3 + $0x98] sm:$0xf] %v2143
    %2209 = vst [vmem:[#allocation3 + $0xbc] sm:$0xf] %v2147
    %2210 = vst [vmem:[#allocation3 + $0xe0] sm:$0xf] %v2151
    %2211 = vst [vmem:[#allocation3 + $0x104] sm:$0xf] %v2155
    %2212 = vst [vmem:[#allocation3 + $0x128] sm:$0xf] %v2159
    %2213 = vst [vmem:[#allocation3 + $0x14c] sm:$0xf] %v2163
    %2214 = vst [vmem:[#allocation3 + $0x170] sm:$0xf] %v2167
    %2215 = vst [vmem:[#allocation3 + $0x194] sm:$0xf] %v2171
    %2216 = vst [vmem:[#allocation3 + $0x1b8] sm:$0xf] %v2175
    %2217 = vst [vmem:[#allocation3 + $0x1dc] sm:$0xf] %v2179
    %2218 = vst [vmem:[#allocation3 + $0x200] sm:$0xf] %v2183
    %2219 = vst [vmem:[#allocation3 + $0x224] sm:$0xf] %v2187
    %v2220 = vld [vmem:[%s1631] sm:$0xf]
    %v2221 = vld [vmem:[%s1631 + $0x8] sm:$0xf]
    %v2222 = vld [vmem:[%s1631 + $0x10] sm:$0xf]
    %v2223 = vld [vmem:[%s1631 + $0x18] sm:$0xf]
    %v2224 = vld [vmem:[%s1631 + $0x20] sm:$0xf]
    %v2225 = vld [vmem:[%s1631 + $0x28] sm:$0xf]
    %v2226 = vld [vmem:[%s1631 + $0x30] sm:$0xf]
    %v2227 = vld [vmem:[%s1631 + $0x38] sm:$0xf]
    %v2228 = vld [vmem:[%s1631 + $0x50] sm:$0xf]
    %v2229 = vld [vmem:[%s1631 + $0x58] sm:$0xf]
    %v2230 = vld [vmem:[%s1631 + $0x60] sm:$0xf]
    %v2231 = vld [vmem:[%s1631 + $0x68] sm:$0xf]
    %v2232 = vld [vmem:[%s1631 + $0x70] sm:$0xf]
    %v2233 = vld [vmem:[%s1631 + $0x78] sm:$0xf]
    %v2234 = vld [vmem:[%s1631 + $0x80] sm:$0xf]
    %v2235 = vld [vmem:[%s1631 + $0x88] sm:$0xf]
    %2236 = vst [vmem:[#allocation3 + $0xc] sm:$0xf] %v2220
    %2237 = vst [vmem:[#allocation3 + $0x30] sm:$0xf] %v2221
    %2238 = vst [vmem:[#allocation3 + $0x54] sm:$0xf] %v2222
    %2239 = vst [vmem:[#allocation3 + $0x78] sm:$0xf] %v2223
    %2240 = vst [vmem:[#allocation3 + $0x9c] sm:$0xf] %v2224
    %2241 = vst [vmem:[#allocation3 + $0xc0] sm:$0xf] %v2225
    %2242 = vst [vmem:[#allocation3 + $0xe4] sm:$0xf] %v2226
    %2243 = vst [vmem:[#allocation3 + $0x108] sm:$0xf] %v2227
    %2244 = vst [vmem:[#allocation3 + $0x12c] sm:$0xf] %v2228
    %2245 = vst [vmem:[#allocation3 + $0x150] sm:$0xf] %v2229
    %2246 = vst [vmem:[#allocation3 + $0x174] sm:$0xf] %v2230
    %2247 = vst [vmem:[#allocation3 + $0x198] sm:$0xf] %v2231
    %2248 = vst [vmem:[#allocation3 + $0x1bc] sm:$0xf] %v2232
    %2249 = vst [vmem:[#allocation3 + $0x1e0] sm:$0xf] %v2233
    %2250 = vst [vmem:[#allocation3 + $0x204] sm:$0xf] %v2234
    %2251 = vst [vmem:[#allocation3 + $0x228] sm:$0xf] %v2235
    %v2252 = vld [vmem:[%s1631] sm:$0xf]
    %v2253 = vld [vmem:[%s1631 + $0x4] sm:$0x1]
    %v2254 = vld [vmem:[%s1631 + $0x8] sm:$0xf]
    %v2255 = vld [vmem:[%s1631 + $0xc] sm:$0x1]
    %v2256 = vld [vmem:[%s1631 + $0x10] sm:$0xf]
    %v2257 = vld [vmem:[%s1631 + $0x14] sm:$0x1]
    %v2258 = vld [vmem:[%s1631 + $0x18] sm:$0xf]
    %v2259 = vld [vmem:[%s1631 + $0x1c] sm:$0x1]
    %v2260 = vld [vmem:[%s1631 + $0x20] sm:$0xf]
    %v2261 = vld [vmem:[%s1631 + $0x24] sm:$0x1]
    %v2262 = vld [vmem:[%s1631 + $0x28] sm:$0xf]
    %v2263 = vld [vmem:[%s1631 + $0x2c] sm:$0x1]
    %v2264 = vld [vmem:[%s1631 + $0x30] sm:$0xf]
    %v2265 = vld [vmem:[%s1631 + $0x34] sm:$0x1]
    %v2266 = vld [vmem:[%s1631 + $0x38] sm:$0xf]
    %v2267 = vld [vmem:[%s1631 + $0x3c] sm:$0x1]
    %v2268 = vld [vmem:[%s1631 + $0x50] sm:$0xf]
    %v2269 = vld [vmem:[%s1631 + $0x54] sm:$0x1]
    %v2270 = vld [vmem:[%s1631 + $0x58] sm:$0xf]
    %v2271 = vld [vmem:[%s1631 + $0x5c] sm:$0x1]
    %v2272 = vld [vmem:[%s1631 + $0x60] sm:$0xf]
    %v2273 = vld [vmem:[%s1631 + $0x64] sm:$0x1]
    %v2274 = vld [vmem:[%s1631 + $0x68] sm:$0xf]
    %v2275 = vld [vmem:[%s1631 + $0x6c] sm:$0x1]
    %v2276 = vld [vmem:[%s1631 + $0x70] sm:$0xf]
    %v2277 = vld [vmem:[%s1631 + $0x74] sm:$0x1]
    %v2278 = vld [vmem:[%s1631 + $0x78] sm:$0xf]
    %v2279 = vld [vmem:[%s1631 + $0x7c] sm:$0x1]
    %v2280 = vld [vmem:[%s1631 + $0x80] sm:$0xf]
    %v2281 = vld [vmem:[%s1631 + $0x84] sm:$0x1]
    %v2282 = vld [vmem:[%s1631 + $0x88] sm:$0xf]
    %v2283 = vld [vmem:[%s1631 + $0x8c] sm:$0x1]
    %v2285 = vshrl.u32 %v2252, 16
    %v2287 = vrot.slane %v2285, 4
    %v2288 = vshll.u32 %v2252, 16
    %v2290 = vrot.slane %v2288, 5
    %v2291 = vor.u32 %v2287, %v2290
    %v2292 = vrot.slane %v2291, 4
    %v2294 = vshll.u32 %v2253, 16
    %v2296 = vrot.slane %v2294, 5
    %v2297 = vsel %vm1800, %v2292, %v2296
    %v2299 = vshrl.u32 %v2254, 16
    %v2301 = vrot.slane %v2299, 4
    %v2302 = vshll.u32 %v2254, 16
    %v2304 = vrot.slane %v2302, 5
    %v2305 = vor.u32 %v2301, %v2304
    %v2306 = vrot.slane %v2305, 4
    %v2308 = vshll.u32 %v2255, 16
    %v2310 = vrot.slane %v2308, 5
    %v2311 = vsel %vm1800, %v2306, %v2310
    %v2313 = vshrl.u32 %v2256, 16
    %v2315 = vrot.slane %v2313, 4
    %v2316 = vshll.u32 %v2256, 16
    %v2318 = vrot.slane %v2316, 5
    %v2319 = vor.u32 %v2315, %v2318
    %v2320 = vrot.slane %v2319, 4
    %v2322 = vshll.u32 %v2257, 16
    %v2324 = vrot.slane %v2322, 5
    %v2325 = vsel %vm1800, %v2320, %v2324
    %v2327 = vshrl.u32 %v2258, 16
    %v2329 = vrot.slane %v2327, 4
    %v2330 = vshll.u32 %v2258, 16
    %v2332 = vrot.slane %v2330, 5
    %v2333 = vor.u32 %v2329, %v2332
    %v2334 = vrot.slane %v2333, 4
    %v2336 = vshll.u32 %v2259, 16
    %v2338 = vrot.slane %v2336, 5
    %v2339 = vsel %vm1800, %v2334, %v2338
    %v2341 = vshrl.u32 %v2260, 16
    %v2343 = vrot.slane %v2341, 4
    %v2344 = vshll.u32 %v2260, 16
    %v2346 = vrot.slane %v2344, 5
    %v2347 = vor.u32 %v2343, %v2346
    %v2348 = vrot.slane %v2347, 4
    %v2350 = vshll.u32 %v2261, 16
    %v2352 = vrot.slane %v2350, 5
    %v2353 = vsel %vm1800, %v2348, %v2352
    %v2355 = vshrl.u32 %v2262, 16
    %v2357 = vrot.slane %v2355, 4
    %v2358 = vshll.u32 %v2262, 16
    %v2360 = vrot.slane %v2358, 5
    %v2361 = vor.u32 %v2357, %v2360
    %v2362 = vrot.slane %v2361, 4
    %v2364 = vshll.u32 %v2263, 16
    %v2366 = vrot.slane %v2364, 5
    %v2367 = vsel %vm1800, %v2362, %v2366
    %v2369 = vshrl.u32 %v2264, 16
    %v2371 = vrot.slane %v2369, 4
    %v2372 = vshll.u32 %v2264, 16
    %v2374 = vrot.slane %v2372, 5
    %v2375 = vor.u32 %v2371, %v2374
    %v2376 = vrot.slane %v2375, 4
    %v2378 = vshll.u32 %v2265, 16
    %v2380 = vrot.slane %v2378, 5
    %v2381 = vsel %vm1800, %v2376, %v2380
    %v2383 = vshrl.u32 %v2266, 16
    %v2385 = vrot.slane %v2383, 4
    %v2386 = vshll.u32 %v2266, 16
    %v2388 = vrot.slane %v2386, 5
    %v2389 = vor.u32 %v2385, %v2388
    %v2390 = vrot.slane %v2389, 4
    %v2392 = vshll.u32 %v2267, 16
    %v2394 = vrot.slane %v2392, 5
    %v2395 = vsel %vm1800, %v2390, %v2394
    %v2397 = vshrl.u32 %v2268, 16
    %v2399 = vrot.slane %v2397, 4
    %v2400 = vshll.u32 %v2268, 16
    %v2402 = vrot.slane %v2400, 5
    %v2403 = vor.u32 %v2399, %v2402
    %v2404 = vrot.slane %v2403, 4
    %v2406 = vshll.u32 %v2269, 16
    %v2408 = vrot.slane %v2406, 5
    %v2409 = vsel %vm1800, %v2404, %v2408
    %v2411 = vshrl.u32 %v2270, 16
    %v2413 = vrot.slane %v2411, 4
    %v2414 = vshll.u32 %v2270, 16
    %v2416 = vrot.slane %v2414, 5
    %v2417 = vor.u32 %v2413, %v2416
    %v2418 = vrot.slane %v2417, 4
    %v2420 = vshll.u32 %v2271, 16
    %v2422 = vrot.slane %v2420, 5
    %v2423 = vsel %vm1800, %v2418, %v2422
    %v2425 = vshrl.u32 %v2272, 16
    %v2427 = vrot.slane %v2425, 4
    %v2428 = vshll.u32 %v2272, 16
    %v2430 = vrot.slane %v2428, 5
    %v2431 = vor.u32 %v2427, %v2430
    %v2432 = vrot.slane %v2431, 4
    %v2434 = vshll.u32 %v2273, 16
    %v2436 = vrot.slane %v2434, 5
    %v2437 = vsel %vm1800, %v2432, %v2436
    %v2439 = vshrl.u32 %v2274, 16
    %v2441 = vrot.slane %v2439, 4
    %v2442 = vshll.u32 %v2274, 16
    %v2444 = vrot.slane %v2442, 5
    %v2445 = vor.u32 %v2441, %v2444
    %v2446 = vrot.slane %v2445, 4
    %v2448 = vshll.u32 %v2275, 16
    %v2450 = vrot.slane %v2448, 5
    %v2451 = vsel %vm1800, %v2446, %v2450
    %v2453 = vshrl.u32 %v2276, 16
    %v2455 = vrot.slane %v2453, 4
    %v2456 = vshll.u32 %v2276, 16
    %v2458 = vrot.slane %v2456, 5
    %v2459 = vor.u32 %v2455, %v2458
    %v2460 = vrot.slane %v2459, 4
    %v2462 = vshll.u32 %v2277, 16
    %v2464 = vrot.slane %v2462, 5
    %v2465 = vsel %vm1800, %v2460, %v2464
    %v2467 = vshrl.u32 %v2278, 16
    %v2469 = vrot.slane %v2467, 4
    %v2470 = vshll.u32 %v2278, 16
    %v2472 = vrot.slane %v2470, 5
    %v2473 = vor.u32 %v2469, %v2472
    %v2474 = vrot.slane %v2473, 4
    %v2476 = vshll.u32 %v2279, 16
    %v2478 = vrot.slane %v2476, 5
    %v2479 = vsel %vm1800, %v2474, %v2478
    %v2481 = vshrl.u32 %v2280, 16
    %v2483 = vrot.slane %v2481, 4
    %v2484 = vshll.u32 %v2280, 16
    %v2486 = vrot.slane %v2484, 5
    %v2487 = vor.u32 %v2483, %v2486
    %v2488 = vrot.slane %v2487, 4
    %v2490 = vshll.u32 %v2281, 16
    %v2492 = vrot.slane %v2490, 5
    %v2493 = vsel %vm1800, %v2488, %v2492
    %v2495 = vshrl.u32 %v2282, 16
    %v2497 = vrot.slane %v2495, 4
    %v2498 = vshll.u32 %v2282, 16
    %v2500 = vrot.slane %v2498, 5
    %v2501 = vor.u32 %v2497, %v2500
    %v2502 = vrot.slane %v2501, 4
    %v2504 = vshll.u32 %v2283, 16
    %v2506 = vrot.slane %v2504, 5
    %v2507 = vsel %vm1800, %v2502, %v2506
    %2524 = vst [vmem:[#allocation3 + $0x10] sm:$0xf] %v2297
    %2525 = vst [vmem:[#allocation3 + $0x34] sm:$0xf] %v2311
    %2526 = vst [vmem:[#allocation3 + $0x58] sm:$0xf] %v2325
    %2527 = vst [vmem:[#allocation3 + $0x7c] sm:$0xf] %v2339
    %2528 = vst [vmem:[#allocation3 + $0xa0] sm:$0xf] %v2353
    %2529 = vst [vmem:[#allocation3 + $0xc4] sm:$0xf] %v2367
    %2530 = vst [vmem:[#allocation3 + $0xe8] sm:$0xf] %v2381
    %2531 = vst [vmem:[#allocation3 + $0x10c] sm:$0xf] %v2395
    %2532 = vst [vmem:[#allocation3 + $0x130] sm:$0xf] %v2409
    %2533 = vst [vmem:[#allocation3 + $0x154] sm:$0xf] %v2423
    %2534 = vst [vmem:[#allocation3 + $0x178] sm:$0xf] %v2437
    %2535 = vst [vmem:[#allocation3 + $0x19c] sm:$0xf] %v2451
    %2536 = vst [vmem:[#allocation3 + $0x1c0] sm:$0xf] %v2465
    %2537 = vst [vmem:[#allocation3 + $0x1e4] sm:$0xf] %v2479
    %2538 = vst [vmem:[#allocation3 + $0x208] sm:$0xf] %v2493
    %2539 = vst [vmem:[#allocation3 + $0x22c] sm:$0xf] %v2507
    %v2540 = vld [vmem:[%s1631] sm:$0xe]
    %v2541 = vld [vmem:[%s1631 + $0x4] sm:$0x1]
    %v2542 = vld [vmem:[%s1631 + $0x8] sm:$0xe]
    %v2543 = vld [vmem:[%s1631 + $0xc] sm:$0x1]
    %v2544 = vld [vmem:[%s1631 + $0x10] sm:$0xe]
    %v2545 = vld [vmem:[%s1631 + $0x14] sm:$0x1]
    %v2546 = vld [vmem:[%s1631 + $0x18] sm:$0xe]
    %v2547 = vld [vmem:[%s1631 + $0x1c] sm:$0x1]
    %v2548 = vld [vmem:[%s1631 + $0x20] sm:$0xe]
    %v2549 = vld [vmem:[%s1631 + $0x24] sm:$0x1]
    %v2550 = vld [vmem:[%s1631 + $0x28] sm:$0xe]
    %v2551 = vld [vmem:[%s1631 + $0x2c] sm:$0x1]
    %v2552 = vld [vmem:[%s1631 + $0x30] sm:$0xe]
    %v2553 = vld [vmem:[%s1631 + $0x34] sm:$0x1]
    %v2554 = vld [vmem:[%s1631 + $0x38] sm:$0xe]
    %v2555 = vld [vmem:[%s1631 + $0x3c] sm:$0x1]
    %v2556 = vld [vmem:[%s1631 + $0x50] sm:$0xe]
    %v2557 = vld [vmem:[%s1631 + $0x54] sm:$0x1]
    %v2558 = vld [vmem:[%s1631 + $0x58] sm:$0xe]
    %v2559 = vld [vmem:[%s1631 + $0x5c] sm:$0x1]
    %v2560 = vld [vmem:[%s1631 + $0x60] sm:$0xe]
    %v2561 = vld [vmem:[%s1631 + $0x64] sm:$0x1]
    %v2562 = vld [vmem:[%s1631 + $0x68] sm:$0xe]
    %v2563 = vld [vmem:[%s1631 + $0x6c] sm:$0x1]
    %v2564 = vld [vmem:[%s1631 + $0x70] sm:$0xe]
    %v2565 = vld [vmem:[%s1631 + $0x74] sm:$0x1]
    %v2566 = vld [vmem:[%s1631 + $0x78] sm:$0xe]
    %v2567 = vld [vmem:[%s1631 + $0x7c] sm:$0x1]
    %v2568 = vld [vmem:[%s1631 + $0x80] sm:$0xe]
    %v2569 = vld [vmem:[%s1631 + $0x84] sm:$0x1]
    %v2570 = vld [vmem:[%s1631 + $0x88] sm:$0xe]
    %v2571 = vld [vmem:[%s1631 + $0x8c] sm:$0x1]
    %v2604 = vrot.slane %v2540, 5
    %v2605 = vrot.slane %v2604, 4
    %v2606 = vrot.slane %v2541, 5
    %v2607 = vsel %vm2123, %v2605, %v2606
    %v2608 = vrot.slane %v2542, 5
    %v2609 = vrot.slane %v2608, 4
    %v2610 = vrot.slane %v2543, 5
    %v2611 = vsel %vm2123, %v2609, %v2610
    %v2612 = vrot.slane %v2544, 5
    %v2613 = vrot.slane %v2612, 4
    %v2614 = vrot.slane %v2545, 5
    %v2615 = vsel %vm2123, %v2613, %v2614
    %v2616 = vrot.slane %v2546, 5
    %v2617 = vrot.slane %v2616, 4
    %v2618 = vrot.slane %v2547, 5
    %v2619 = vsel %vm2123, %v2617, %v2618
    %v2620 = vrot.slane %v2548, 5
    %v2621 = vrot.slane %v2620, 4
    %v2622 = vrot.slane %v2549, 5
    %v2623 = vsel %vm2123, %v2621, %v2622
    %v2624 = vrot.slane %v2550, 5
    %v2625 = vrot.slane %v2624, 4
    %v2626 = vrot.slane %v2551, 5
    %v2627 = vsel %vm2123, %v2625, %v2626
    %v2628 = vrot.slane %v2552, 5
    %v2629 = vrot.slane %v2628, 4
    %v2630 = vrot.slane %v2553, 5
    %v2631 = vsel %vm2123, %v2629, %v2630
    %v2632 = vrot.slane %v2554, 5
    %v2633 = vrot.slane %v2632, 4
    %v2634 = vrot.slane %v2555, 5
    %v2635 = vsel %vm2123, %v2633, %v2634
    %v2636 = vrot.slane %v2556, 5
    %v2637 = vrot.slane %v2636, 4
    %v2638 = vrot.slane %v2557, 5
    %v2639 = vsel %vm2123, %v2637, %v2638
    %v2640 = vrot.slane %v2558, 5
    %v2641 = vrot.slane %v2640, 4
    %v2642 = vrot.slane %v2559, 5
    %v2643 = vsel %vm2123, %v2641, %v2642
    %v2644 = vrot.slane %v2560, 5
    %v2645 = vrot.slane %v2644, 4
    %v2646 = vrot.slane %v2561, 5
    %v2647 = vsel %vm2123, %v2645, %v2646
    %v2648 = vrot.slane %v2562, 5
    %v2649 = vrot.slane %v2648, 4
    %v2650 = vrot.slane %v2563, 5
    %v2651 = vsel %vm2123, %v2649, %v2650
    %v2652 = vrot.slane %v2564, 5
    %v2653 = vrot.slane %v2652, 4
    %v2654 = vrot.slane %v2565, 5
    %v2655 = vsel %vm2123, %v2653, %v2654
    %v2656 = vrot.slane %v2566, 5
    %v2657 = vrot.slane %v2656, 4
    %v2658 = vrot.slane %v2567, 5
    %v2659 = vsel %vm2123, %v2657, %v2658
    %v2660 = vrot.slane %v2568, 5
    %v2661 = vrot.slane %v2660, 4
    %v2662 = vrot.slane %v2569, 5
    %v2663 = vsel %vm2123, %v2661, %v2662
    %v2664 = vrot.slane %v2570, 5
    %v2665 = vrot.slane %v2664, 4
    %v2666 = vrot.slane %v2571, 5
    %v2667 = vsel %vm2123, %v2665, %v2666
    %2684 = vst [vmem:[#allocation3 + $0x14] sm:$0xf] %v2607
    %2685 = vst [vmem:[#allocation3 + $0x38] sm:$0xf] %v2611
    %2686 = vst [vmem:[#allocation3 + $0x5c] sm:$0xf] %v2615
    %2687 = vst [vmem:[#allocation3 + $0x80] sm:$0xf] %v2619
    %2688 = vst [vmem:[#allocation3 + $0xa4] sm:$0xf] %v2623
    %2689 = vst [vmem:[#allocation3 + $0xc8] sm:$0xf] %v2627
    %2690 = vst [vmem:[#allocation3 + $0xec] sm:$0xf] %v2631
    %2691 = vst [vmem:[#allocation3 + $0x110] sm:$0xf] %v2635
    %2692 = vst [vmem:[#allocation3 + $0x134] sm:$0xf] %v2639
    %2693 = vst [vmem:[#allocation3 + $0x158] sm:$0xf] %v2643
    %2694 = vst [vmem:[#allocation3 + $0x17c] sm:$0xf] %v2647
    %2695 = vst [vmem:[#allocation3 + $0x1a0] sm:$0xf] %v2651
    %2696 = vst [vmem:[#allocation3 + $0x1c4] sm:$0xf] %v2655
    %2697 = vst [vmem:[#allocation3 + $0x1e8] sm:$0xf] %v2659
    %2698 = vst [vmem:[#allocation3 + $0x20c] sm:$0xf] %v2663
    %2699 = vst [vmem:[#allocation3 + $0x230] sm:$0xf] %v2667
    %s2700 = scalar_lea.vmem [#allocation2], 16
    %v2701 = vld [vmem:[%s2700] sm:$0xf]
    %v2702 = vld [vmem:[%s2700 + $0x8] sm:$0xf]
    %v2703 = vld [vmem:[%s2700 + $0x10] sm:$0xf]
    %v2704 = vld [vmem:[%s2700 + $0x18] sm:$0xf]
    %v2705 = vld [vmem:[%s2700 + $0x20] sm:$0xf]
    %v2706 = vld [vmem:[%s2700 + $0x28] sm:$0xf]
    %v2707 = vld [vmem:[%s2700 + $0x30] sm:$0xf]
    %v2708 = vld [vmem:[%s2700 + $0x38] sm:$0xf]
    %v2709 = vld [vmem:[%s2700 + $0x50] sm:$0xf]
    %v2710 = vld [vmem:[%s2700 + $0x58] sm:$0xf]
    %v2711 = vld [vmem:[%s2700 + $0x60] sm:$0xf]
    %v2712 = vld [vmem:[%s2700 + $0x68] sm:$0xf]
    %v2713 = vld [vmem:[%s2700 + $0x70] sm:$0xf]
    %v2714 = vld [vmem:[%s2700 + $0x78] sm:$0xf]
    %v2715 = vld [vmem:[%s2700 + $0x80] sm:$0xf]
    %v2716 = vld [vmem:[%s2700 + $0x88] sm:$0xf]
    %2717 = vst [vmem:[#allocation3 + $0x18] sm:$0xf] %v2701
    %2718 = vst [vmem:[#allocation3 + $0x3c] sm:$0xf] %v2702
    %2719 = vst [vmem:[#allocation3 + $0x60] sm:$0xf] %v2703
    %2720 = vst [vmem:[#allocation3 + $0x84] sm:$0xf] %v2704
    %2721 = vst [vmem:[#allocation3 + $0xa8] sm:$0xf] %v2705
    %2722 = vst [vmem:[#allocation3 + $0xcc] sm:$0xf] %v2706
    %2723 = vst [vmem:[#allocation3 + $0xf0] sm:$0xf] %v2707
    %2724 = vst [vmem:[#allocation3 + $0x114] sm:$0xf] %v2708
    %2725 = vst [vmem:[#allocation3 + $0x138] sm:$0xf] %v2709
    %2726 = vst [vmem:[#allocation3 + $0x15c] sm:$0xf] %v2710
    %2727 = vst [vmem:[#allocation3 + $0x180] sm:$0xf] %v2711
    %2728 = vst [vmem:[#allocation3 + $0x1a4] sm:$0xf] %v2712
    %2729 = vst [vmem:[#allocation3 + $0x1c8] sm:$0xf] %v2713
    %2730 = vst [vmem:[#allocation3 + $0x1ec] sm:$0xf] %v2714
    %2731 = vst [vmem:[#allocation3 + $0x210] sm:$0xf] %v2715
    %2732 = vst [vmem:[#allocation3 + $0x234] sm:$0xf] %v2716
    %v2733 = vld [vmem:[%s2700] sm:$0xf]
    %v2734 = vld [vmem:[%s2700 + $0x4] sm:$0x1]
    %v2735 = vld [vmem:[%s2700 + $0x8] sm:$0xf]
    %v2736 = vld [vmem:[%s2700 + $0xc] sm:$0x1]
    %v2737 = vld [vmem:[%s2700 + $0x10] sm:$0xf]
    %v2738 = vld [vmem:[%s2700 + $0x14] sm:$0x1]
    %v2739 = vld [vmem:[%s2700 + $0x18] sm:$0xf]
    %v2740 = vld [vmem:[%s2700 + $0x1c] sm:$0x1]
    %v2741 = vld [vmem:[%s2700 + $0x20] sm:$0xf]
    %v2742 = vld [vmem:[%s2700 + $0x24] sm:$0x1]
    %v2743 = vld [vmem:[%s2700 + $0x28] sm:$0xf]
    %v2744 = vld [vmem:[%s2700 + $0x2c] sm:$0x1]
    %v2745 = vld [vmem:[%s2700 + $0x30] sm:$0xf]
    %v2746 = vld [vmem:[%s2700 + $0x34] sm:$0x1]
    %v2747 = vld [vmem:[%s2700 + $0x38] sm:$0xf]
    %v2748 = vld [vmem:[%s2700 + $0x3c] sm:$0x1]
    %v2749 = vld [vmem:[%s2700 + $0x50] sm:$0xf]
    %v2750 = vld [vmem:[%s2700 + $0x54] sm:$0x1]
    %v2751 = vld [vmem:[%s2700 + $0x58] sm:$0xf]
    %v2752 = vld [vmem:[%s2700 + $0x5c] sm:$0x1]
    %v2753 = vld [vmem:[%s2700 + $0x60] sm:$0xf]
    %v2754 = vld [vmem:[%s2700 + $0x64] sm:$0x1]
    %v2755 = vld [vmem:[%s2700 + $0x68] sm:$0xf]
    %v2756 = vld [vmem:[%s2700 + $0x6c] sm:$0x1]
    %v2757 = vld [vmem:[%s2700 + $0x70] sm:$0xf]
    %v2758 = vld [vmem:[%s2700 + $0x74] sm:$0x1]
    %v2759 = vld [vmem:[%s2700 + $0x78] sm:$0xf]
    %v2760 = vld [vmem:[%s2700 + $0x7c] sm:$0x1]
    %v2761 = vld [vmem:[%s2700 + $0x80] sm:$0xf]
    %v2762 = vld [vmem:[%s2700 + $0x84] sm:$0x1]
    %v2763 = vld [vmem:[%s2700 + $0x88] sm:$0xf]
    %v2764 = vld [vmem:[%s2700 + $0x8c] sm:$0x1]
    %v2766 = vshrl.u32 %v2733, 16
    %v2768 = vrot.slane %v2766, 4
    %v2769 = vshll.u32 %v2733, 16
    %v2771 = vrot.slane %v2769, 5
    %v2772 = vor.u32 %v2768, %v2771
    %v2773 = vrot.slane %v2772, 4
    %v2775 = vshll.u32 %v2734, 16
    %v2777 = vrot.slane %v2775, 5
    %v2778 = vsel %vm1800, %v2773, %v2777
    %v2780 = vshrl.u32 %v2735, 16
    %v2782 = vrot.slane %v2780, 4
    %v2783 = vshll.u32 %v2735, 16
    %v2785 = vrot.slane %v2783, 5
    %v2786 = vor.u32 %v2782, %v2785
    %v2787 = vrot.slane %v2786, 4
    %v2789 = vshll.u32 %v2736, 16
    %v2791 = vrot.slane %v2789, 5
    %v2792 = vsel %vm1800, %v2787, %v2791
    %v2794 = vshrl.u32 %v2737, 16
    %v2796 = vrot.slane %v2794, 4
    %v2797 = vshll.u32 %v2737, 16
    %v2799 = vrot.slane %v2797, 5
    %v2800 = vor.u32 %v2796, %v2799
    %v2801 = vrot.slane %v2800, 4
    %v2803 = vshll.u32 %v2738, 16
    %v2805 = vrot.slane %v2803, 5
    %v2806 = vsel %vm1800, %v2801, %v2805
    %v2808 = vshrl.u32 %v2739, 16
    %v2810 = vrot.slane %v2808, 4
    %v2811 = vshll.u32 %v2739, 16
    %v2813 = vrot.slane %v2811, 5
    %v2814 = vor.u32 %v2810, %v2813
    %v2815 = vrot.slane %v2814, 4
    %v2817 = vshll.u32 %v2740, 16
    %v2819 = vrot.slane %v2817, 5
    %v2820 = vsel %vm1800, %v2815, %v2819
    %v2822 = vshrl.u32 %v2741, 16
    %v2824 = vrot.slane %v2822, 4
    %v2825 = vshll.u32 %v2741, 16
    %v2827 = vrot.slane %v2825, 5
    %v2828 = vor.u32 %v2824, %v2827
    %v2829 = vrot.slane %v2828, 4
    %v2831 = vshll.u32 %v2742, 16
    %v2833 = vrot.slane %v2831, 5
    %v2834 = vsel %vm1800, %v2829, %v2833
    %v2836 = vshrl.u32 %v2743, 16
    %v2838 = vrot.slane %v2836, 4
    %v2839 = vshll.u32 %v2743, 16
    %v2841 = vrot.slane %v2839, 5
    %v2842 = vor.u32 %v2838, %v2841
    %v2843 = vrot.slane %v2842, 4
    %v2845 = vshll.u32 %v2744, 16
    %v2847 = vrot.slane %v2845, 5
    %v2848 = vsel %vm1800, %v2843, %v2847
    %v2850 = vshrl.u32 %v2745, 16
    %v2852 = vrot.slane %v2850, 4
    %v2853 = vshll.u32 %v2745, 16
    %v2855 = vrot.slane %v2853, 5
    %v2856 = vor.u32 %v2852, %v2855
    %v2857 = vrot.slane %v2856, 4
    %v2859 = vshll.u32 %v2746, 16
    %v2861 = vrot.slane %v2859, 5
    %v2862 = vsel %vm1800, %v2857, %v2861
    %v2864 = vshrl.u32 %v2747, 16
    %v2866 = vrot.slane %v2864, 4
    %v2867 = vshll.u32 %v2747, 16
    %v2869 = vrot.slane %v2867, 5
    %v2870 = vor.u32 %v2866, %v2869
    %v2871 = vrot.slane %v2870, 4
    %v2873 = vshll.u32 %v2748, 16
    %v2875 = vrot.slane %v2873, 5
    %v2876 = vsel %vm1800, %v2871, %v2875
    %v2878 = vshrl.u32 %v2749, 16
    %v2880 = vrot.slane %v2878, 4
    %v2881 = vshll.u32 %v2749, 16
    %v2883 = vrot.slane %v2881, 5
    %v2884 = vor.u32 %v2880, %v2883
    %v2885 = vrot.slane %v2884, 4
    %v2887 = vshll.u32 %v2750, 16
    %v2889 = vrot.slane %v2887, 5
    %v2890 = vsel %vm1800, %v2885, %v2889
    %v2892 = vshrl.u32 %v2751, 16
    %v2894 = vrot.slane %v2892, 4
    %v2895 = vshll.u32 %v2751, 16
    %v2897 = vrot.slane %v2895, 5
    %v2898 = vor.u32 %v2894, %v2897
    %v2899 = vrot.slane %v2898, 4
    %v2901 = vshll.u32 %v2752, 16
    %v2903 = vrot.slane %v2901, 5
    %v2904 = vsel %vm1800, %v2899, %v2903
    %v2906 = vshrl.u32 %v2753, 16
    %v2908 = vrot.slane %v2906, 4
    %v2909 = vshll.u32 %v2753, 16
    %v2911 = vrot.slane %v2909, 5
    %v2912 = vor.u32 %v2908, %v2911
    %v2913 = vrot.slane %v2912, 4
    %v2915 = vshll.u32 %v2754, 16
    %v2917 = vrot.slane %v2915, 5
    %v2918 = vsel %vm1800, %v2913, %v2917
    %v2920 = vshrl.u32 %v2755, 16
    %v2922 = vrot.slane %v2920, 4
    %v2923 = vshll.u32 %v2755, 16
    %v2925 = vrot.slane %v2923, 5
    %v2926 = vor.u32 %v2922, %v2925
    %v2927 = vrot.slane %v2926, 4
    %v2929 = vshll.u32 %v2756, 16
    %v2931 = vrot.slane %v2929, 5
    %v2932 = vsel %vm1800, %v2927, %v2931
    %v2934 = vshrl.u32 %v2757, 16
    %v2936 = vrot.slane %v2934, 4
    %v2937 = vshll.u32 %v2757, 16
    %v2939 = vrot.slane %v2937, 5
    %v2940 = vor.u32 %v2936, %v2939
    %v2941 = vrot.slane %v2940, 4
    %v2943 = vshll.u32 %v2758, 16
    %v2945 = vrot.slane %v2943, 5
    %v2946 = vsel %vm1800, %v2941, %v2945
    %v2948 = vshrl.u32 %v2759, 16
    %v2950 = vrot.slane %v2948, 4
    %v2951 = vshll.u32 %v2759, 16
    %v2953 = vrot.slane %v2951, 5
    %v2954 = vor.u32 %v2950, %v2953
    %v2955 = vrot.slane %v2954, 4
    %v2957 = vshll.u32 %v2760, 16
    %v2959 = vrot.slane %v2957, 5
    %v2960 = vsel %vm1800, %v2955, %v2959
    %v2962 = vshrl.u32 %v2761, 16
    %v2964 = vrot.slane %v2962, 4
    %v2965 = vshll.u32 %v2761, 16
    %v2967 = vrot.slane %v2965, 5
    %v2968 = vor.u32 %v2964, %v2967
    %v2969 = vrot.slane %v2968, 4
    %v2971 = vshll.u32 %v2762, 16
    %v2973 = vrot.slane %v2971, 5
    %v2974 = vsel %vm1800, %v2969, %v2973
    %v2976 = vshrl.u32 %v2763, 16
    %v2978 = vrot.slane %v2976, 4
    %v2979 = vshll.u32 %v2763, 16
    %v2981 = vrot.slane %v2979, 5
    %v2982 = vor.u32 %v2978, %v2981
    %v2983 = vrot.slane %v2982, 4
    %v2985 = vshll.u32 %v2764, 16
    %v2987 = vrot.slane %v2985, 5
    %v2988 = vsel %vm1800, %v2983, %v2987
    %3005 = vst [vmem:[#allocation3 + $0x1c] sm:$0xf] %v2778
    %3006 = vst [vmem:[#allocation3 + $0x40] sm:$0xf] %v2792
    %3007 = vst [vmem:[#allocation3 + $0x64] sm:$0xf] %v2806
    %3008 = vst [vmem:[#allocation3 + $0x88] sm:$0xf] %v2820
    %3009 = vst [vmem:[#allocation3 + $0xac] sm:$0xf] %v2834
    %3010 = vst [vmem:[#allocation3 + $0xd0] sm:$0xf] %v2848
    %3011 = vst [vmem:[#allocation3 + $0xf4] sm:$0xf] %v2862
    %3012 = vst [vmem:[#allocation3 + $0x118] sm:$0xf] %v2876
    %3013 = vst [vmem:[#allocation3 + $0x13c] sm:$0xf] %v2890
    %3014 = vst [vmem:[#allocation3 + $0x160] sm:$0xf] %v2904
    %3015 = vst [vmem:[#allocation3 + $0x184] sm:$0xf] %v2918
    %3016 = vst [vmem:[#allocation3 + $0x1a8] sm:$0xf] %v2932
    %3017 = vst [vmem:[#allocation3 + $0x1cc] sm:$0xf] %v2946
    %3018 = vst [vmem:[#allocation3 + $0x1f0] sm:$0xf] %v2960
    %3019 = vst [vmem:[#allocation3 + $0x214] sm:$0xf] %v2974
    %3020 = vst [vmem:[#allocation3 + $0x238] sm:$0xf] %v2988
    %v3021 = vld [vmem:[%s2700] sm:$0xe]
    %v3022 = vld [vmem:[%s2700 + $0x4] sm:$0x1]
    %v3023 = vld [vmem:[%s2700 + $0x8] sm:$0xe]
    %v3024 = vld [vmem:[%s2700 + $0xc] sm:$0x1]
    %v3025 = vld [vmem:[%s2700 + $0x10] sm:$0xe]
    %v3026 = vld [vmem:[%s2700 + $0x14] sm:$0x1]
    %v3027 = vld [vmem:[%s2700 + $0x18] sm:$0xe]
    %v3028 = vld [vmem:[%s2700 + $0x1c] sm:$0x1]
    %v3029 = vld [vmem:[%s2700 + $0x20] sm:$0xe]
    %v3030 = vld [vmem:[%s2700 + $0x24] sm:$0x1]
    %v3031 = vld [vmem:[%s2700 + $0x28] sm:$0xe]
    %v3032 = vld [vmem:[%s2700 + $0x2c] sm:$0x1]
    %v3033 = vld [vmem:[%s2700 + $0x30] sm:$0xe]
    %v3034 = vld [vmem:[%s2700 + $0x34] sm:$0x1]
    %v3035 = vld [vmem:[%s2700 + $0x38] sm:$0xe]
    %v3036 = vld [vmem:[%s2700 + $0x3c] sm:$0x1]
    %v3037 = vld [vmem:[%s2700 + $0x50] sm:$0xe]
    %v3038 = vld [vmem:[%s2700 + $0x54] sm:$0x1]
    %v3039 = vld [vmem:[%s2700 + $0x58] sm:$0xe]
    %v3040 = vld [vmem:[%s2700 + $0x5c] sm:$0x1]
    %v3041 = vld [vmem:[%s2700 + $0x60] sm:$0xe]
    %v3042 = vld [vmem:[%s2700 + $0x64] sm:$0x1]
    %v3043 = vld [vmem:[%s2700 + $0x68] sm:$0xe]
    %v3044 = vld [vmem:[%s2700 + $0x6c] sm:$0x1]
    %v3045 = vld [vmem:[%s2700 + $0x70] sm:$0xe]
    %v3046 = vld [vmem:[%s2700 + $0x74] sm:$0x1]
    %v3047 = vld [vmem:[%s2700 + $0x78] sm:$0xe]
    %v3048 = vld [vmem:[%s2700 + $0x7c] sm:$0x1]
    %v3049 = vld [vmem:[%s2700 + $0x80] sm:$0xe]
    %v3050 = vld [vmem:[%s2700 + $0x84] sm:$0x1]
    %v3051 = vld [vmem:[%s2700 + $0x88] sm:$0xe]
    %v3052 = vld [vmem:[%s2700 + $0x8c] sm:$0x1]
    %v3085 = vrot.slane %v3021, 5
    %v3086 = vrot.slane %v3085, 4
    %v3087 = vrot.slane %v3022, 5
    %v3088 = vsel %vm2123, %v3086, %v3087
    %v3089 = vrot.slane %v3023, 5
    %v3090 = vrot.slane %v3089, 4
    %v3091 = vrot.slane %v3024, 5
    %v3092 = vsel %vm2123, %v3090, %v3091
    %v3093 = vrot.slane %v3025, 5
    %v3094 = vrot.slane %v3093, 4
    %v3095 = vrot.slane %v3026, 5
    %v3096 = vsel %vm2123, %v3094, %v3095
    %v3097 = vrot.slane %v3027, 5
    %v3098 = vrot.slane %v3097, 4
    %v3099 = vrot.slane %v3028, 5
    %v3100 = vsel %vm2123, %v3098, %v3099
    %v3101 = vrot.slane %v3029, 5
    %v3102 = vrot.slane %v3101, 4
    %v3103 = vrot.slane %v3030, 5
    %v3104 = vsel %vm2123, %v3102, %v3103
    %v3105 = vrot.slane %v3031, 5
    %v3106 = vrot.slane %v3105, 4
    %v3107 = vrot.slane %v3032, 5
    %v3108 = vsel %vm2123, %v3106, %v3107
    %v3109 = vrot.slane %v3033, 5
    %v3110 = vrot.slane %v3109, 4
    %v3111 = vrot.slane %v3034, 5
    %v3112 = vsel %vm2123, %v3110, %v3111
    %v3113 = vrot.slane %v3035, 5
    %v3114 = vrot.slane %v3113, 4
    %v3115 = vrot.slane %v3036, 5
    %v3116 = vsel %vm2123, %v3114, %v3115
    %v3117 = vrot.slane %v3037, 5
    %v3118 = vrot.slane %v3117, 4
    %v3119 = vrot.slane %v3038, 5
    %v3120 = vsel %vm2123, %v3118, %v3119
    %v3121 = vrot.slane %v3039, 5
    %v3122 = vrot.slane %v3121, 4
    %v3123 = vrot.slane %v3040, 5
    %v3124 = vsel %vm2123, %v3122, %v3123
    %v3125 = vrot.slane %v3041, 5
    %v3126 = vrot.slane %v3125, 4
    %v3127 = vrot.slane %v3042, 5
    %v3128 = vsel %vm2123, %v3126, %v3127
    %v3129 = vrot.slane %v3043, 5
    %v3130 = vrot.slane %v3129, 4
    %v3131 = vrot.slane %v3044, 5
    %v3132 = vsel %vm2123, %v3130, %v3131
    %v3133 = vrot.slane %v3045, 5
    %v3134 = vrot.slane %v3133, 4
    %v3135 = vrot.slane %v3046, 5
    %v3136 = vsel %vm2123, %v3134, %v3135
    %v3137 = vrot.slane %v3047, 5
    %v3138 = vrot.slane %v3137, 4
    %v3139 = vrot.slane %v3048, 5
    %v3140 = vsel %vm2123, %v3138, %v3139
    %v3141 = vrot.slane %v3049, 5
    %v3142 = vrot.slane %v3141, 4
    %v3143 = vrot.slane %v3050, 5
    %v3144 = vsel %vm2123, %v3142, %v3143
    %v3145 = vrot.slane %v3051, 5
    %v3146 = vrot.slane %v3145, 4
    %v3147 = vrot.slane %v3052, 5
    %v3148 = vsel %vm2123, %v3146, %v3147
    %3165 = vst [vmem:[#allocation3 + $0x20] sm:$0xf] %v3088
    %3166 = vst [vmem:[#allocation3 + $0x44] sm:$0xf] %v3092
    %3167 = vst [vmem:[#allocation3 + $0x68] sm:$0xf] %v3096
    %3168 = vst [vmem:[#allocation3 + $0x8c] sm:$0xf] %v3100
    %3169 = vst [vmem:[#allocation3 + $0xb0] sm:$0xf] %v3104
    %3170 = vst [vmem:[#allocation3 + $0xd4] sm:$0xf] %v3108
    %3171 = vst [vmem:[#allocation3 + $0xf8] sm:$0xf] %v3112
    %3172 = vst [vmem:[#allocation3 + $0x11c] sm:$0xf] %v3116
    %3173 = vst [vmem:[#allocation3 + $0x140] sm:$0xf] %v3120
    %3174 = vst [vmem:[#allocation3 + $0x164] sm:$0xf] %v3124
    %3175 = vst [vmem:[#allocation3 + $0x188] sm:$0xf] %v3128
    %3176 = vst [vmem:[#allocation3 + $0x1ac] sm:$0xf] %v3132
    %3177 = vst [vmem:[#allocation3 + $0x1d0] sm:$0xf] %v3136
    %3178 = vst [vmem:[#allocation3 + $0x1f4] sm:$0xf] %v3140
    %3179 = vst [vmem:[#allocation3 + $0x218] sm:$0xf] %v3144
    %3180 = vst [vmem:[#allocation3 + $0x23c] sm:$0xf] %v3148
    %v3181 = vld [vmem:[#allocation3] sm:$0xff]
    %v3182 = vld [vmem:[#allocation3 + $0x8] sm:$0xff]
    %v3183 = vld [vmem:[#allocation3 + $0x10] sm:$0xff]
    %v3184 = vld [vmem:[#allocation3 + $0x18] sm:$0xff]
    %v3185 = vld [vmem:[#allocation3 + $0x20] sm:$0xf]
    %v3186 = vld [vmem:[#allocation3 + $0x24] sm:$0xff]
    %v3187 = vld [vmem:[#allocation3 + $0x2c] sm:$0xff]
    %v3188 = vld [vmem:[#allocation3 + $0x34] sm:$0xff]
    %v3189 = vld [vmem:[#allocation3 + $0x3c] sm:$0xff]
    %v3190 = vld [vmem:[#allocation3 + $0x44] sm:$0xf]
    %v3191 = vld [vmem:[#allocation3 + $0x48] sm:$0xff]
    %v3192 = vld [vmem:[#allocation3 + $0x50] sm:$0xff]
    %v3193 = vld [vmem:[#allocation3 + $0x58] sm:$0xff]
    %v3194 = vld [vmem:[#allocation3 + $0x60] sm:$0xff]
    %v3195 = vld [vmem:[#allocation3 + $0x68] sm:$0xf]
    %v3196 = vld [vmem:[#allocation3 + $0x6c] sm:$0xff]
    %v3197 = vld [vmem:[#allocation3 + $0x74] sm:$0xff]
    %v3198 = vld [vmem:[#allocation3 + $0x7c] sm:$0xff]
    %v3199 = vld [vmem:[#allocation3 + $0x84] sm:$0xff]
    %v3200 = vld [vmem:[#allocation3 + $0x8c] sm:$0xf]
    %v3201 = vld [vmem:[#allocation3 + $0x90] sm:$0xff]
    %v3202 = vld [vmem:[#allocation3 + $0x98] sm:$0xff]
    %v3203 = vld [vmem:[#allocation3 + $0xa0] sm:$0xff]
    %v3204 = vld [vmem:[#allocation3 + $0xa8] sm:$0xff]
    %v3205 = vld [vmem:[#allocation3 + $0xb0] sm:$0xf]
    %v3206 = vld [vmem:[#allocation3 + $0xb4] sm:$0xff]
    %v3207 = vld [vmem:[#allocation3 + $0xbc] sm:$0xff]
    %v3208 = vld [vmem:[#allocation3 + $0xc4] sm:$0xff]
    %v3209 = vld [vmem:[#allocation3 + $0xcc] sm:$0xff]
    %v3210 = vld [vmem:[#allocation3 + $0xd4] sm:$0xf]
    %v3211 = vld [vmem:[#allocation3 + $0xd8] sm:$0xff]
    %v3212 = vld [vmem:[#allocation3 + $0xe0] sm:$0xff]
    %v3213 = vld [vmem:[#allocation3 + $0xe8] sm:$0xff]
    %v3214 = vld [vmem:[#allocation3 + $0xf0] sm:$0xff]
    %v3215 = vld [vmem:[#allocation3 + $0xf8] sm:$0xf]
    %v3216 = vld [vmem:[#allocation3 + $0xfc] sm:$0xff]
    %v3217 = vld [vmem:[#allocation3 + $0x104] sm:$0xff]
    %v3218 = vld [vmem:[#allocation3 + $0x10c] sm:$0xff]
    %v3219 = vld [vmem:[#allocation3 + $0x114] sm:$0xff]
    %v3220 = vld [vmem:[#allocation3 + $0x11c] sm:$0xf]
    %v3221 = vld [vmem:[#allocation3 + $0x120] sm:$0xff]
    %v3222 = vld [vmem:[#allocation3 + $0x128] sm:$0xff]
    %v3223 = vld [vmem:[#allocation3 + $0x130] sm:$0xff]
    %v3224 = vld [vmem:[#allocation3 + $0x138] sm:$0xff]
    %v3225 = vld [vmem:[#allocation3 + $0x140] sm:$0xf]
    %v3226 = vld [vmem:[#allocation3 + $0x144] sm:$0xff]
    %v3227 = vld [vmem:[#allocation3 + $0x14c] sm:$0xff]
    %v3228 = vld [vmem:[#allocation3 + $0x154] sm:$0xff]
    %v3229 = vld [vmem:[#allocation3 + $0x15c] sm:$0xff]
    %v3230 = vld [vmem:[#allocation3 + $0x164] sm:$0xf]
    %v3231 = vld [vmem:[#allocation3 + $0x168] sm:$0xff]
    %v3232 = vld [vmem:[#allocation3 + $0x170] sm:$0xff]
    %v3233 = vld [vmem:[#allocation3 + $0x178] sm:$0xff]
    %v3234 = vld [vmem:[#allocation3 + $0x180] sm:$0xff]
    %v3235 = vld [vmem:[#allocation3 + $0x188] sm:$0xf]
    %v3236 = vld [vmem:[#allocation3 + $0x18c] sm:$0xff]
    %v3237 = vld [vmem:[#allocation3 + $0x194] sm:$0xff]
    %v3238 = vld [vmem:[#allocation3 + $0x19c] sm:$0xff]
    %v3239 = vld [vmem:[#allocation3 + $0x1a4] sm:$0xff]
    %v3240 = vld [vmem:[#allocation3 + $0x1ac] sm:$0xf]
    %v3241 = vld [vmem:[#allocation3 + $0x1b0] sm:$0xff]
    %v3242 = vld [vmem:[#allocation3 + $0x1b8] sm:$0xff]
    %v3243 = vld [vmem:[#allocation3 + $0x1c0] sm:$0xff]
    %v3244 = vld [vmem:[#allocation3 + $0x1c8] sm:$0xff]
    %v3245 = vld [vmem:[#allocation3 + $0x1d0] sm:$0xf]
    %v3246 = vld [vmem:[#allocation3 + $0x1d4] sm:$0xff]
    %v3247 = vld [vmem:[#allocation3 + $0x1dc] sm:$0xff]
    %v3248 = vld [vmem:[#allocation3 + $0x1e4] sm:$0xff]
    %v3249 = vld [vmem:[#allocation3 + $0x1ec] sm:$0xff]
    %v3250 = vld [vmem:[#allocation3 + $0x1f4] sm:$0xf]
    %v3251 = vld [vmem:[#allocation3 + $0x1f8] sm:$0xff]
    %v3252 = vld [vmem:[#allocation3 + $0x200] sm:$0xff]
    %v3253 = vld [vmem:[#allocation3 + $0x208] sm:$0xff]
    %v3254 = vld [vmem:[#allocation3 + $0x210] sm:$0xff]
    %v3255 = vld [vmem:[#allocation3 + $0x218] sm:$0xf]
    %v3256 = vld [vmem:[#allocation3 + $0x21c] sm:$0xff]
    %v3257 = vld [vmem:[#allocation3 + $0x224] sm:$0xff]
    %v3258 = vld [vmem:[#allocation3 + $0x22c] sm:$0xff]
    %v3259 = vld [vmem:[#allocation3 + $0x234] sm:$0xff]
    %v3260 = vld [vmem:[#allocation3 + $0x23c] sm:$0xf]
    %v3261 = vld [vmem:[#allocation12] sm:$0xf]
    %v3262 = vld [vmem:[#allocation12 + $0x4] sm:$0xf]
    %v3263 = vld [vmem:[#allocation12 + $0x8] sm:$0xf]
    %v3264 = vld [vmem:[#allocation12 + $0xc] sm:$0xf]
    %v3265 = vld [vmem:[#allocation12 + $0x10] sm:$0xf]
    %v3266 = vld [vmem:[#allocation12 + $0x14] sm:$0xf]
    %v3267 = vld [vmem:[#allocation12 + $0x18] sm:$0xf]
    %v3268 = vld [vmem:[#allocation12 + $0x1c] sm:$0xf]
    %v3269 = vld [vmem:[#allocation12 + $0x20] sm:$0xf]
    %v3270 = vld [vmem:[#allocation12 + $0x24] sm:$0xf]
    %v3271 = vld [vmem:[#allocation12 + $0x28] sm:$0xf]
    %v3272 = vld [vmem:[#allocation12 + $0x2c] sm:$0xf]
    %v3273 = vld [vmem:[#allocation12 + $0x30] sm:$0xf]
    %v3274 = vld [vmem:[#allocation12 + $0x34] sm:$0xf]
    %v3275 = vld [vmem:[#allocation12 + $0x38] sm:$0xf]
    %v3276 = vld [vmem:[#allocation12 + $0x3c] sm:$0xf]
    %v3277 = vld [vmem:[#allocation12 + $0x40] sm:$0xf]
    %v3278 = vld [vmem:[#allocation12 + $0x44] sm:$0xf]
    %v3279 = vld [vmem:[#allocation12 + $0x48] sm:$0xf]
    %v3280 = vld [vmem:[#allocation12 + $0x4c] sm:$0xf]
    %v3281 = vld [vmem:[#allocation12 + $0x50] sm:$0xf]
    %v3282 = vld [vmem:[#allocation12 + $0x54] sm:$0xf]
    %v3283 = vld [vmem:[#allocation12 + $0x58] sm:$0xf]
    %v3284 = vld [vmem:[#allocation12 + $0x5c] sm:$0xf]
    %v3285 = vld [vmem:[#allocation12 + $0x60] sm:$0xf]
    %v3286 = vld [vmem:[#allocation12 + $0x64] sm:$0xf]
    %v3287 = vld [vmem:[#allocation12 + $0x68] sm:$0xf]
    %v3288 = vld [vmem:[#allocation12 + $0x6c] sm:$0xf]
    %v3289 = vld [vmem:[#allocation12 + $0x70] sm:$0xf]
    %v3290 = vld [vmem:[#allocation12 + $0x74] sm:$0xf]
    %v3291 = vld [vmem:[#allocation12 + $0x78] sm:$0xf]
    %v3292 = vld [vmem:[#allocation12 + $0x7c] sm:$0xf]
    %v3293 = vld [vmem:[#allocation12 + $0x80] sm:$0xf]
    %v3294 = vld [vmem:[#allocation12 + $0x84] sm:$0xf]
    %v3295 = vld [vmem:[#allocation12 + $0x88] sm:$0xf]
    %v3296 = vld [vmem:[#allocation12 + $0x8c] sm:$0xf]
    %v3297 = vld [vmem:[#allocation12 + $0x90] sm:$0xf]
    %v3298 = vld [vmem:[#allocation12 + $0x94] sm:$0xf]
    %v3299 = vld [vmem:[#allocation12 + $0x98] sm:$0xf]
    %v3300 = vld [vmem:[#allocation12 + $0x9c] sm:$0xf]
    %v3301 = vld [vmem:[#allocation12 + $0xa0] sm:$0xf]
    %v3302 = vld [vmem:[#allocation12 + $0xa4] sm:$0xf]
    %v3303 = vld [vmem:[#allocation12 + $0xa8] sm:$0xf]
    %v3304 = vld [vmem:[#allocation12 + $0xac] sm:$0xf]
    %v3305 = vld [vmem:[#allocation12 + $0xb0] sm:$0xf]
    %v3306 = vld [vmem:[#allocation12 + $0xb4] sm:$0xf]
    %v3307 = vld [vmem:[#allocation12 + $0xb8] sm:$0xf]
    %v3308 = vld [vmem:[#allocation12 + $0xbc] sm:$0xf]
    %v3309 = vld [vmem:[#allocation12 + $0xc0] sm:$0xf]
    %v3310 = vld [vmem:[#allocation12 + $0xc4] sm:$0xf]
    %v3311 = vld [vmem:[#allocation12 + $0xc8] sm:$0xf]
    %v3312 = vld [vmem:[#allocation12 + $0xcc] sm:$0xf]
    %v3313 = vld [vmem:[#allocation12 + $0xd0] sm:$0xf]
    %v3314 = vld [vmem:[#allocation12 + $0xd4] sm:$0xf]
    %v3315 = vld [vmem:[#allocation12 + $0xd8] sm:$0xf]
    %v3316 = vld [vmem:[#allocation12 + $0xdc] sm:$0xf]
    %v3317 = vld [vmem:[#allocation12 + $0xe0] sm:$0xf]
    %v3318 = vld [vmem:[#allocation12 + $0xe4] sm:$0xf]
    %v3319 = vld [vmem:[#allocation12 + $0xe8] sm:$0xf]
    %v3320 = vld [vmem:[#allocation12 + $0xec] sm:$0xf]
    %v3321 = vld [vmem:[#allocation12 + $0xf0] sm:$0xf]
    %v3322 = vld [vmem:[#allocation12 + $0xf4] sm:$0xf]
    %v3323 = vld [vmem:[#allocation12 + $0xf8] sm:$0xf]
    %v3324 = vld [vmem:[#allocation12 + $0xfc] sm:$0xf]
    %v3325 = vld [vmem:[#allocation12 + $0x100] sm:$0xf]
    %v3326 = vld [vmem:[#allocation12 + $0x104] sm:$0xf]
    %v3327 = vld [vmem:[#allocation12 + $0x108] sm:$0xf]
    %v3328 = vld [vmem:[#allocation12 + $0x10c] sm:$0xf]
    %v3329 = vld [vmem:[#allocation12 + $0x110] sm:$0xf]
    %v3330 = vld [vmem:[#allocation12 + $0x114] sm:$0xf]
    %v3331 = vld [vmem:[#allocation12 + $0x118] sm:$0xf]
    %v3332 = vld [vmem:[#allocation12 + $0x11c] sm:$0xf]
    %v3333 = vld [vmem:[#allocation12 + $0x120] sm:$0xf]
    %v3334 = vld [vmem:[#allocation12 + $0x124] sm:$0xf]
    %v3335 = vld [vmem:[#allocation12 + $0x128] sm:$0xf]
    %v3336 = vld [vmem:[#allocation12 + $0x12c] sm:$0xf]
    %v3337 = vld [vmem:[#allocation12 + $0x130] sm:$0xf]
    %v3338 = vld [vmem:[#allocation12 + $0x134] sm:$0xf]
    %v3339 = vld [vmem:[#allocation12 + $0x138] sm:$0xf]
    %v3340 = vld [vmem:[#allocation12 + $0x13c] sm:$0xf]
    %v3341 = vld [vmem:[#allocation12 + $0x140] sm:$0xf]
    %v3342 = vld [vmem:[#allocation12 + $0x144] sm:$0xf]
    %v3343 = vld [vmem:[#allocation12 + $0x148] sm:$0xf]
    %v3344 = vld [vmem:[#allocation12 + $0x14c] sm:$0xf]
    %v3345 = vld [vmem:[#allocation12 + $0x150] sm:$0xf]
    %v3346 = vld [vmem:[#allocation12 + $0x154] sm:$0xf]
    %v3347 = vld [vmem:[#allocation12 + $0x158] sm:$0xf]
    %v3348 = vld [vmem:[#allocation12 + $0x15c] sm:$0xf]
    %v3349 = vld [vmem:[#allocation12 + $0x160] sm:$0xf]
    %v3350 = vld [vmem:[#allocation12 + $0x164] sm:$0xf]
    %v3351 = vld [vmem:[#allocation12 + $0x168] sm:$0xf]
    %v3352 = vld [vmem:[#allocation12 + $0x16c] sm:$0xf]
    %v3353 = vld [vmem:[#allocation12 + $0x170] sm:$0xf]
    %v3354 = vld [vmem:[#allocation12 + $0x174] sm:$0xf]
    %v3355 = vld [vmem:[#allocation12 + $0x178] sm:$0xf]
    %v3356 = vld [vmem:[#allocation12 + $0x17c] sm:$0xf]
    %v3357 = vld [vmem:[#allocation12 + $0x180] sm:$0xf]
    %v3358 = vld [vmem:[#allocation12 + $0x184] sm:$0xf]
    %v3359 = vld [vmem:[#allocation12 + $0x188] sm:$0xf]
    %v3360 = vld [vmem:[#allocation12 + $0x18c] sm:$0xf]
    %v3361 = vld [vmem:[#allocation12 + $0x190] sm:$0xf]
    %v3362 = vld [vmem:[#allocation12 + $0x194] sm:$0xf]
    %v3363 = vld [vmem:[#allocation12 + $0x198] sm:$0xf]
    %v3364 = vld [vmem:[#allocation12 + $0x19c] sm:$0xf]
    %v3365 = vld [vmem:[#allocation12 + $0x1a0] sm:$0xf]
    %v3366 = vld [vmem:[#allocation12 + $0x1a4] sm:$0xf]
    %v3367 = vld [vmem:[#allocation12 + $0x1a8] sm:$0xf]
    %v3368 = vld [vmem:[#allocation12 + $0x1ac] sm:$0xf]
    %v3369 = vld [vmem:[#allocation12 + $0x1b0] sm:$0xf]
    %v3370 = vld [vmem:[#allocation12 + $0x1b4] sm:$0xf]
    %v3371 = vld [vmem:[#allocation12 + $0x1b8] sm:$0xf]
    %v3372 = vld [vmem:[#allocation12 + $0x1bc] sm:$0xf]
    %v3373 = vld [vmem:[#allocation12 + $0x1c0] sm:$0xf]
    %v3374 = vld [vmem:[#allocation12 + $0x1c4] sm:$0xf]
    %v3375 = vld [vmem:[#allocation12 + $0x1c8] sm:$0xf]
    %v3376 = vld [vmem:[#allocation12 + $0x1cc] sm:$0xf]
    %v3377 = vld [vmem:[#allocation12 + $0x1d0] sm:$0xf]
    %v3378 = vld [vmem:[#allocation12 + $0x1d4] sm:$0xf]
    %v3379 = vld [vmem:[#allocation12 + $0x1d8] sm:$0xf]
    %v3380 = vld [vmem:[#allocation12 + $0x1dc] sm:$0xf]
    %v3381 = vld [vmem:[#allocation12 + $0x1e0] sm:$0xf]
    %v3382 = vld [vmem:[#allocation12 + $0x1e4] sm:$0xf]
    %v3383 = vld [vmem:[#allocation12 + $0x1e8] sm:$0xf]
    %v3384 = vld [vmem:[#allocation12 + $0x1ec] sm:$0xf]
    %v3385 = vld [vmem:[#allocation12 + $0x1f0] sm:$0xf]
    %v3386 = vld [vmem:[#allocation12 + $0x1f4] sm:$0xf]
    %v3387 = vld [vmem:[#allocation12 + $0x1f8] sm:$0xf]
    %v3388 = vld [vmem:[#allocation12 + $0x1fc] sm:$0xf]
    %v3389 = vld [vmem:[#allocation12 + $0x200] sm:$0xf]
    %v3390 = vld [vmem:[#allocation12 + $0x204] sm:$0xf]
    %v3391 = vld [vmem:[#allocation12 + $0x208] sm:$0xf]
    %v3392 = vld [vmem:[#allocation12 + $0x20c] sm:$0xf]
    %v3393 = vld [vmem:[#allocation12 + $0x210] sm:$0xf]
    %v3394 = vld [vmem:[#allocation12 + $0x214] sm:$0xf]
    %v3395 = vld [vmem:[#allocation12 + $0x218] sm:$0xf]
    %v3396 = vld [vmem:[#allocation12 + $0x21c] sm:$0xf]
    %v3397 = vld [vmem:[#allocation12 + $0x220] sm:$0xf]
    %v3398 = vld [vmem:[#allocation12 + $0x224] sm:$0xf]
    %v3399 = vld [vmem:[#allocation12 + $0x228] sm:$0xf]
    %v3400 = vld [vmem:[#allocation12 + $0x22c] sm:$0xf]
    %v3401 = vld [vmem:[#allocation12 + $0x230] sm:$0xf]
    %v3402 = vld [vmem:[#allocation12 + $0x234] sm:$0xf]
    %v3403 = vld [vmem:[#allocation12 + $0x238] sm:$0xf]
    %v3404 = vld [vmem:[#allocation12 + $0x23c] sm:$0xf]
    %v3485 = vunpack.c.l.b16 %v3181
    %v3486 = vunpack.c.h.b16 %v3181
    %v3487 = vunpack.c.l.b16 %v3182
    %v3488 = vunpack.c.h.b16 %v3182
    %v3489 = vunpack.c.l.b16 %v3183
    %v3490 = vunpack.c.h.b16 %v3183
    %v3491 = vunpack.c.l.b16 %v3184
    %v3492 = vunpack.c.h.b16 %v3184
    %v3493 = vunpack.c.l.b16 %v3185
    %v3494 = vunpack.c.l.b16 %v3186
    %v3495 = vunpack.c.h.b16 %v3186
    %v3496 = vunpack.c.l.b16 %v3187
    %v3497 = vunpack.c.h.b16 %v3187
    %v3498 = vunpack.c.l.b16 %v3188
    %v3499 = vunpack.c.h.b16 %v3188
    %v3500 = vunpack.c.l.b16 %v3189
    %v3501 = vunpack.c.h.b16 %v3189
    %v3502 = vunpack.c.l.b16 %v3190
    %v3503 = vunpack.c.l.b16 %v3191
    %v3504 = vunpack.c.h.b16 %v3191
    %v3505 = vunpack.c.l.b16 %v3192
    %v3506 = vunpack.c.h.b16 %v3192
    %v3507 = vunpack.c.l.b16 %v3193
    %v3508 = vunpack.c.h.b16 %v3193
    %v3509 = vunpack.c.l.b16 %v3194
    %v3510 = vunpack.c.h.b16 %v3194
    %v3511 = vunpack.c.l.b16 %v3195
    %v3512 = vunpack.c.l.b16 %v3196
    %v3513 = vunpack.c.h.b16 %v3196
    %v3514 = vunpack.c.l.b16 %v3197
    %v3515 = vunpack.c.h.b16 %v3197
    %v3516 = vunpack.c.l.b16 %v3198
    %v3517 = vunpack.c.h.b16 %v3198
    %v3518 = vunpack.c.l.b16 %v3199
    %v3519 = vunpack.c.h.b16 %v3199
    %v3520 = vunpack.c.l.b16 %v3200
    %v3521 = vunpack.c.l.b16 %v3201
    %v3522 = vunpack.c.h.b16 %v3201
    %v3523 = vunpack.c.l.b16 %v3202
    %v3524 = vunpack.c.h.b16 %v3202
    %v3525 = vunpack.c.l.b16 %v3203
    %v3526 = vunpack.c.h.b16 %v3203
    %v3527 = vunpack.c.l.b16 %v3204
    %v3528 = vunpack.c.h.b16 %v3204
    %v3529 = vunpack.c.l.b16 %v3205
    %v3530 = vunpack.c.l.b16 %v3206
    %v3531 = vunpack.c.h.b16 %v3206
    %v3532 = vunpack.c.l.b16 %v3207
    %v3533 = vunpack.c.h.b16 %v3207
    %v3534 = vunpack.c.l.b16 %v3208
    %v3535 = vunpack.c.h.b16 %v3208
    %v3536 = vunpack.c.l.b16 %v3209
    %v3537 = vunpack.c.h.b16 %v3209
    %v3538 = vunpack.c.l.b16 %v3210
    %v3539 = vunpack.c.l.b16 %v3211
    %v3540 = vunpack.c.h.b16 %v3211
    %v3541 = vunpack.c.l.b16 %v3212
    %v3542 = vunpack.c.h.b16 %v3212
    %v3543 = vunpack.c.l.b16 %v3213
    %v3544 = vunpack.c.h.b16 %v3213
    %v3545 = vunpack.c.l.b16 %v3214
    %v3546 = vunpack.c.h.b16 %v3214
    %v3547 = vunpack.c.l.b16 %v3215
    %v3548 = vunpack.c.l.b16 %v3216
    %v3549 = vunpack.c.h.b16 %v3216
    %v3550 = vunpack.c.l.b16 %v3217
    %v3551 = vunpack.c.h.b16 %v3217
    %v3552 = vunpack.c.l.b16 %v3218
    %v3553 = vunpack.c.h.b16 %v3218
    %v3554 = vunpack.c.l.b16 %v3219
    %v3555 = vunpack.c.h.b16 %v3219
    %v3556 = vunpack.c.l.b16 %v3220
    %v3557 = vunpack.c.l.b16 %v3221
    %v3558 = vunpack.c.h.b16 %v3221
    %v3559 = vunpack.c.l.b16 %v3222
    %v3560 = vunpack.c.h.b16 %v3222
    %v3561 = vunpack.c.l.b16 %v3223
    %v3562 = vunpack.c.h.b16 %v3223
    %v3563 = vunpack.c.l.b16 %v3224
    %v3564 = vunpack.c.h.b16 %v3224
    %v3565 = vunpack.c.l.b16 %v3225
    %v3566 = vunpack.c.l.b16 %v3226
    %v3567 = vunpack.c.h.b16 %v3226
    %v3568 = vunpack.c.l.b16 %v3227
    %v3569 = vunpack.c.h.b16 %v3227
    %v3570 = vunpack.c.l.b16 %v3228
    %v3571 = vunpack.c.h.b16 %v3228
    %v3572 = vunpack.c.l.b16 %v3229
    %v3573 = vunpack.c.h.b16 %v3229
    %v3574 = vunpack.c.l.b16 %v3230
    %v3575 = vunpack.c.l.b16 %v3231
    %v3576 = vunpack.c.h.b16 %v3231
    %v3577 = vunpack.c.l.b16 %v3232
    %v3578 = vunpack.c.h.b16 %v3232
    %v3579 = vunpack.c.l.b16 %v3233
    %v3580 = vunpack.c.h.b16 %v3233
    %v3581 = vunpack.c.l.b16 %v3234
    %v3582 = vunpack.c.h.b16 %v3234
    %v3583 = vunpack.c.l.b16 %v3235
    %v3584 = vunpack.c.l.b16 %v3236
    %v3585 = vunpack.c.h.b16 %v3236
    %v3586 = vunpack.c.l.b16 %v3237
    %v3587 = vunpack.c.h.b16 %v3237
    %v3588 = vunpack.c.l.b16 %v3238
    %v3589 = vunpack.c.h.b16 %v3238
    %v3590 = vunpack.c.l.b16 %v3239
    %v3591 = vunpack.c.h.b16 %v3239
    %v3592 = vunpack.c.l.b16 %v3240
    %v3593 = vunpack.c.l.b16 %v3241
    %v3594 = vunpack.c.h.b16 %v3241
    %v3595 = vunpack.c.l.b16 %v3242
    %v3596 = vunpack.c.h.b16 %v3242
    %v3597 = vunpack.c.l.b16 %v3243
    %v3598 = vunpack.c.h.b16 %v3243
    %v3599 = vunpack.c.l.b16 %v3244
    %v3600 = vunpack.c.h.b16 %v3244
    %v3601 = vunpack.c.l.b16 %v3245
    %v3602 = vunpack.c.l.b16 %v3246
    %v3603 = vunpack.c.h.b16 %v3246
    %v3604 = vunpack.c.l.b16 %v3247
    %v3605 = vunpack.c.h.b16 %v3247
    %v3606 = vunpack.c.l.b16 %v3248
    %v3607 = vunpack.c.h.b16 %v3248
    %v3608 = vunpack.c.l.b16 %v3249
    %v3609 = vunpack.c.h.b16 %v3249
    %v3610 = vunpack.c.l.b16 %v3250
    %v3611 = vunpack.c.l.b16 %v3251
    %v3612 = vunpack.c.h.b16 %v3251
    %v3613 = vunpack.c.l.b16 %v3252
    %v3614 = vunpack.c.h.b16 %v3252
    %v3615 = vunpack.c.l.b16 %v3253
    %v3616 = vunpack.c.h.b16 %v3253
    %v3617 = vunpack.c.l.b16 %v3254
    %v3618 = vunpack.c.h.b16 %v3254
    %v3619 = vunpack.c.l.b16 %v3255
    %v3620 = vunpack.c.l.b16 %v3256
    %v3621 = vunpack.c.h.b16 %v3256
    %v3622 = vunpack.c.l.b16 %v3257
    %v3623 = vunpack.c.h.b16 %v3257
    %v3624 = vunpack.c.l.b16 %v3258
    %v3625 = vunpack.c.h.b16 %v3258
    %v3626 = vunpack.c.l.b16 %v3259
    %v3627 = vunpack.c.h.b16 %v3259
    %v3628 = vunpack.c.l.b16 %v3260
    %v3629 = vpack.c.b16 %v3494, %v3485
    %v3630 = vpack.c.b16 %v3495, %v3486
    %v3631 = vpack.c.b16 %v3496, %v3487
    %v3632 = vpack.c.b16 %v3497, %v3488
    %v3633 = vpack.c.b16 %v3498, %v3489
    %v3634 = vpack.c.b16 %v3499, %v3490
    %v3635 = vpack.c.b16 %v3500, %v3491
    %v3636 = vpack.c.b16 %v3501, %v3492
    %v3637 = vpack.c.b16 %v3502, %v3493
    %v3638 = vpack.c.b16 %v3512, %v3503
    %v3639 = vpack.c.b16 %v3513, %v3504
    %v3640 = vpack.c.b16 %v3514, %v3505
    %v3641 = vpack.c.b16 %v3515, %v3506
    %v3642 = vpack.c.b16 %v3516, %v3507
    %v3643 = vpack.c.b16 %v3517, %v3508
    %v3644 = vpack.c.b16 %v3518, %v3509
    %v3645 = vpack.c.b16 %v3519, %v3510
    %v3646 = vpack.c.b16 %v3520, %v3511
    %v3647 = vpack.c.b16 %v3530, %v3521
    %v3648 = vpack.c.b16 %v3531, %v3522
    %v3649 = vpack.c.b16 %v3532, %v3523
    %v3650 = vpack.c.b16 %v3533, %v3524
    %v3651 = vpack.c.b16 %v3534, %v3525
    %v3652 = vpack.c.b16 %v3535, %v3526
    %v3653 = vpack.c.b16 %v3536, %v3527
    %v3654 = vpack.c.b16 %v3537, %v3528
    %v3655 = vpack.c.b16 %v3538, %v3529
    %v3656 = vpack.c.b16 %v3548, %v3539
    %v3657 = vpack.c.b16 %v3549, %v3540
    %v3658 = vpack.c.b16 %v3550, %v3541
    %v3659 = vpack.c.b16 %v3551, %v3542
    %v3660 = vpack.c.b16 %v3552, %v3543
    %v3661 = vpack.c.b16 %v3553, %v3544
    %v3662 = vpack.c.b16 %v3554, %v3545
    %v3663 = vpack.c.b16 %v3555, %v3546
    %v3664 = vpack.c.b16 %v3556, %v3547
    %v3665 = vpack.c.b16 %v3566, %v3557
    %v3666 = vpack.c.b16 %v3567, %v3558
    %v3667 = vpack.c.b16 %v3568, %v3559
    %v3668 = vpack.c.b16 %v3569, %v3560
    %v3669 = vpack.c.b16 %v3570, %v3561
    %v3670 = vpack.c.b16 %v3571, %v3562
    %v3671 = vpack.c.b16 %v3572, %v3563
    %v3672 = vpack.c.b16 %v3573, %v3564
    %v3673 = vpack.c.b16 %v3574, %v3565
    %v3674 = vpack.c.b16 %v3584, %v3575
    %v3675 = vpack.c.b16 %v3585, %v3576
    %v3676 = vpack.c.b16 %v3586, %v3577
    %v3677 = vpack.c.b16 %v3587, %v3578
    %v3678 = vpack.c.b16 %v3588, %v3579
    %v3679 = vpack.c.b16 %v3589, %v3580
    %v3680 = vpack.c.b16 %v3590, %v3581
    %v3681 = vpack.c.b16 %v3591, %v3582
    %v3682 = vpack.c.b16 %v3592, %v3583
    %v3683 = vpack.c.b16 %v3602, %v3593
    %v3684 = vpack.c.b16 %v3603, %v3594
    %v3685 = vpack.c.b16 %v3604, %v3595
    %v3686 = vpack.c.b16 %v3605, %v3596
    %v3687 = vpack.c.b16 %v3606, %v3597
    %v3688 = vpack.c.b16 %v3607, %v3598
    %v3689 = vpack.c.b16 %v3608, %v3599
    %v3690 = vpack.c.b16 %v3609, %v3600
    %v3691 = vpack.c.b16 %v3610, %v3601
    %v3692 = vpack.c.b16 %v3620, %v3611
    %v3693 = vpack.c.b16 %v3621, %v3612
    %v3694 = vpack.c.b16 %v3622, %v3613
    %v3695 = vpack.c.b16 %v3623, %v3614
    %v3696 = vpack.c.b16 %v3624, %v3615
    %v3697 = vpack.c.b16 %v3625, %v3616
    %v3698 = vpack.c.b16 %v3626, %v3617
    %v3699 = vpack.c.b16 %v3627, %v3618
    %v3700 = vpack.c.b16 %v3628, %v3619
    %v3917 = vunpack.c.l.b16 %v3261
    %v3918 = vunpack.c.l.b16 %v3262
    %v3919 = vunpack.c.l.b16 %v3263
    %v3920 = vunpack.c.l.b16 %v3264
    %v3921 = vunpack.c.l.b16 %v3265
    %v3922 = vunpack.c.l.b16 %v3266
    %v3923 = vunpack.c.l.b16 %v3267
    %v3924 = vunpack.c.l.b16 %v3268
    %v3925 = vunpack.c.l.b16 %v3269
    %v3926 = vunpack.c.l.b16 %v3270
    %v3927 = vunpack.c.l.b16 %v3271
    %v3928 = vunpack.c.l.b16 %v3272
    %v3929 = vunpack.c.l.b16 %v3273
    %v3930 = vunpack.c.l.b16 %v3274
    %v3931 = vunpack.c.l.b16 %v3275
    %v3932 = vunpack.c.l.b16 %v3276
    %v3933 = vunpack.c.l.b16 %v3277
    %v3934 = vunpack.c.l.b16 %v3278
    %v3935 = vunpack.c.l.b16 %v3279
    %v3936 = vunpack.c.l.b16 %v3280
    %v3937 = vunpack.c.l.b16 %v3281
    %v3938 = vunpack.c.l.b16 %v3282
    %v3939 = vunpack.c.l.b16 %v3283
    %v3940 = vunpack.c.l.b16 %v3284
    %v3941 = vunpack.c.l.b16 %v3285
    %v3942 = vunpack.c.l.b16 %v3286
    %v3943 = vunpack.c.l.b16 %v3287
    %v3944 = vunpack.c.l.b16 %v3288
    %v3945 = vunpack.c.l.b16 %v3289
    %v3946 = vunpack.c.l.b16 %v3290
    %v3947 = vunpack.c.l.b16 %v3291
    %v3948 = vunpack.c.l.b16 %v3292
    %v3949 = vunpack.c.l.b16 %v3293
    %v3950 = vunpack.c.l.b16 %v3294
    %v3951 = vunpack.c.l.b16 %v3295
    %v3952 = vunpack.c.l.b16 %v3296
    %v3953 = vunpack.c.l.b16 %v3297
    %v3954 = vunpack.c.l.b16 %v3298
    %v3955 = vunpack.c.l.b16 %v3299
    %v3956 = vunpack.c.l.b16 %v3300
    %v3957 = vunpack.c.l.b16 %v3301
    %v3958 = vunpack.c.l.b16 %v3302
    %v3959 = vunpack.c.l.b16 %v3303
    %v3960 = vunpack.c.l.b16 %v3304
    %v3961 = vunpack.c.l.b16 %v3305
    %v3962 = vunpack.c.l.b16 %v3306
    %v3963 = vunpack.c.l.b16 %v3307
    %v3964 = vunpack.c.l.b16 %v3308
    %v3965 = vunpack.c.l.b16 %v3309
    %v3966 = vunpack.c.l.b16 %v3310
    %v3967 = vunpack.c.l.b16 %v3311
    %v3968 = vunpack.c.l.b16 %v3312
    %v3969 = vunpack.c.l.b16 %v3313
    %v3970 = vunpack.c.l.b16 %v3314
    %v3971 = vunpack.c.l.b16 %v3315
    %v3972 = vunpack.c.l.b16 %v3316
    %v3973 = vunpack.c.l.b16 %v3317
    %v3974 = vunpack.c.l.b16 %v3318
    %v3975 = vunpack.c.l.b16 %v3319
    %v3976 = vunpack.c.l.b16 %v3320
    %v3977 = vunpack.c.l.b16 %v3321
    %v3978 = vunpack.c.l.b16 %v3322
    %v3979 = vunpack.c.l.b16 %v3323
    %v3980 = vunpack.c.l.b16 %v3324
    %v3981 = vunpack.c.l.b16 %v3325
    %v3982 = vunpack.c.l.b16 %v3326
    %v3983 = vunpack.c.l.b16 %v3327
    %v3984 = vunpack.c.l.b16 %v3328
    %v3985 = vunpack.c.l.b16 %v3329
    %v3986 = vunpack.c.l.b16 %v3330
    %v3987 = vunpack.c.l.b16 %v3331
    %v3988 = vunpack.c.l.b16 %v3332
    %v3989 = vunpack.c.l.b16 %v3333
    %v3990 = vunpack.c.l.b16 %v3334
    %v3991 = vunpack.c.l.b16 %v3335
    %v3992 = vunpack.c.l.b16 %v3336
    %v3993 = vunpack.c.l.b16 %v3337
    %v3994 = vunpack.c.l.b16 %v3338
    %v3995 = vunpack.c.l.b16 %v3339
    %v3996 = vunpack.c.l.b16 %v3340
    %v3997 = vunpack.c.l.b16 %v3341
    %v3998 = vunpack.c.l.b16 %v3342
    %v3999 = vunpack.c.l.b16 %v3343
    %v4000 = vunpack.c.l.b16 %v3344
    %v4001 = vunpack.c.l.b16 %v3345
    %v4002 = vunpack.c.l.b16 %v3346
    %v4003 = vunpack.c.l.b16 %v3347
    %v4004 = vunpack.c.l.b16 %v3348
    %v4005 = vunpack.c.l.b16 %v3349
    %v4006 = vunpack.c.l.b16 %v3350
    %v4007 = vunpack.c.l.b16 %v3351
    %v4008 = vunpack.c.l.b16 %v3352
    %v4009 = vunpack.c.l.b16 %v3353
    %v4010 = vunpack.c.l.b16 %v3354
    %v4011 = vunpack.c.l.b16 %v3355
    %v4012 = vunpack.c.l.b16 %v3356
    %v4013 = vunpack.c.l.b16 %v3357
    %v4014 = vunpack.c.l.b16 %v3358
    %v4015 = vunpack.c.l.b16 %v3359
    %v4016 = vunpack.c.l.b16 %v3360
    %v4017 = vunpack.c.l.b16 %v3361
    %v4018 = vunpack.c.l.b16 %v3362
    %v4019 = vunpack.c.l.b16 %v3363
    %v4020 = vunpack.c.l.b16 %v3364
    %v4021 = vunpack.c.l.b16 %v3365
    %v4022 = vunpack.c.l.b16 %v3366
    %v4023 = vunpack.c.l.b16 %v3367
    %v4024 = vunpack.c.l.b16 %v3368
    %v4025 = vunpack.c.l.b16 %v3369
    %v4026 = vunpack.c.l.b16 %v3370
    %v4027 = vunpack.c.l.b16 %v3371
    %v4028 = vunpack.c.l.b16 %v3372
    %v4029 = vunpack.c.l.b16 %v3373
    %v4030 = vunpack.c.l.b16 %v3374
    %v4031 = vunpack.c.l.b16 %v3375
    %v4032 = vunpack.c.l.b16 %v3376
    %v4033 = vunpack.c.l.b16 %v3377
    %v4034 = vunpack.c.l.b16 %v3378
    %v4035 = vunpack.c.l.b16 %v3379
    %v4036 = vunpack.c.l.b16 %v3380
    %v4037 = vunpack.c.l.b16 %v3381
    %v4038 = vunpack.c.l.b16 %v3382
    %v4039 = vunpack.c.l.b16 %v3383
    %v4040 = vunpack.c.l.b16 %v3384
    %v4041 = vunpack.c.l.b16 %v3385
    %v4042 = vunpack.c.l.b16 %v3386
    %v4043 = vunpack.c.l.b16 %v3387
    %v4044 = vunpack.c.l.b16 %v3388
    %v4045 = vunpack.c.l.b16 %v3389
    %v4046 = vunpack.c.l.b16 %v3390
    %v4047 = vunpack.c.l.b16 %v3391
    %v4048 = vunpack.c.l.b16 %v3392
    %v4049 = vunpack.c.l.b16 %v3393
    %v4050 = vunpack.c.l.b16 %v3394
    %v4051 = vunpack.c.l.b16 %v3395
    %v4052 = vunpack.c.l.b16 %v3396
    %v4053 = vunpack.c.l.b16 %v3397
    %v4054 = vunpack.c.l.b16 %v3398
    %v4055 = vunpack.c.l.b16 %v3399
    %v4056 = vunpack.c.l.b16 %v3400
    %v4057 = vunpack.c.l.b16 %v3401
    %v4058 = vunpack.c.l.b16 %v3402
    %v4059 = vunpack.c.l.b16 %v3403
    %v4060 = vunpack.c.l.b16 %v3404
    %v4061 = vpack.c.b16 %v3918, %v3917
    %v4062 = vpack.c.b16 %v3920, %v3919
    %v4063 = vpack.c.b16 %v3922, %v3921
    %v4064 = vpack.c.b16 %v3924, %v3923
    %v4065 = vpack.c.b16 %v3926, %v3925
    %v4066 = vpack.c.b16 %v3928, %v3927
    %v4067 = vpack.c.b16 %v3930, %v3929
    %v4068 = vpack.c.b16 %v3932, %v3931
    %v4069 = vpack.c.b16 %v3934, %v3933
    %v4070 = vpack.c.b16 %v3936, %v3935
    %v4071 = vpack.c.b16 %v3938, %v3937
    %v4072 = vpack.c.b16 %v3940, %v3939
    %v4073 = vpack.c.b16 %v3942, %v3941
    %v4074 = vpack.c.b16 %v3944, %v3943
    %v4075 = vpack.c.b16 %v3946, %v3945
    %v4076 = vpack.c.b16 %v3948, %v3947
    %v4077 = vpack.c.b16 %v3950, %v3949
    %v4078 = vpack.c.b16 %v3952, %v3951
    %v4079 = vpack.c.b16 %v3954, %v3953
    %v4080 = vpack.c.b16 %v3956, %v3955
    %v4081 = vpack.c.b16 %v3958, %v3957
    %v4082 = vpack.c.b16 %v3960, %v3959
    %v4083 = vpack.c.b16 %v3962, %v3961
    %v4084 = vpack.c.b16 %v3964, %v3963
    %v4085 = vpack.c.b16 %v3966, %v3965
    %v4086 = vpack.c.b16 %v3968, %v3967
    %v4087 = vpack.c.b16 %v3970, %v3969
    %v4088 = vpack.c.b16 %v3972, %v3971
    %v4089 = vpack.c.b16 %v3974, %v3973
    %v4090 = vpack.c.b16 %v3976, %v3975
    %v4091 = vpack.c.b16 %v3978, %v3977
    %v4092 = vpack.c.b16 %v3980, %v3979
    %v4093 = vpack.c.b16 %v3982, %v3981
    %v4094 = vpack.c.b16 %v3984, %v3983
    %v4095 = vpack.c.b16 %v3986, %v3985
    %v4096 = vpack.c.b16 %v3988, %v3987
    %v4097 = vpack.c.b16 %v3990, %v3989
    %v4098 = vpack.c.b16 %v3992, %v3991
    %v4099 = vpack.c.b16 %v3994, %v3993
    %v4100 = vpack.c.b16 %v3996, %v3995
    %v4101 = vpack.c.b16 %v3998, %v3997
    %v4102 = vpack.c.b16 %v4000, %v3999
    %v4103 = vpack.c.b16 %v4002, %v4001
    %v4104 = vpack.c.b16 %v4004, %v4003
    %v4105 = vpack.c.b16 %v4006, %v4005
    %v4106 = vpack.c.b16 %v4008, %v4007
    %v4107 = vpack.c.b16 %v4010, %v4009
    %v4108 = vpack.c.b16 %v4012, %v4011
    %v4109 = vpack.c.b16 %v4014, %v4013
    %v4110 = vpack.c.b16 %v4016, %v4015
    %v4111 = vpack.c.b16 %v4018, %v4017
    %v4112 = vpack.c.b16 %v4020, %v4019
    %v4113 = vpack.c.b16 %v4022, %v4021
    %v4114 = vpack.c.b16 %v4024, %v4023
    %v4115 = vpack.c.b16 %v4026, %v4025
    %v4116 = vpack.c.b16 %v4028, %v4027
    %v4117 = vpack.c.b16 %v4030, %v4029
    %v4118 = vpack.c.b16 %v4032, %v4031
    %v4119 = vpack.c.b16 %v4034, %v4033
    %v4120 = vpack.c.b16 %v4036, %v4035
    %v4121 = vpack.c.b16 %v4038, %v4037
    %v4122 = vpack.c.b16 %v4040, %v4039
    %v4123 = vpack.c.b16 %v4042, %v4041
    %v4124 = vpack.c.b16 %v4044, %v4043
    %v4125 = vpack.c.b16 %v4046, %v4045
    %v4126 = vpack.c.b16 %v4048, %v4047
    %v4127 = vpack.c.b16 %v4050, %v4049
    %v4128 = vpack.c.b16 %v4052, %v4051
    %v4129 = vpack.c.b16 %v4054, %v4053
    %v4130 = vpack.c.b16 %v4056, %v4055
    %v4131 = vpack.c.b16 %v4058, %v4057
    %v4132 = vpack.c.b16 %v4060, %v4059
    %4205 = vmatprep.subr.bf16.mxu0 0
    %4206 = vmatpush1.bf16.msra.mxu0 %v4068
    %4207 = vmatprep.subr.bf16.mxu0 0
    %4208 = vmatpush1.bf16.msra.mxu0 %v4067
    %4209 = vmatprep.subr.bf16.mxu0 0
    %4210 = vmatpush1.bf16.msra.mxu0 %v4066
    %4211 = vmatprep.subr.bf16.mxu0 0
    %4212 = vmatpush1.bf16.msra.mxu0 %v4065
    %4213 = vmatprep.subr.bf16.mxu0 0
    %4214 = vmatpush1.bf16.msra.mxu0 %v4064
    %4215 = vmatprep.subr.bf16.mxu0 0
    %4216 = vmatpush1.bf16.msra.mxu0 %v4063
    %4217 = vmatprep.subr.bf16.mxu0 0
    %4218 = vmatpush1.bf16.msra.mxu0 %v4062
    %4219 = vmatprep.subr.bf16.mxu0 0
    %4220 = vmatpush1.bf16.msra.mxu0 %v4061
    %4221 = vmatprep.subr.bf16.mxu0 0
    %4222 = vmatpush2.bf16.msra.mxu0 %v4076
    %4223 = vmatprep.subr.bf16.mxu0 0
    %4224 = vmatpush2.bf16.msra.mxu0 %v4075
    %4225 = vmatprep.subr.bf16.mxu0 0
    %4226 = vmatpush2.bf16.msra.mxu0 %v4074
    %4227 = vmatprep.subr.bf16.mxu0 0
    %4228 = vmatpush2.bf16.msra.mxu0 %v4073
    %4229 = vmatprep.subr.bf16.mxu0 0
    %4230 = vmatpush2.bf16.msra.mxu0 %v4072
    %4231 = vmatprep.subr.bf16.mxu0 0
    %4232 = vmatpush2.bf16.msra.mxu0 %v4071
    %4233 = vmatprep.subr.bf16.mxu0 0
    %4234 = vmatpush2.bf16.msra.mxu0 %v4070
    %4235 = vmatprep.subr.bf16.mxu0 0
    %4236 = vmatpush2.bf16.msra.mxu0 %v4069
    %4237 = vmatprep.mubr.bf16.mxu0 %v3630
    %4238 = vmatmul.mubr.bf16.gmra.mxu0 %v3629
    %v4239 = vpop.f32.mrf.mxu0
    %v4240 = vadd.f32 0.0, %v4239
    %v4241 = vpop.f32.mrf.mxu0
    %v4242 = vpop.f32.mrf.mxu0
    %v4243 = vadd.f32 0.0, %v4242
    %v4244 = vpop.f32.mrf.mxu0
    %4245 = vmatprep.mubr.bf16.mxu0 %v3639
    %4246 = vmatmul.mubr.bf16.gmra.mxu0 %v3638
    %v4247 = vpop.f32.mrf.mxu0
    %v4248 = vadd.f32 0.0, %v4247
    %v4249 = vpop.f32.mrf.mxu0
    %v4250 = vpop.f32.mrf.mxu0
    %v4251 = vadd.f32 0.0, %v4250
    %v4252 = vpop.f32.mrf.mxu0
    %4253 = vmatprep.mubr.bf16.mxu0 %v3648
    %4254 = vmatmul.mubr.bf16.gmra.mxu0 %v3647
    %v4255 = vpop.f32.mrf.mxu0
    %v4256 = vadd.f32 0.0, %v4255
    %v4257 = vpop.f32.mrf.mxu0
    %v4258 = vpop.f32.mrf.mxu0
    %v4259 = vadd.f32 0.0, %v4258
    %v4260 = vpop.f32.mrf.mxu0
    %4261 = vmatprep.mubr.bf16.mxu0 %v3657
    %4262 = vmatmul.mubr.bf16.gmra.mxu0 %v3656
    %v4263 = vpop.f32.mrf.mxu0
    %v4264 = vadd.f32 0.0, %v4263
    %v4265 = vpop.f32.mrf.mxu0
    %v4266 = vpop.f32.mrf.mxu0
    %v4267 = vadd.f32 0.0, %v4266
    %v4268 = vpop.f32.mrf.mxu0
    %4269 = vmatprep.mubr.bf16.mxu0 %v3666
    %4270 = vmatmul.mubr.bf16.gmra.mxu0 %v3665
    %v4271 = vpop.f32.mrf.mxu0
    %v4272 = vadd.f32 0.0, %v4271
    %v4273 = vpop.f32.mrf.mxu0
    %v4274 = vpop.f32.mrf.mxu0
    %v4275 = vadd.f32 0.0, %v4274
    %v4276 = vpop.f32.mrf.mxu0
    %4277 = vmatprep.mubr.bf16.mxu0 %v3675
    %4278 = vmatmul.mubr.bf16.gmra.mxu0 %v3674
    %v4279 = vpop.f32.mrf.mxu0
    %v4280 = vadd.f32 0.0, %v4279
    %v4281 = vpop.f32.mrf.mxu0
    %v4282 = vpop.f32.mrf.mxu0
    %v4283 = vadd.f32 0.0, %v4282
    %v4284 = vpop.f32.mrf.mxu0
    %4285 = vmatprep.mubr.bf16.mxu0 %v3684
    %4286 = vmatmul.mubr.bf16.gmra.mxu0 %v3683
    %v4287 = vpop.f32.mrf.mxu0
    %v4288 = vadd.f32 0.0, %v4287
    %v4289 = vpop.f32.mrf.mxu0
    %v4290 = vpop.f32.mrf.mxu0
    %v4291 = vadd.f32 0.0, %v4290
    %v4292 = vpop.f32.mrf.mxu0
    %4293 = vmatprep.mubr.bf16.mxu0 %v3693
    %4294 = vmatmul.mubr.bf16.gmra.mxu0 %v3692
    %v4295 = vpop.f32.mrf.mxu0
    %v4296 = vadd.f32 0.0, %v4295
    %v4297 = vpop.f32.mrf.mxu0
    %v4298 = vpop.f32.mrf.mxu0
    %v4299 = vadd.f32 0.0, %v4298
    %v4300 = vpop.f32.mrf.mxu0
    %4301 = vdwg.mxu0
    %4302 = vmatprep.subr.bf16.mxu0 0
    %4303 = vmatpush1.bf16.msra.mxu0 %v4084
    %4304 = vmatprep.subr.bf16.mxu0 0
    %4305 = vmatpush1.bf16.msra.mxu0 %v4083
    %4306 = vmatprep.subr.bf16.mxu0 0
    %4307 = vmatpush1.bf16.msra.mxu0 %v4082
    %4308 = vmatprep.subr.bf16.mxu0 0
    %4309 = vmatpush1.bf16.msra.mxu0 %v4081
    %4310 = vmatprep.subr.bf16.mxu0 0
    %4311 = vmatpush1.bf16.msra.mxu0 %v4080
    %4312 = vmatprep.subr.bf16.mxu0 0
    %4313 = vmatpush1.bf16.msra.mxu0 %v4079
    %4314 = vmatprep.subr.bf16.mxu0 0
    %4315 = vmatpush1.bf16.msra.mxu0 %v4078
    %4316 = vmatprep.subr.bf16.mxu0 0
    %4317 = vmatpush1.bf16.msra.mxu0 %v4077
    %4318 = vmatprep.subr.bf16.mxu0 0
    %4319 = vmatpush2.bf16.msra.mxu0 %v4092
    %4320 = vmatprep.subr.bf16.mxu0 0
    %4321 = vmatpush2.bf16.msra.mxu0 %v4091
    %4322 = vmatprep.subr.bf16.mxu0 0
    %4323 = vmatpush2.bf16.msra.mxu0 %v4090
    %4324 = vmatprep.subr.bf16.mxu0 0
    %4325 = vmatpush2.bf16.msra.mxu0 %v4089
    %4326 = vmatprep.subr.bf16.mxu0 0
    %4327 = vmatpush2.bf16.msra.mxu0 %v4088
    %4328 = vmatprep.subr.bf16.mxu0 0
    %4329 = vmatpush2.bf16.msra.mxu0 %v4087
    %4330 = vmatprep.subr.bf16.mxu0 0
    %4331 = vmatpush2.bf16.msra.mxu0 %v4086
    %4332 = vmatprep.subr.bf16.mxu0 0
    %4333 = vmatpush2.bf16.msra.mxu0 %v4085
    %4334 = vmatprep.mubr.bf16.mxu0 %v3632
    %4335 = vmatmul.mubr.bf16.gmra.mxu0 %v3631
    %v4336 = vpop.f32.mrf.mxu0
    %v4337 = vadd.f32 %v4240, %v4336
    %v4338 = vpop.f32.mrf.mxu0
    %v4339 = vpop.f32.mrf.mxu0
    %v4340 = vadd.f32 %v4243, %v4339
    %v4341 = vpop.f32.mrf.mxu0
    %4342 = vmatprep.mubr.bf16.mxu0 %v3641
    %4343 = vmatmul.mubr.bf16.gmra.mxu0 %v3640
    %v4344 = vpop.f32.mrf.mxu0
    %v4345 = vadd.f32 %v4248, %v4344
    %v4346 = vpop.f32.mrf.mxu0
    %v4347 = vpop.f32.mrf.mxu0
    %v4348 = vadd.f32 %v4251, %v4347
    %v4349 = vpop.f32.mrf.mxu0
    %4350 = vmatprep.mubr.bf16.mxu0 %v3650
    %4351 = vmatmul.mubr.bf16.gmra.mxu0 %v3649
    %v4352 = vpop.f32.mrf.mxu0
    %v4353 = vadd.f32 %v4256, %v4352
    %v4354 = vpop.f32.mrf.mxu0
    %v4355 = vpop.f32.mrf.mxu0
    %v4356 = vadd.f32 %v4259, %v4355
    %v4357 = vpop.f32.mrf.mxu0
    %4358 = vmatprep.mubr.bf16.mxu0 %v3659
    %4359 = vmatmul.mubr.bf16.gmra.mxu0 %v3658
    %v4360 = vpop.f32.mrf.mxu0
    %v4361 = vadd.f32 %v4264, %v4360
    %v4362 = vpop.f32.mrf.mxu0
    %v4363 = vpop.f32.mrf.mxu0
    %v4364 = vadd.f32 %v4267, %v4363
    %v4365 = vpop.f32.mrf.mxu0
    %4366 = vmatprep.mubr.bf16.mxu0 %v3668
    %4367 = vmatmul.mubr.bf16.gmra.mxu0 %v3667
    %v4368 = vpop.f32.mrf.mxu0
    %v4369 = vadd.f32 %v4272, %v4368
    %v4370 = vpop.f32.mrf.mxu0
    %v4371 = vpop.f32.mrf.mxu0
    %v4372 = vadd.f32 %v4275, %v4371
    %v4373 = vpop.f32.mrf.mxu0
    %4374 = vmatprep.mubr.bf16.mxu0 %v3677
    %4375 = vmatmul.mubr.bf16.gmra.mxu0 %v3676
    %v4376 = vpop.f32.mrf.mxu0
    %v4377 = vadd.f32 %v4280, %v4376
    %v4378 = vpop.f32.mrf.mxu0
    %v4379 = vpop.f32.mrf.mxu0
    %v4380 = vadd.f32 %v4283, %v4379
    %v4381 = vpop.f32.mrf.mxu0
    %4382 = vmatprep.mubr.bf16.mxu0 %v3686
    %4383 = vmatmul.mubr.bf16.gmra.mxu0 %v3685
    %v4384 = vpop.f32.mrf.mxu0
    %v4385 = vadd.f32 %v4288, %v4384
    %v4386 = vpop.f32.mrf.mxu0
    %v4387 = vpop.f32.mrf.mxu0
    %v4388 = vadd.f32 %v4291, %v4387
    %v4389 = vpop.f32.mrf.mxu0
    %4390 = vmatprep.mubr.bf16.mxu0 %v3695
    %4391 = vmatmul.mubr.bf16.gmra.mxu0 %v3694
    %v4392 = vpop.f32.mrf.mxu0
    %v4393 = vadd.f32 %v4296, %v4392
    %v4394 = vpop.f32.mrf.mxu0
    %v4395 = vpop.f32.mrf.mxu0
    %v4396 = vadd.f32 %v4299, %v4395
    %v4397 = vpop.f32.mrf.mxu0
    %4398 = vdwg.mxu0
    %4399 = vmatprep.subr.bf16.mxu0 0
    %4400 = vmatpush1.bf16.msra.mxu0 %v4100
    %4401 = vmatprep.subr.bf16.mxu0 0
    %4402 = vmatpush1.bf16.msra.mxu0 %v4099
    %4403 = vmatprep.subr.bf16.mxu0 0
    %4404 = vmatpush1.bf16.msra.mxu0 %v4098
    %4405 = vmatprep.subr.bf16.mxu0 0
    %4406 = vmatpush1.bf16.msra.mxu0 %v4097
    %4407 = vmatprep.subr.bf16.mxu0 0
    %4408 = vmatpush1.bf16.msra.mxu0 %v4096
    %4409 = vmatprep.subr.bf16.mxu0 0
    %4410 = vmatpush1.bf16.msra.mxu0 %v4095
    %4411 = vmatprep.subr.bf16.mxu0 0
    %4412 = vmatpush1.bf16.msra.mxu0 %v4094
    %4413 = vmatprep.subr.bf16.mxu0 0
    %4414 = vmatpush1.bf16.msra.mxu0 %v4093
    %4415 = vmatprep.subr.bf16.mxu0 0
    %4416 = vmatpush2.bf16.msra.mxu0 %v4108
    %4417 = vmatprep.subr.bf16.mxu0 0
    %4418 = vmatpush2.bf16.msra.mxu0 %v4107
    %4419 = vmatprep.subr.bf16.mxu0 0
    %4420 = vmatpush2.bf16.msra.mxu0 %v4106
    %4421 = vmatprep.subr.bf16.mxu0 0
    %4422 = vmatpush2.bf16.msra.mxu0 %v4105
    %4423 = vmatprep.subr.bf16.mxu0 0
    %4424 = vmatpush2.bf16.msra.mxu0 %v4104
    %4425 = vmatprep.subr.bf16.mxu0 0
    %4426 = vmatpush2.bf16.msra.mxu0 %v4103
    %4427 = vmatprep.subr.bf16.mxu0 0
    %4428 = vmatpush2.bf16.msra.mxu0 %v4102
    %4429 = vmatprep.subr.bf16.mxu0 0
    %4430 = vmatpush2.bf16.msra.mxu0 %v4101
    %4431 = vmatprep.mubr.bf16.mxu0 %v3634
    %4432 = vmatmul.mubr.bf16.gmra.mxu0 %v3633
    %v4433 = vpop.f32.mrf.mxu0
    %v4434 = vadd.f32 %v4337, %v4433
    %v4435 = vpop.f32.mrf.mxu0
    %v4436 = vpop.f32.mrf.mxu0
    %v4437 = vadd.f32 %v4340, %v4436
    %v4438 = vpop.f32.mrf.mxu0
    %4439 = vmatprep.mubr.bf16.mxu0 %v3643
    %4440 = vmatmul.mubr.bf16.gmra.mxu0 %v3642
    %v4441 = vpop.f32.mrf.mxu0
    %v4442 = vadd.f32 %v4345, %v4441
    %v4443 = vpop.f32.mrf.mxu0
    %v4444 = vpop.f32.mrf.mxu0
    %v4445 = vadd.f32 %v4348, %v4444
    %v4446 = vpop.f32.mrf.mxu0
    %4447 = vmatprep.mubr.bf16.mxu0 %v3652
    %4448 = vmatmul.mubr.bf16.gmra.mxu0 %v3651
    %v4449 = vpop.f32.mrf.mxu0
    %v4450 = vadd.f32 %v4353, %v4449
    %v4451 = vpop.f32.mrf.mxu0
    %v4452 = vpop.f32.mrf.mxu0
    %v4453 = vadd.f32 %v4356, %v4452
    %v4454 = vpop.f32.mrf.mxu0
    %4455 = vmatprep.mubr.bf16.mxu0 %v3661
    %4456 = vmatmul.mubr.bf16.gmra.mxu0 %v3660
    %v4457 = vpop.f32.mrf.mxu0
    %v4458 = vadd.f32 %v4361, %v4457
    %v4459 = vpop.f32.mrf.mxu0
    %v4460 = vpop.f32.mrf.mxu0
    %v4461 = vadd.f32 %v4364, %v4460
    %v4462 = vpop.f32.mrf.mxu0
    %4463 = vmatprep.mubr.bf16.mxu0 %v3670
    %4464 = vmatmul.mubr.bf16.gmra.mxu0 %v3669
    %v4465 = vpop.f32.mrf.mxu0
    %v4466 = vadd.f32 %v4369, %v4465
    %v4467 = vpop.f32.mrf.mxu0
    %v4468 = vpop.f32.mrf.mxu0
    %v4469 = vadd.f32 %v4372, %v4468
    %v4470 = vpop.f32.mrf.mxu0
    %4471 = vmatprep.mubr.bf16.mxu0 %v3679
    %4472 = vmatmul.mubr.bf16.gmra.mxu0 %v3678
    %v4473 = vpop.f32.mrf.mxu0
    %v4474 = vadd.f32 %v4377, %v4473
    %v4475 = vpop.f32.mrf.mxu0
    %v4476 = vpop.f32.mrf.mxu0
    %v4477 = vadd.f32 %v4380, %v4476
    %v4478 = vpop.f32.mrf.mxu0
    %4479 = vmatprep.mubr.bf16.mxu0 %v3688
    %4480 = vmatmul.mubr.bf16.gmra.mxu0 %v3687
    %v4481 = vpop.f32.mrf.mxu0
    %v4482 = vadd.f32 %v4385, %v4481
    %v4483 = vpop.f32.mrf.mxu0
    %v4484 = vpop.f32.mrf.mxu0
    %v4485 = vadd.f32 %v4388, %v4484
    %v4486 = vpop.f32.mrf.mxu0
    %4487 = vmatprep.mubr.bf16.mxu0 %v3697
    %4488 = vmatmul.mubr.bf16.gmra.mxu0 %v3696
    %v4489 = vpop.f32.mrf.mxu0
    %v4490 = vadd.f32 %v4393, %v4489
    %v4491 = vpop.f32.mrf.mxu0
    %v4492 = vpop.f32.mrf.mxu0
    %v4493 = vadd.f32 %v4396, %v4492
    %v4494 = vpop.f32.mrf.mxu0
    %4495 = vdwg.mxu0
    %4496 = vmatprep.subr.bf16.mxu0 0
    %4497 = vmatpush1.bf16.msra.mxu0 %v4116
    %4498 = vmatprep.subr.bf16.mxu0 0
    %4499 = vmatpush1.bf16.msra.mxu0 %v4115
    %4500 = vmatprep.subr.bf16.mxu0 0
    %4501 = vmatpush1.bf16.msra.mxu0 %v4114
    %4502 = vmatprep.subr.bf16.mxu0 0
    %4503 = vmatpush1.bf16.msra.mxu0 %v4113
    %4504 = vmatprep.subr.bf16.mxu0 0
    %4505 = vmatpush1.bf16.msra.mxu0 %v4112
    %4506 = vmatprep.subr.bf16.mxu0 0
    %4507 = vmatpush1.bf16.msra.mxu0 %v4111
    %4508 = vmatprep.subr.bf16.mxu0 0
    %4509 = vmatpush1.bf16.msra.mxu0 %v4110
    %4510 = vmatprep.subr.bf16.mxu0 0
    %4511 = vmatpush1.bf16.msra.mxu0 %v4109
    %4512 = vmatprep.subr.bf16.mxu0 0
    %4513 = vmatpush2.bf16.msra.mxu0 %v4124
    %4514 = vmatprep.subr.bf16.mxu0 0
    %4515 = vmatpush2.bf16.msra.mxu0 %v4123
    %4516 = vmatprep.subr.bf16.mxu0 0
    %4517 = vmatpush2.bf16.msra.mxu0 %v4122
    %4518 = vmatprep.subr.bf16.mxu0 0
    %4519 = vmatpush2.bf16.msra.mxu0 %v4121
    %4520 = vmatprep.subr.bf16.mxu0 0
    %4521 = vmatpush2.bf16.msra.mxu0 %v4120
    %4522 = vmatprep.subr.bf16.mxu0 0
    %4523 = vmatpush2.bf16.msra.mxu0 %v4119
    %4524 = vmatprep.subr.bf16.mxu0 0
    %4525 = vmatpush2.bf16.msra.mxu0 %v4118
    %4526 = vmatprep.subr.bf16.mxu0 0
    %4527 = vmatpush2.bf16.msra.mxu0 %v4117
    %4528 = vmatprep.mubr.bf16.mxu0 %v3636
    %4529 = vmatmul.mubr.bf16.gmra.mxu0 %v3635
    %v4530 = vpop.f32.mrf.mxu0
    %v4531 = vadd.f32 %v4434, %v4530
    %v4532 = vpop.f32.mrf.mxu0
    %v4533 = vpop.f32.mrf.mxu0
    %v4534 = vadd.f32 %v4437, %v4533
    %v4535 = vpop.f32.mrf.mxu0
    %4536 = vmatprep.mubr.bf16.mxu0 %v3645
    %4537 = vmatmul.mubr.bf16.gmra.mxu0 %v3644
    %v4538 = vpop.f32.mrf.mxu0
    %v4539 = vadd.f32 %v4442, %v4538
    %v4540 = vpop.f32.mrf.mxu0
    %v4541 = vpop.f32.mrf.mxu0
    %v4542 = vadd.f32 %v4445, %v4541
    %v4543 = vpop.f32.mrf.mxu0
    %4544 = vmatprep.mubr.bf16.mxu0 %v3654
    %4545 = vmatmul.mubr.bf16.gmra.mxu0 %v3653
    %v4546 = vpop.f32.mrf.mxu0
    %v4547 = vadd.f32 %v4450, %v4546
    %v4548 = vpop.f32.mrf.mxu0
    %v4549 = vpop.f32.mrf.mxu0
    %v4550 = vadd.f32 %v4453, %v4549
    %v4551 = vpop.f32.mrf.mxu0
    %4552 = vmatprep.mubr.bf16.mxu0 %v3663
    %4553 = vmatmul.mubr.bf16.gmra.mxu0 %v3662
    %v4554 = vpop.f32.mrf.mxu0
    %v4555 = vadd.f32 %v4458, %v4554
    %v4556 = vpop.f32.mrf.mxu0
    %v4557 = vpop.f32.mrf.mxu0
    %v4558 = vadd.f32 %v4461, %v4557
    %v4559 = vpop.f32.mrf.mxu0
    %4560 = vmatprep.mubr.bf16.mxu0 %v3672
    %4561 = vmatmul.mubr.bf16.gmra.mxu0 %v3671
    %v4562 = vpop.f32.mrf.mxu0
    %v4563 = vadd.f32 %v4466, %v4562
    %v4564 = vpop.f32.mrf.mxu0
    %v4565 = vpop.f32.mrf.mxu0
    %v4566 = vadd.f32 %v4469, %v4565
    %v4567 = vpop.f32.mrf.mxu0
    %4568 = vmatprep.mubr.bf16.mxu0 %v3681
    %4569 = vmatmul.mubr.bf16.gmra.mxu0 %v3680
    %v4570 = vpop.f32.mrf.mxu0
    %v4571 = vadd.f32 %v4474, %v4570
    %v4572 = vpop.f32.mrf.mxu0
    %v4573 = vpop.f32.mrf.mxu0
    %v4574 = vadd.f32 %v4477, %v4573
    %v4575 = vpop.f32.mrf.mxu0
    %4576 = vmatprep.mubr.bf16.mxu0 %v3690
    %4577 = vmatmul.mubr.bf16.gmra.mxu0 %v3689
    %v4578 = vpop.f32.mrf.mxu0
    %v4579 = vadd.f32 %v4482, %v4578
    %v4580 = vpop.f32.mrf.mxu0
    %v4581 = vpop.f32.mrf.mxu0
    %v4582 = vadd.f32 %v4485, %v4581
    %v4583 = vpop.f32.mrf.mxu0
    %4584 = vmatprep.mubr.bf16.mxu0 %v3699
    %4585 = vmatmul.mubr.bf16.gmra.mxu0 %v3698
    %v4586 = vpop.f32.mrf.mxu0
    %v4587 = vadd.f32 %v4490, %v4586
    %v4588 = vpop.f32.mrf.mxu0
    %v4589 = vpop.f32.mrf.mxu0
    %v4590 = vadd.f32 %v4493, %v4589
    %v4591 = vpop.f32.mrf.mxu0
    %4592 = vdwg.mxu0
    %4593 = vmatprep.subr.bf16.mxu0 0
    %4594 = vmatpush1.bf16.msra.mxu0 %v4132
    %4595 = vmatprep.subr.bf16.mxu0 0
    %4596 = vmatpush1.bf16.msra.mxu0 %v4131
    %4597 = vmatprep.subr.bf16.mxu0 0
    %4598 = vmatpush1.bf16.msra.mxu0 %v4130
    %4599 = vmatprep.subr.bf16.mxu0 0
    %4600 = vmatpush1.bf16.msra.mxu0 %v4129
    %4601 = vmatprep.subr.bf16.mxu0 0
    %4602 = vmatpush1.bf16.msra.mxu0 %v4128
    %4603 = vmatprep.subr.bf16.mxu0 0
    %4604 = vmatpush1.bf16.msra.mxu0 %v4127
    %4605 = vmatprep.subr.bf16.mxu0 0
    %4606 = vmatpush1.bf16.msra.mxu0 %v4126
    %4607 = vmatprep.subr.bf16.mxu0 0
    %4608 = vmatpush1.bf16.msra.mxu0 %v4125
    %4609 = vmatprep.subr.bf16.mxu0 0
    %4610 = vmatpush2.bf16.msra.mxu0 0
    %4611 = vmatprep.subr.bf16.mxu0 0
    %4612 = vmatpush2.bf16.msra.mxu0 0
    %4613 = vmatprep.subr.bf16.mxu0 0
    %4614 = vmatpush2.bf16.msra.mxu0 0
    %4615 = vmatprep.subr.bf16.mxu0 0
    %4616 = vmatpush2.bf16.msra.mxu0 0
    %4617 = vmatprep.subr.bf16.mxu0 0
    %4618 = vmatpush2.bf16.msra.mxu0 0
    %4619 = vmatprep.subr.bf16.mxu0 0
    %4620 = vmatpush2.bf16.msra.mxu0 0
    %4621 = vmatprep.subr.bf16.mxu0 0
    %4622 = vmatpush2.bf16.msra.mxu0 0
    %4623 = vmatprep.subr.bf16.mxu0 0
    %4624 = vmatpush2.bf16.msra.mxu0 0
    %4625 = vmatprep.mubr.bf16.mxu0 0
    %4626 = vmatmul.mubr.bf16.gmra.mxu0 %v3637
    %v4627 = vpop.f32.mrf.mxu0
    %v4628 = vadd.f32 %v4531, %v4627
    %v4629 = vpop.f32.mrf.mxu0
    %v4630 = vpop.f32.mrf.mxu0
    %v4631 = vadd.f32 %v4534, %v4630
    %v4632 = vpop.f32.mrf.mxu0
    %4633 = vmatprep.mubr.bf16.mxu0 0
    %4634 = vmatmul.mubr.bf16.gmra.mxu0 %v3646
    %v4635 = vpop.f32.mrf.mxu0
    %v4636 = vadd.f32 %v4539, %v4635
    %v4637 = vpop.f32.mrf.mxu0
    %v4638 = vpop.f32.mrf.mxu0
    %v4639 = vadd.f32 %v4542, %v4638
    %v4640 = vpop.f32.mrf.mxu0
    %4641 = vmatprep.mubr.bf16.mxu0 0
    %4642 = vmatmul.mubr.bf16.gmra.mxu0 %v3655
    %v4643 = vpop.f32.mrf.mxu0
    %v4644 = vadd.f32 %v4547, %v4643
    %v4645 = vpop.f32.mrf.mxu0
    %v4646 = vpop.f32.mrf.mxu0
    %v4647 = vadd.f32 %v4550, %v4646
    %v4648 = vpop.f32.mrf.mxu0
    %4649 = vmatprep.mubr.bf16.mxu0 0
    %4650 = vmatmul.mubr.bf16.gmra.mxu0 %v3664
    %v4651 = vpop.f32.mrf.mxu0
    %v4652 = vadd.f32 %v4555, %v4651
    %v4653 = vpop.f32.mrf.mxu0
    %v4654 = vpop.f32.mrf.mxu0
    %v4655 = vadd.f32 %v4558, %v4654
    %v4656 = vpop.f32.mrf.mxu0
    %4657 = vmatprep.mubr.bf16.mxu0 0
    %4658 = vmatmul.mubr.bf16.gmra.mxu0 %v3673
    %v4659 = vpop.f32.mrf.mxu0
    %v4660 = vadd.f32 %v4563, %v4659
    %v4661 = vpop.f32.mrf.mxu0
    %v4662 = vpop.f32.mrf.mxu0
    %v4663 = vadd.f32 %v4566, %v4662
    %v4664 = vpop.f32.mrf.mxu0
    %4665 = vmatprep.mubr.bf16.mxu0 0
    %4666 = vmatmul.mubr.bf16.gmra.mxu0 %v3682
    %v4667 = vpop.f32.mrf.mxu0
    %v4668 = vadd.f32 %v4571, %v4667
    %v4669 = vpop.f32.mrf.mxu0
    %v4670 = vpop.f32.mrf.mxu0
    %v4671 = vadd.f32 %v4574, %v4670
    %v4672 = vpop.f32.mrf.mxu0
    %4673 = vmatprep.mubr.bf16.mxu0 0
    %4674 = vmatmul.mubr.bf16.gmra.mxu0 %v3691
    %v4675 = vpop.f32.mrf.mxu0
    %v4676 = vadd.f32 %v4579, %v4675
    %v4677 = vpop.f32.mrf.mxu0
    %v4678 = vpop.f32.mrf.mxu0
    %v4679 = vadd.f32 %v4582, %v4678
    %v4680 = vpop.f32.mrf.mxu0
    %4681 = vmatprep.mubr.bf16.mxu0 0
    %4682 = vmatmul.mubr.bf16.gmra.mxu0 %v3700
    %v4683 = vpop.f32.mrf.mxu0
    %v4684 = vadd.f32 %v4587, %v4683
    %v4685 = vpop.f32.mrf.mxu0
    %v4686 = vpop.f32.mrf.mxu0
    %v4687 = vadd.f32 %v4590, %v4686
    %v4688 = vpop.f32.mrf.mxu0
    %4689 = vdwg.mxu0
    %v4690 = vadd.f32 %v4628, %v4631
    %v4691 = vadd.f32 %v4690, %v4636
    %v4692 = vadd.f32 %v4691, %v4639
    %v4693 = vadd.f32 %v4692, %v4644
    %v4694 = vadd.f32 %v4693, %v4647
    %v4695 = vadd.f32 %v4694, %v4652
    %v4696 = vadd.f32 %v4695, %v4655
    %v4697 = vadd.f32 %v4696, %v4660
    %v4698 = vadd.f32 %v4697, %v4663
    %v4699 = vadd.f32 %v4698, %v4668
    %v4700 = vadd.f32 %v4699, %v4671
    %v4701 = vadd.f32 %v4700, %v4676
    %v4702 = vadd.f32 %v4701, %v4679
    %v4703 = vadd.f32 %v4702, %v4684
    %v4704 = vadd.f32 %v4703, %v4687
    %v4705 = vrot.slane %v4704, 4
    %v4706 = vadd.f32 %v4704, %v4705
    %v4707 = vrot.slane %v4706, 2
    %v4708 = vadd.f32 %v4706, %v4707
    %v4709 = vrot.slane %v4708, 1
    %v4710 = vadd.f32 %v4708, %v4709
    %v4711 = vmul.f32 %v4628, %v4628
    %v4712 = vmul.f32 %v4631, %v4631
    %v4713 = vmul.f32 %v4636, %v4636
    %v4714 = vmul.f32 %v4639, %v4639
    %v4715 = vmul.f32 %v4644, %v4644
    %v4716 = vmul.f32 %v4647, %v4647
    %v4717 = vmul.f32 %v4652, %v4652
    %v4718 = vmul.f32 %v4655, %v4655
    %v4719 = vmul.f32 %v4660, %v4660
    %v4720 = vmul.f32 %v4663, %v4663
    %v4721 = vmul.f32 %v4668, %v4668
    %v4722 = vmul.f32 %v4671, %v4671
    %v4723 = vmul.f32 %v4676, %v4676
    %v4724 = vmul.f32 %v4679, %v4679
    %v4725 = vmul.f32 %v4684, %v4684
    %v4726 = vmul.f32 %v4687, %v4687
    %v4727 = vadd.f32 %v4711, %v4712
    %v4728 = vadd.f32 %v4727, %v4713
    %v4729 = vadd.f32 %v4728, %v4714
    %v4730 = vadd.f32 %v4729, %v4715
    %v4731 = vadd.f32 %v4730, %v4716
    %v4732 = vadd.f32 %v4731, %v4717
    %v4733 = vadd.f32 %v4732, %v4718
    %v4734 = vadd.f32 %v4733, %v4719
    %v4735 = vadd.f32 %v4734, %v4720
    %v4736 = vadd.f32 %v4735, %v4721
    %v4737 = vadd.f32 %v4736, %v4722
    %v4738 = vadd.f32 %v4737, %v4723
    %v4739 = vadd.f32 %v4738, %v4724
    %v4740 = vadd.f32 %v4739, %v4725
    %v4741 = vadd.f32 %v4740, %v4726
    %v4742 = vrot.slane %v4741, 4
    %v4743 = vadd.f32 %v4741, %v4742
    %v4744 = vrot.slane %v4743, 2
    %v4745 = vadd.f32 %v4743, %v4744
    %v4746 = vrot.slane %v4745, 1
    %v4747 = vadd.f32 %v4745, %v4746
    %v4748 = vmul.f32 %v4710, 0.0078125
    %v4749 = vmul.f32 %v4747, 0.0078125
    %v4750 = vmul.f32 %v4748, %v4748
    %v4751 = vsub.f32 %v4749, %v4750
    %v4752 = vmax.f32 %v4751, 0.0
    %v4753 = vld [vmem:[%s7] sm:$0x1]
    %v4754 = vadd.f32 %v4752, 1e-05
    %v4755 = vrsqrt.pop %v4754
    %v4756 = vmul.f32 %v4753, %v4755
    %v4757 = vld [vmem:[%s8] sm:$0x1]
    %v4758 = vmul.f32 %v4748, %v4756
    %v4759 = vsub.f32 %v4757, %v4758
    %v4761 = vlaneseq
    %v4762 = vshrl.u32 %v4761, 7
    %v4763 = vsub.s32 0, %v4762
    %v4764 = vrot.slane %v4756, %v4763
    %v4766 = vmul.f32 %v4628, %v4764
    %v4767 = vmul.f32 %v4631, %v4764
    %v4768 = vmul.f32 %v4636, %v4764
    %v4769 = vmul.f32 %v4639, %v4764
    %v4770 = vmul.f32 %v4644, %v4764
    %v4771 = vmul.f32 %v4647, %v4764
    %v4772 = vmul.f32 %v4652, %v4764
    %v4773 = vmul.f32 %v4655, %v4764
    %v4774 = vmul.f32 %v4660, %v4764
    %v4775 = vmul.f32 %v4663, %v4764
    %v4776 = vmul.f32 %v4668, %v4764
    %v4777 = vmul.f32 %v4671, %v4764
    %v4778 = vmul.f32 %v4676, %v4764
    %v4779 = vmul.f32 %v4679, %v4764
    %v4780 = vmul.f32 %v4684, %v4764
    %v4781 = vmul.f32 %v4687, %v4764
    %v4783 = vlaneseq
    %v4784 = vshrl.u32 %v4783, 7
    %v4785 = vsub.s32 0, %v4784
    %v4786 = vrot.slane %v4759, %v4785
    %v4788 = vadd.f32 %v4766, %v4786
    %v4789 = vadd.f32 %v4767, %v4786
    %v4790 = vadd.f32 %v4768, %v4786
    %v4791 = vadd.f32 %v4769, %v4786
    %v4792 = vadd.f32 %v4770, %v4786
    %v4793 = vadd.f32 %v4771, %v4786
    %v4794 = vadd.f32 %v4772, %v4786
    %v4795 = vadd.f32 %v4773, %v4786
    %v4796 = vadd.f32 %v4774, %v4786
    %v4797 = vadd.f32 %v4775, %v4786
    %v4798 = vadd.f32 %v4776, %v4786
    %v4799 = vadd.f32 %v4777, %v4786
    %v4800 = vadd.f32 %v4778, %v4786
    %v4801 = vadd.f32 %v4779, %v4786
    %v4802 = vadd.f32 %v4780, %v4786
    %v4803 = vadd.f32 %v4781, %v4786
    %v4804 = vmax.f32 %v4788, 0.0
    %v4805 = vmax.f32 %v4789, 0.0
    %v4806 = vmax.f32 %v4790, 0.0
    %v4807 = vmax.f32 %v4791, 0.0
    %v4808 = vmax.f32 %v4792, 0.0
    %v4809 = vmax.f32 %v4793, 0.0
    %v4810 = vmax.f32 %v4794, 0.0
    %v4811 = vmax.f32 %v4795, 0.0
    %v4812 = vmax.f32 %v4796, 0.0
    %v4813 = vmax.f32 %v4797, 0.0
    %v4814 = vmax.f32 %v4798, 0.0
    %v4815 = vmax.f32 %v4799, 0.0
    %v4816 = vmax.f32 %v4800, 0.0
    %v4817 = vmax.f32 %v4801, 0.0
    %v4818 = vmax.f32 %v4802, 0.0
    %v4819 = vmax.f32 %v4803, 0.0
    %v4820 = vpack.c.bf16 %v4805, %v4804
    %v4821 = vpack.c.bf16 %v4807, %v4806
    %v4822 = vpack.c.bf16 %v4809, %v4808
    %v4823 = vpack.c.bf16 %v4811, %v4810
    %v4824 = vpack.c.bf16 %v4813, %v4812
    %v4825 = vpack.c.bf16 %v4815, %v4814
    %v4826 = vpack.c.bf16 %v4817, %v4816
    %v4827 = vpack.c.bf16 %v4819, %v4818
    %v4828 = vld [vmem:[#allocation13] sm:$0xff]
    %v4829 = vld [vmem:[#allocation13 + $0x8] sm:$0xff]
    %v4830 = vld [vmem:[#allocation13 + $0x10] sm:$0xff]
    %v4831 = vld [vmem:[#allocation13 + $0x18] sm:$0xff]
    %v4832 = vld [vmem:[#allocation13 + $0x20] sm:$0xff]
    %v4833 = vld [vmem:[#allocation13 + $0x28] sm:$0xff]
    %v4834 = vld [vmem:[#allocation13 + $0x30] sm:$0xff]
    %v4835 = vld [vmem:[#allocation13 + $0x38] sm:$0xff]
    %v4836 = vld [vmem:[#allocation13 + $0x40] sm:$0xff]
    %v4837 = vld [vmem:[#allocation13 + $0x48] sm:$0xff]
    %v4838 = vld [vmem:[#allocation13 + $0x50] sm:$0xff]
    %v4839 = vld [vmem:[#allocation13 + $0x58] sm:$0xff]
    %v4840 = vld [vmem:[#allocation13 + $0x60] sm:$0xff]
    %v4841 = vld [vmem:[#allocation13 + $0x68] sm:$0xff]
    %v4842 = vld [vmem:[#allocation13 + $0x70] sm:$0xff]
    %v4843 = vld [vmem:[#allocation13 + $0x78] sm:$0xff]
    %v4844 = vld [vmem:[#allocation13 + $0x80] sm:$0xff]
    %v4845 = vld [vmem:[#allocation13 + $0x88] sm:$0xff]
    %v4846 = vld [vmem:[#allocation13 + $0x90] sm:$0xff]
    %v4847 = vld [vmem:[#allocation13 + $0x98] sm:$0xff]
    %v4848 = vld [vmem:[#allocation13 + $0xa0] sm:$0xff]
    %v4849 = vld [vmem:[#allocation13 + $0xa8] sm:$0xff]
    %v4850 = vld [vmem:[#allocation13 + $0xb0] sm:$0xff]
    %v4851 = vld [vmem:[#allocation13 + $0xb8] sm:$0xff]
    %v4852 = vld [vmem:[#allocation13 + $0xc0] sm:$0xff]
    %v4853 = vld [vmem:[#allocation13 + $0xc8] sm:$0xff]
    %v4854 = vld [vmem:[#allocation13 + $0xd0] sm:$0xff]
    %v4855 = vld [vmem:[#allocation13 + $0xd8] sm:$0xff]
    %v4856 = vld [vmem:[#allocation13 + $0xe0] sm:$0xff]
    %v4857 = vld [vmem:[#allocation13 + $0xe8] sm:$0xff]
    %v4858 = vld [vmem:[#allocation13 + $0xf0] sm:$0xff]
    %v4859 = vld [vmem:[#allocation13 + $0xf8] sm:$0xff]
    %v4860 = vld [vmem:[#allocation4] sm:$0xff]
    %v4861 = vld [vmem:[#allocation4 + $0x8] sm:$0xff]
    %v4862 = vld [vmem:[#allocation4 + $0x10] sm:$0xff]
    %v4863 = vld [vmem:[#allocation4 + $0x18] sm:$0xff]
    %v4864 = vld [vmem:[#allocation4 + $0x20] sm:$0xff]
    %v4865 = vld [vmem:[#allocation4 + $0x28] sm:$0xff]
    %v4866 = vld [vmem:[#allocation4 + $0x30] sm:$0xff]
    %v4867 = vld [vmem:[#allocation4 + $0x38] sm:$0xff]
    %v4868 = vld [vmem:[#allocation4 + $0x40] sm:$0xff]
    %v4869 = vld [vmem:[#allocation4 + $0x48] sm:$0xff]
    %v4870 = vld [vmem:[#allocation4 + $0x50] sm:$0xff]
    %v4871 = vld [vmem:[#allocation4 + $0x58] sm:$0xff]
    %v4872 = vld [vmem:[#allocation4 + $0x60] sm:$0xff]
    %v4873 = vld [vmem:[#allocation4 + $0x68] sm:$0xff]
    %v4874 = vld [vmem:[#allocation4 + $0x70] sm:$0xff]
    %v4875 = vld [vmem:[#allocation4 + $0x78] sm:$0xff]
    %v4876 = vld [vmem:[#allocation4 + $0x80] sm:$0xff]
    %v4877 = vld [vmem:[#allocation4 + $0x88] sm:$0xff]
    %v4878 = vld [vmem:[#allocation4 + $0x90] sm:$0xff]
    %v4879 = vld [vmem:[#allocation4 + $0x98] sm:$0xff]
    %v4880 = vld [vmem:[#allocation4 + $0xa0] sm:$0xff]
    %v4881 = vld [vmem:[#allocation4 + $0xa8] sm:$0xff]
    %v4882 = vld [vmem:[#allocation4 + $0xb0] sm:$0xff]
    %v4883 = vld [vmem:[#allocation4 + $0xb8] sm:$0xff]
    %v4884 = vld [vmem:[#allocation4 + $0xc0] sm:$0xff]
    %v4885 = vld [vmem:[#allocation4 + $0xc8] sm:$0xff]
    %v4886 = vld [vmem:[#allocation4 + $0xd0] sm:$0xff]
    %v4887 = vld [vmem:[#allocation4 + $0xd8] sm:$0xff]
    %v4888 = vld [vmem:[#allocation4 + $0xe0] sm:$0xff]
    %v4889 = vld [vmem:[#allocation4 + $0xe8] sm:$0xff]
    %v4890 = vld [vmem:[#allocation4 + $0xf0] sm:$0xff]
    %v4891 = vld [vmem:[#allocation4 + $0xf8] sm:$0xff]
    %v4892 = vunpack.c.l.bf16 %v4860
    %v4893 = vunpack.c.h.bf16 %v4860
    %v4894 = vunpack.c.l.bf16 %v4861
    %v4895 = vunpack.c.h.bf16 %v4861
    %v4896 = vunpack.c.l.bf16 %v4862
    %v4897 = vunpack.c.h.bf16 %v4862
    %v4898 = vunpack.c.l.bf16 %v4863
    %v4899 = vunpack.c.h.bf16 %v4863
    %v4900 = vunpack.c.l.bf16 %v4864
    %v4901 = vunpack.c.h.bf16 %v4864
    %v4902 = vunpack.c.l.bf16 %v4865
    %v4903 = vunpack.c.h.bf16 %v4865
    %v4904 = vunpack.c.l.bf16 %v4866
    %v4905 = vunpack.c.h.bf16 %v4866
    %v4906 = vunpack.c.l.bf16 %v4867
    %v4907 = vunpack.c.h.bf16 %v4867
    %v4908 = vunpack.c.l.bf16 %v4868
    %v4909 = vunpack.c.h.bf16 %v4868
    %v4910 = vunpack.c.l.bf16 %v4869
    %v4911 = vunpack.c.h.bf16 %v4869
    %v4912 = vunpack.c.l.bf16 %v4870
    %v4913 = vunpack.c.h.bf16 %v4870
    %v4914 = vunpack.c.l.bf16 %v4871
    %v4915 = vunpack.c.h.bf16 %v4871
    %v4916 = vunpack.c.l.bf16 %v4872
    %v4917 = vunpack.c.h.bf16 %v4872
    %v4918 = vunpack.c.l.bf16 %v4873
    %v4919 = vunpack.c.h.bf16 %v4873
    %v4920 = vunpack.c.l.bf16 %v4874
    %v4921 = vunpack.c.h.bf16 %v4874
    %v4922 = vunpack.c.l.bf16 %v4875
    %v4923 = vunpack.c.h.bf16 %v4875
    %v4924 = vunpack.c.l.bf16 %v4876
    %v4925 = vunpack.c.h.bf16 %v4876
    %v4926 = vunpack.c.l.bf16 %v4877
    %v4927 = vunpack.c.h.bf16 %v4877
    %v4928 = vunpack.c.l.bf16 %v4878
    %v4929 = vunpack.c.h.bf16 %v4878
    %v4930 = vunpack.c.l.bf16 %v4879
    %v4931 = vunpack.c.h.bf16 %v4879
    %v4932 = vunpack.c.l.bf16 %v4880
    %v4933 = vunpack.c.h.bf16 %v4880
    %v4934 = vunpack.c.l.bf16 %v4881
    %v4935 = vunpack.c.h.bf16 %v4881
    %v4936 = vunpack.c.l.bf16 %v4882
    %v4937 = vunpack.c.h.bf16 %v4882
    %v4938 = vunpack.c.l.bf16 %v4883
    %v4939 = vunpack.c.h.bf16 %v4883
    %v4940 = vunpack.c.l.bf16 %v4884
    %v4941 = vunpack.c.h.bf16 %v4884
    %v4942 = vunpack.c.l.bf16 %v4885
    %v4943 = vunpack.c.h.bf16 %v4885
    %v4944 = vunpack.c.l.bf16 %v4886
    %v4945 = vunpack.c.h.bf16 %v4886
    %v4946 = vunpack.c.l.bf16 %v4887
    %v4947 = vunpack.c.h.bf16 %v4887
    %v4948 = vunpack.c.l.bf16 %v4888
    %v4949 = vunpack.c.h.bf16 %v4888
    %v4950 = vunpack.c.l.bf16 %v4889
    %v4951 = vunpack.c.h.bf16 %v4889
    %v4952 = vunpack.c.l.bf16 %v4890
    %v4953 = vunpack.c.h.bf16 %v4890
    %v4954 = vunpack.c.l.bf16 %v4891
    %v4955 = vunpack.c.h.bf16 %v4891
    %v4988 = vunpack.c.l.b16 %v4828
    %v4989 = vunpack.c.h.b16 %v4828
    %v4990 = vunpack.c.l.b16 %v4829
    %v4991 = vunpack.c.h.b16 %v4829
    %v4992 = vunpack.c.l.b16 %v4830
    %v4993 = vunpack.c.h.b16 %v4830
    %v4994 = vunpack.c.l.b16 %v4831
    %v4995 = vunpack.c.h.b16 %v4831
    %v4996 = vunpack.c.l.b16 %v4832
    %v4997 = vunpack.c.h.b16 %v4832
    %v4998 = vunpack.c.l.b16 %v4833
    %v4999 = vunpack.c.h.b16 %v4833
    %v5000 = vunpack.c.l.b16 %v4834
    %v5001 = vunpack.c.h.b16 %v4834
    %v5002 = vunpack.c.l.b16 %v4835
    %v5003 = vunpack.c.h.b16 %v4835
    %v5004 = vunpack.c.l.b16 %v4836
    %v5005 = vunpack.c.h.b16 %v4836
    %v5006 = vunpack.c.l.b16 %v4837
    %v5007 = vunpack.c.h.b16 %v4837
    %v5008 = vunpack.c.l.b16 %v4838
    %v5009 = vunpack.c.h.b16 %v4838
    %v5010 = vunpack.c.l.b16 %v4839
    %v5011 = vunpack.c.h.b16 %v4839
    %v5012 = vunpack.c.l.b16 %v4840
    %v5013 = vunpack.c.h.b16 %v4840
    %v5014 = vunpack.c.l.b16 %v4841
    %v5015 = vunpack.c.h.b16 %v4841
    %v5016 = vunpack.c.l.b16 %v4842
    %v5017 = vunpack.c.h.b16 %v4842
    %v5018 = vunpack.c.l.b16 %v4843
    %v5019 = vunpack.c.h.b16 %v4843
    %v5020 = vunpack.c.l.b16 %v4844
    %v5021 = vunpack.c.h.b16 %v4844
    %v5022 = vunpack.c.l.b16 %v4845
    %v5023 = vunpack.c.h.b16 %v4845
    %v5024 = vunpack.c.l.b16 %v4846
    %v5025 = vunpack.c.h.b16 %v4846
    %v5026 = vunpack.c.l.b16 %v4847
    %v5027 = vunpack.c.h.b16 %v4847
    %v5028 = vunpack.c.l.b16 %v4848
    %v5029 = vunpack.c.h.b16 %v4848
    %v5030 = vunpack.c.l.b16 %v4849
    %v5031 = vunpack.c.h.b16 %v4849
    %v5032 = vunpack.c.l.b16 %v4850
    %v5033 = vunpack.c.h.b16 %v4850
    %v5034 = vunpack.c.l.b16 %v4851
    %v5035 = vunpack.c.h.b16 %v4851
    %v5036 = vunpack.c.l.b16 %v4852
    %v5037 = vunpack.c.h.b16 %v4852
    %v5038 = vunpack.c.l.b16 %v4853
    %v5039 = vunpack.c.h.b16 %v4853
    %v5040 = vunpack.c.l.b16 %v4854
    %v5041 = vunpack.c.h.b16 %v4854
    %v5042 = vunpack.c.l.b16 %v4855
    %v5043 = vunpack.c.h.b16 %v4855
    %v5044 = vunpack.c.l.b16 %v4856
    %v5045 = vunpack.c.h.b16 %v4856
    %v5046 = vunpack.c.l.b16 %v4857
    %v5047 = vunpack.c.h.b16 %v4857
    %v5048 = vunpack.c.l.b16 %v4858
    %v5049 = vunpack.c.h.b16 %v4858
    %v5050 = vunpack.c.l.b16 %v4859
    %v5051 = vunpack.c.h.b16 %v4859
    %v5052 = vpack.c.b16 %v4992, %v4988
    %v5053 = vpack.c.b16 %v4993, %v4989
    %v5054 = vpack.c.b16 %v4994, %v4990
    %v5055 = vpack.c.b16 %v4995, %v4991
    %v5056 = vpack.c.b16 %v5000, %v4996
    %v5057 = vpack.c.b16 %v5001, %v4997
    %v5058 = vpack.c.b16 %v5002, %v4998
    %v5059 = vpack.c.b16 %v5003, %v4999
    %v5060 = vpack.c.b16 %v5008, %v5004
    %v5061 = vpack.c.b16 %v5009, %v5005
    %v5062 = vpack.c.b16 %v5010, %v5006
    %v5063 = vpack.c.b16 %v5011, %v5007
    %v5064 = vpack.c.b16 %v5016, %v5012
    %v5065 = vpack.c.b16 %v5017, %v5013
    %v5066 = vpack.c.b16 %v5018, %v5014
    %v5067 = vpack.c.b16 %v5019, %v5015
    %v5068 = vpack.c.b16 %v5024, %v5020
    %v5069 = vpack.c.b16 %v5025, %v5021
    %v5070 = vpack.c.b16 %v5026, %v5022
    %v5071 = vpack.c.b16 %v5027, %v5023
    %v5072 = vpack.c.b16 %v5032, %v5028
    %v5073 = vpack.c.b16 %v5033, %v5029
    %v5074 = vpack.c.b16 %v5034, %v5030
    %v5075 = vpack.c.b16 %v5035, %v5031
    %v5076 = vpack.c.b16 %v5040, %v5036
    %v5077 = vpack.c.b16 %v5041, %v5037
    %v5078 = vpack.c.b16 %v5042, %v5038
    %v5079 = vpack.c.b16 %v5043, %v5039
    %v5080 = vpack.c.b16 %v5048, %v5044
    %v5081 = vpack.c.b16 %v5049, %v5045
    %v5082 = vpack.c.b16 %v5050, %v5046
    %v5083 = vpack.c.b16 %v5051, %v5047
    %5116 = vmatprep.subr.bf16.mxu0 %v5081
    %5117 = vmatpush1.bf16.msra.mxu0 %v5080
    %5118 = vmatprep.subr.bf16.mxu0 %v5077
    %5119 = vmatpush1.bf16.msra.mxu0 %v5076
    %5120 = vmatprep.subr.bf16.mxu0 %v5073
    %5121 = vmatpush1.bf16.msra.mxu0 %v5072
    %5122 = vmatprep.subr.bf16.mxu0 %v5069
    %5123 = vmatpush1.bf16.msra.mxu0 %v5068
    %5124 = vmatprep.subr.bf16.mxu0 %v5065
    %5125 = vmatpush1.bf16.msra.mxu0 %v5064
    %5126 = vmatprep.subr.bf16.mxu0 %v5061
    %5127 = vmatpush1.bf16.msra.mxu0 %v5060
    %5128 = vmatprep.subr.bf16.mxu0 %v5057
    %5129 = vmatpush1.bf16.msra.mxu0 %v5056
    %5130 = vmatprep.subr.bf16.mxu0 %v5053
    %5131 = vmatpush1.bf16.msra.mxu0 %v5052
    %5132 = vmatprep.subr.bf16.mxu0 0
    %5133 = vmatpush2.bf16.msra.mxu0 0
    %5134 = vmatprep.subr.bf16.mxu0 0
    %5135 = vmatpush2.bf16.msra.mxu0 0
    %5136 = vmatprep.subr.bf16.mxu0 0
    %5137 = vmatpush2.bf16.msra.mxu0 0
    %5138 = vmatprep.subr.bf16.mxu0 0
    %5139 = vmatpush2.bf16.msra.mxu0 0
    %5140 = vmatprep.subr.bf16.mxu0 0
    %5141 = vmatpush2.bf16.msra.mxu0 0
    %5142 = vmatprep.subr.bf16.mxu0 0
    %5143 = vmatpush2.bf16.msra.mxu0 0
    %5144 = vmatprep.subr.bf16.mxu0 0
    %5145 = vmatpush2.bf16.msra.mxu0 0
    %5146 = vmatprep.subr.bf16.mxu0 0
    %5147 = vmatpush2.bf16.msra.mxu0 0
    %5148 = vmatprep.mubr.bf16.mxu0 0
    %5149 = vmatmul.mubr.bf16.gmra.mxu0 %v4820
    %v5150 = vpop.f32.mrf.mxu0
    %v5151 = vadd.f32 %v4892, %v5150
    %v5152 = vpop.f32.mrf.mxu0
    %v5153 = vadd.f32 %v4893, %v5152
    %v5154 = vpop.f32.mrf.mxu0
    %v5155 = vadd.f32 %v4896, %v5154
    %v5156 = vpop.f32.mrf.mxu0
    %v5157 = vadd.f32 %v4897, %v5156
    %5158 = vmatprep.mubr.bf16.mxu0 0
    %5159 = vmatmul.mubr.bf16.gmra.mxu0 %v4821
    %v5160 = vpop.f32.mrf.mxu0
    %v5161 = vadd.f32 %v4900, %v5160
    %v5162 = vpop.f32.mrf.mxu0
    %v5163 = vadd.f32 %v4901, %v5162
    %v5164 = vpop.f32.mrf.mxu0
    %v5165 = vadd.f32 %v4904, %v5164
    %v5166 = vpop.f32.mrf.mxu0
    %v5167 = vadd.f32 %v4905, %v5166
    %5168 = vmatprep.mubr.bf16.mxu0 0
    %5169 = vmatmul.mubr.bf16.gmra.mxu0 %v4822
    %v5170 = vpop.f32.mrf.mxu0
    %v5171 = vadd.f32 %v4908, %v5170
    %v5172 = vpop.f32.mrf.mxu0
    %v5173 = vadd.f32 %v4909, %v5172
    %v5174 = vpop.f32.mrf.mxu0
    %v5175 = vadd.f32 %v4912, %v5174
    %v5176 = vpop.f32.mrf.mxu0
    %v5177 = vadd.f32 %v4913, %v5176
    %5178 = vmatprep.mubr.bf16.mxu0 0
    %5179 = vmatmul.mubr.bf16.gmra.mxu0 %v4823
    %v5180 = vpop.f32.mrf.mxu0
    %v5181 = vadd.f32 %v4916, %v5180
    %v5182 = vpop.f32.mrf.mxu0
    %v5183 = vadd.f32 %v4917, %v5182
    %v5184 = vpop.f32.mrf.mxu0
    %v5185 = vadd.f32 %v4920, %v5184
    %v5186 = vpop.f32.mrf.mxu0
    %v5187 = vadd.f32 %v4921, %v5186
    %5188 = vmatprep.mubr.bf16.mxu0 0
    %5189 = vmatmul.mubr.bf16.gmra.mxu0 %v4824
    %v5190 = vpop.f32.mrf.mxu0
    %v5191 = vadd.f32 %v4924, %v5190
    %v5192 = vpop.f32.mrf.mxu0
    %v5193 = vadd.f32 %v4925, %v5192
    %v5194 = vpop.f32.mrf.mxu0
    %v5195 = vadd.f32 %v4928, %v5194
    %v5196 = vpop.f32.mrf.mxu0
    %v5197 = vadd.f32 %v4929, %v5196
    %5198 = vmatprep.mubr.bf16.mxu0 0
    %5199 = vmatmul.mubr.bf16.gmra.mxu0 %v4825
    %v5200 = vpop.f32.mrf.mxu0
    %v5201 = vadd.f32 %v4932, %v5200
    %v5202 = vpop.f32.mrf.mxu0
    %v5203 = vadd.f32 %v4933, %v5202
    %v5204 = vpop.f32.mrf.mxu0
    %v5205 = vadd.f32 %v4936, %v5204
    %v5206 = vpop.f32.mrf.mxu0
    %v5207 = vadd.f32 %v4937, %v5206
    %5208 = vmatprep.mubr.bf16.mxu0 0
    %5209 = vmatmul.mubr.bf16.gmra.mxu0 %v4826
    %v5210 = vpop.f32.mrf.mxu0
    %v5211 = vadd.f32 %v4940, %v5210
    %v5212 = vpop.f32.mrf.mxu0
    %v5213 = vadd.f32 %v4941, %v5212
    %v5214 = vpop.f32.mrf.mxu0
    %v5215 = vadd.f32 %v4944, %v5214
    %v5216 = vpop.f32.mrf.mxu0
    %v5217 = vadd.f32 %v4945, %v5216
    %5218 = vmatprep.mubr.bf16.mxu0 0
    %5219 = vmatmul.mubr.bf16.gmra.mxu0 %v4827
    %v5220 = vpop.f32.mrf.mxu0
    %v5221 = vadd.f32 %v4948, %v5220
    %v5222 = vpop.f32.mrf.mxu0
    %v5223 = vadd.f32 %v4949, %v5222
    %v5224 = vpop.f32.mrf.mxu0
    %v5225 = vadd.f32 %v4952, %v5224
    %v5226 = vpop.f32.mrf.mxu0
    %v5227 = vadd.f32 %v4953, %v5226
    %5228 = vdwg.mxu0
    %5229 = vmatprep.subr.bf16.mxu0 %v5083
    %5230 = vmatpush1.bf16.msra.mxu0 %v5082
    %5231 = vmatprep.subr.bf16.mxu0 %v5079
    %5232 = vmatpush1.bf16.msra.mxu0 %v5078
    %5233 = vmatprep.subr.bf16.mxu0 %v5075
    %5234 = vmatpush1.bf16.msra.mxu0 %v5074
    %5235 = vmatprep.subr.bf16.mxu0 %v5071
    %5236 = vmatpush1.bf16.msra.mxu0 %v5070
    %5237 = vmatprep.subr.bf16.mxu0 %v5067
    %5238 = vmatpush1.bf16.msra.mxu0 %v5066
    %5239 = vmatprep.subr.bf16.mxu0 %v5063
    %5240 = vmatpush1.bf16.msra.mxu0 %v5062
    %5241 = vmatprep.subr.bf16.mxu0 %v5059
    %5242 = vmatpush1.bf16.msra.mxu0 %v5058
    %5243 = vmatprep.subr.bf16.mxu0 %v5055
    %5244 = vmatpush1.bf16.msra.mxu0 %v5054
    %5245 = vmatprep.subr.bf16.mxu0 0
    %5246 = vmatpush2.bf16.msra.mxu0 0
    %5247 = vmatprep.subr.bf16.mxu0 0
    %5248 = vmatpush2.bf16.msra.mxu0 0
    %5249 = vmatprep.subr.bf16.mxu0 0
    %5250 = vmatpush2.bf16.msra.mxu0 0
    %5251 = vmatprep.subr.bf16.mxu0 0
    %5252 = vmatpush2.bf16.msra.mxu0 0
    %5253 = vmatprep.subr.bf16.mxu0 0
    %5254 = vmatpush2.bf16.msra.mxu0 0
    %5255 = vmatprep.subr.bf16.mxu0 0
    %5256 = vmatpush2.bf16.msra.mxu0 0
    %5257 = vmatprep.subr.bf16.mxu0 0
    %5258 = vmatpush2.bf16.msra.mxu0 0
    %5259 = vmatprep.subr.bf16.mxu0 0
    %5260 = vmatpush2.bf16.msra.mxu0 0
    %5261 = vmatprep.mubr.bf16.mxu0 0
    %5262 = vmatmul.mubr.bf16.gmra.mxu0 %v4820
    %v5263 = vpop.f32.mrf.mxu0
    %v5264 = vadd.f32 %v4894, %v5263
    %v5265 = vpop.f32.mrf.mxu0
    %v5266 = vadd.f32 %v4895, %v5265
    %v5267 = vpop.f32.mrf.mxu0
    %v5268 = vadd.f32 %v4898, %v5267
    %v5269 = vpop.f32.mrf.mxu0
    %v5270 = vadd.f32 %v4899, %v5269
    %5271 = vmatprep.mubr.bf16.mxu0 0
    %5272 = vmatmul.mubr.bf16.gmra.mxu0 %v4821
    %v5273 = vpop.f32.mrf.mxu0
    %v5274 = vadd.f32 %v4902, %v5273
    %v5275 = vpop.f32.mrf.mxu0
    %v5276 = vadd.f32 %v4903, %v5275
    %v5277 = vpop.f32.mrf.mxu0
    %v5278 = vadd.f32 %v4906, %v5277
    %v5279 = vpop.f32.mrf.mxu0
    %v5280 = vadd.f32 %v4907, %v5279
    %5281 = vmatprep.mubr.bf16.mxu0 0
    %5282 = vmatmul.mubr.bf16.gmra.mxu0 %v4822
    %v5283 = vpop.f32.mrf.mxu0
    %v5284 = vadd.f32 %v4910, %v5283
    %v5285 = vpop.f32.mrf.mxu0
    %v5286 = vadd.f32 %v4911, %v5285
    %v5287 = vpop.f32.mrf.mxu0
    %v5288 = vadd.f32 %v4914, %v5287
    %v5289 = vpop.f32.mrf.mxu0
    %v5290 = vadd.f32 %v4915, %v5289
    %5291 = vmatprep.mubr.bf16.mxu0 0
    %5292 = vmatmul.mubr.bf16.gmra.mxu0 %v4823
    %v5293 = vpop.f32.mrf.mxu0
    %v5294 = vadd.f32 %v4918, %v5293
    %v5295 = vpop.f32.mrf.mxu0
    %v5296 = vadd.f32 %v4919, %v5295
    %v5297 = vpop.f32.mrf.mxu0
    %v5298 = vadd.f32 %v4922, %v5297
    %v5299 = vpop.f32.mrf.mxu0
    %v5300 = vadd.f32 %v4923, %v5299
    %5301 = vmatprep.mubr.bf16.mxu0 0
    %5302 = vmatmul.mubr.bf16.gmra.mxu0 %v4824
    %v5303 = vpop.f32.mrf.mxu0
    %v5304 = vadd.f32 %v4926, %v5303
    %v5305 = vpop.f32.mrf.mxu0
    %v5306 = vadd.f32 %v4927, %v5305
    %v5307 = vpop.f32.mrf.mxu0
    %v5308 = vadd.f32 %v4930, %v5307
    %v5309 = vpop.f32.mrf.mxu0
    %v5310 = vadd.f32 %v4931, %v5309
    %5311 = vmatprep.mubr.bf16.mxu0 0
    %5312 = vmatmul.mubr.bf16.gmra.mxu0 %v4825
    %v5313 = vpop.f32.mrf.mxu0
    %v5314 = vadd.f32 %v4934, %v5313
    %v5315 = vpop.f32.mrf.mxu0
    %v5316 = vadd.f32 %v4935, %v5315
    %v5317 = vpop.f32.mrf.mxu0
    %v5318 = vadd.f32 %v4938, %v5317
    %v5319 = vpop.f32.mrf.mxu0
    %v5320 = vadd.f32 %v4939, %v5319
    %5321 = vmatprep.mubr.bf16.mxu0 0
    %5322 = vmatmul.mubr.bf16.gmra.mxu0 %v4826
    %v5323 = vpop.f32.mrf.mxu0
    %v5324 = vadd.f32 %v4942, %v5323
    %v5325 = vpop.f32.mrf.mxu0
    %v5326 = vadd.f32 %v4943, %v5325
    %v5327 = vpop.f32.mrf.mxu0
    %v5328 = vadd.f32 %v4946, %v5327
    %v5329 = vpop.f32.mrf.mxu0
    %v5330 = vadd.f32 %v4947, %v5329
    %5331 = vmatprep.mubr.bf16.mxu0 0
    %5332 = vmatmul.mubr.bf16.gmra.mxu0 %v4827
    %v5333 = vpop.f32.mrf.mxu0
    %v5334 = vadd.f32 %v4950, %v5333
    %v5335 = vpop.f32.mrf.mxu0
    %v5336 = vadd.f32 %v4951, %v5335
    %v5337 = vpop.f32.mrf.mxu0
    %v5338 = vadd.f32 %v4954, %v5337
    %v5339 = vpop.f32.mrf.mxu0
    %v5340 = vadd.f32 %v4955, %v5339
    %5341 = vdwg.mxu0
    %5342 = vst [vmem:[#allocation15] sm:$0xff] %v5151
    %5343 = vst [vmem:[#allocation15 + $0x8] sm:$0xff] %v5153
    %5344 = vst [vmem:[#allocation15 + $0x10] sm:$0xff] %v5264
    %5345 = vst [vmem:[#allocation15 + $0x18] sm:$0xff] %v5266
    %5346 = vst [vmem:[#allocation15 + $0x20] sm:$0xff] %v5155
    %5347 = vst [vmem:[#allocation15 + $0x28] sm:$0xff] %v5157
    %5348 = vst [vmem:[#allocation15 + $0x30] sm:$0xff] %v5268
    %5349 = vst [vmem:[#allocation15 + $0x38] sm:$0xff] %v5270
    %5350 = vst [vmem:[#allocation15 + $0x40] sm:$0xff] %v5161
    %5351 = vst [vmem:[#allocation15 + $0x48] sm:$0xff] %v5163
    %5352 = vst [vmem:[#allocation15 + $0x50] sm:$0xff] %v5274
    %5353 = vst [vmem:[#allocation15 + $0x58] sm:$0xff] %v5276
    %5354 = vst [vmem:[#allocation15 + $0x60] sm:$0xff] %v5165
    %5355 = vst [vmem:[#allocation15 + $0x68] sm:$0xff] %v5167
    %5356 = vst [vmem:[#allocation15 + $0x70] sm:$0xff] %v5278
    %5357 = vst [vmem:[#allocation15 + $0x78] sm:$0xff] %v5280
    %5358 = vst [vmem:[#allocation15 + $0x80] sm:$0xff] %v5171
    %5359 = vst [vmem:[#allocation15 + $0x88] sm:$0xff] %v5173
    %5360 = vst [vmem:[#allocation15 + $0x90] sm:$0xff] %v5284
    %5361 = vst [vmem:[#allocation15 + $0x98] sm:$0xff] %v5286
    %5362 = vst [vmem:[#allocation15 + $0xa0] sm:$0xff] %v5175
    %5363 = vst [vmem:[#allocation15 + $0xa8] sm:$0xff] %v5177
    %5364 = vst [vmem:[#allocation15 + $0xb0] sm:$0xff] %v5288
    %5365 = vst [vmem:[#allocation15 + $0xb8] sm:$0xff] %v5290
    %5366 = vst [vmem:[#allocation15 + $0xc0] sm:$0xff] %v5181
    %5367 = vst [vmem:[#allocation15 + $0xc8] sm:$0xff] %v5183
    %5368 = vst [vmem:[#allocation15 + $0xd0] sm:$0xff] %v5294
    %5369 = vst [vmem:[#allocation15 + $0xd8] sm:$0xff] %v5296
    %5370 = vst [vmem:[#allocation15 + $0xe0] sm:$0xff] %v5185
    %5371 = vst [vmem:[#allocation15 + $0xe8] sm:$0xff] %v5187
    %5372 = vst [vmem:[#allocation15 + $0xf0] sm:$0xff] %v5298
    %5373 = vst [vmem:[#allocation15 + $0xf8] sm:$0xff] %v5300
    %5374 = vst [vmem:[#allocation15 + $0x100] sm:$0xff] %v5191
    %5375 = vst [vmem:[#allocation15 + $0x108] sm:$0xff] %v5193
    %5376 = vst [vmem:[#allocation15 + $0x110] sm:$0xff] %v5304
    %5377 = vst [vmem:[#allocation15 + $0x118] sm:$0xff] %v5306
    %5378 = vst [vmem:[#allocation15 + $0x120] sm:$0xff] %v5195
    %5379 = vst [vmem:[#allocation15 + $0x128] sm:$0xff] %v5197
    %5380 = vst [vmem:[#allocation15 + $0x130] sm:$0xff] %v5308
    %5381 = vst [vmem:[#allocation15 + $0x138] sm:$0xff] %v5310
    %5382 = vst [vmem:[#allocation15 + $0x140] sm:$0xff] %v5201
    %5383 = vst [vmem:[#allocation15 + $0x148] sm:$0xff] %v5203
    %5384 = vst [vmem:[#allocation15 + $0x150] sm:$0xff] %v5314
    %5385 = vst [vmem:[#allocation15 + $0x158] sm:$0xff] %v5316
    %5386 = vst [vmem:[#allocation15 + $0x160] sm:$0xff] %v5205
    %5387 = vst [vmem:[#allocation15 + $0x168] sm:$0xff] %v5207
    %5388 = vst [vmem:[#allocation15 + $0x170] sm:$0xff] %v5318
    %5389 = vst [vmem:[#allocation15 + $0x178] sm:$0xff] %v5320
    %5390 = vst [vmem:[#allocation15 + $0x180] sm:$0xff] %v5211
    %5391 = vst [vmem:[#allocation15 + $0x188] sm:$0xff] %v5213
    %5392 = vst [vmem:[#allocation15 + $0x190] sm:$0xff] %v5324
    %5393 = vst [vmem:[#allocation15 + $0x198] sm:$0xff] %v5326
    %5394 = vst [vmem:[#allocation15 + $0x1a0] sm:$0xff] %v5215
    %5395 = vst [vmem:[#allocation15 + $0x1a8] sm:$0xff] %v5217
    %5396 = vst [vmem:[#allocation15 + $0x1b0] sm:$0xff] %v5328
    %5397 = vst [vmem:[#allocation15 + $0x1b8] sm:$0xff] %v5330
    %5398 = vst [vmem:[#allocation15 + $0x1c0] sm:$0xff] %v5221
    %5399 = vst [vmem:[#allocation15 + $0x1c8] sm:$0xff] %v5223
    %5400 = vst [vmem:[#allocation15 + $0x1d0] sm:$0xff] %v5334
    %5401 = vst [vmem:[#allocation15 + $0x1d8] sm:$0xff] %v5336
    %5402 = vst [vmem:[#allocation15 + $0x1e0] sm:$0xff] %v5225
    %5403 = vst [vmem:[#allocation15 + $0x1e8] sm:$0xff] %v5227
    %5404 = vst [vmem:[#allocation15 + $0x1f0] sm:$0xff] %v5338
    %5405 = vst [vmem:[#allocation15 + $0x1f8] sm:$0xff] %v5340
    // Predicated region
    $region66: #{tpu_custom_call.1} parent=1 // pred_check
      _
    $region67: #{tpu_custom_call.1} parent=1 // pred_check_branch
      %5407 = sbr.rel (0) target = $region69
    $region68: #{tpu_custom_call.1} parent=1 // pred_region
      %s5409 = ssub.s32 8192, 8192
      %5410 = vsyncadd [#allocation6], %s5409
      %s5411 = sshll.u32 [#allocation15], 4
      %s5412 = int_to_ptr.vmem [resolvable:$true] %s5411
      %5417 = dma.vmem_to_hbm [thread:$0]  %s5412, 8192, %s10, [#allocation6], 512, 512, 32
    $region69: #{tpu_custom_call.1} parent=1 // pred_fallthru
      _
    // Predicated region
    $region70: #{tpu_custom_call.1} parent=1 // pred_check
      _
    $region71: #{tpu_custom_call.1} parent=1 // pred_check_branch
      %5419 = sbr.rel (0) target = $region73
    $region72: #{tpu_custom_call.1} parent=1 // pred_region
      %5420 = dma.done [#allocation6], 8192
    $region73: #{tpu_custom_call.1} parent=1 // pred_fallthru
      _
    %5421 = vsyncpa [#allocation5], 1
    %5422 = vsyncpa [#allocation8], 1
    %5423 = vsyncpa [#allocation11], 1
    %5424 = vsyncpa [#allocation14], 1
    %5425 = vsyncpa [#allocation6], 1

</llo_original>
